<compile_context>
chip_gen: v7x
topology: tpu7x:2x2x1
jax: 0.10.0
libtpu: 0.0.40
codegen_flags: <defaults>
</compile_context>

<pallas_src>
import math

import jax
import jax.numpy as jnp
from jax.experimental import pallas as pl
from jax.experimental.pallas import tpu as pltpu

# ---------------- config (tiny Llama-like layer) -----------------------------
HIDDEN = 64
N_HEADS = 2
HEAD_DIM = HIDDEN // N_HEADS          # 32
INTERMEDIATE = 128
SEQ = 8                               # must stay <= CHUNK_LENGTH (CCA cutoff)
VOCAB = 256
RMS_EPS = 1e-6
CHUNK_LENGTH = 32                     # model.chunk_length in the reference
ROPE_THETA = 10000.0


# ---------------- in-kernel helpers -------------------------------------------
def _rmsnorm(x, w, eps=RMS_EPS):
    # LlamaRMSNorm: x / sqrt(mean(x^2) + eps) * w
    var = jnp.mean(x * x, axis=-1, keepdims=True)
    return x * jax.lax.rsqrt(var + eps) * w


# ---------------- fused Pallas kernel ------------------------------------------
def retro_layer_kernel(x_ref, emb_ref,
                       ln_in_ref, ln_cca_ref, ln_post_ref,
                       wq_ref, wk_ref, wv_ref, wo_ref,
                       wg_ref, wu_ref, wd_ref,
                       rot_ref, cos_ref, sin_ref,
                       out_ref):
    x = x_ref[...]                                   # (S, D)   residual / attn input
    emb = emb_ref[...]                               # (S, D)   retrieved-chunk embeds
    cos = cos_ref[...]                               # (S, head_dim)
    sin = sin_ref[...]
    rot = rot_ref[...]                               # (head_dim, head_dim) rotate_half matrix

    # causal mask built in-kernel (no HBM->VMEM DMA for it)
    row = jax.lax.broadcasted_iota(jnp.int32, (SEQ, SEQ), 0)
    col = jax.lax.broadcasted_iota(jnp.int32, (SEQ, SEQ), 1)
    mask = jnp.where(col <= row, 0.0, -1e9).astype(jnp.float32)

    scale = 1.0 / math.sqrt(HEAD_DIM)

    def rope(t):
        # rotate_half(t) == t @ rot (signed permutation) -> MXU, no lane shuffles.
        return t * cos + jnp.dot(t, rot, preferred_element_type=jnp.float32) * sin

    def attention(xn):
        out = None
        for h in range(N_HEADS):                     # static unroll; no activation slicing
            q = rope(jnp.dot(xn, wq_ref[h], preferred_element_type=jnp.float32))
            k = rope(jnp.dot(xn, wk_ref[h], preferred_element_type=jnp.float32))
            v = jnp.dot(xn, wv_ref[h], preferred_element_type=jnp.float32)
            # q @ k.T without the explicit transpose/relayout
            scores = jax.lax.dot_general(
                q, k, (((1,), (1,)), ((), ())),
                preferred_element_type=jnp.float32) * scale + mask
            m = jnp.max(scores, axis=-1, keepdims=True)
            p = jnp.exp(scores - m)
            p = p * pl.reciprocal(jnp.sum(p, axis=-1, keepdims=True), approx=True)
            ctx = jnp.dot(p, v, preferred_element_type=jnp.float32)          # (S, head_dim)
            contrib = jnp.dot(ctx, wo_ref[h], preferred_element_type=jnp.float32)
            out = contrib if out is None else out + contrib
        return out

    # 1) residual + self_attn(input_layernorm(x))
    h1 = x + attention(_rmsnorm(x, ln_in_ref[...]))
    # 2) residual + self_attn(pre_CCA_layernorm(chunk_embeds))   (CCA branch)
    h2 = h1 + attention(_rmsnorm(emb, ln_cca_ref[...]))
    # 3) residual + SwiGLU MLP(post_attention_layernorm(x))
    xn = _rmsnorm(h2, ln_post_ref[...])
    g = jnp.dot(xn, wg_ref[...], preferred_element_type=jnp.float32)
    u = jnp.dot(xn, wu_ref[...], preferred_element_type=jnp.float32)
    mid = g * jax.lax.logistic(g) * u                # SiLU(g) * u
    out_ref[...] = h2 + jnp.dot(mid, wd_ref[...], preferred_element_type=jnp.float32)


# ---------------- wrapper -------------------------------------------------------
def _vmem_spec():
    return pl.BlockSpec(memory_space=pltpu.MemorySpace.VMEM)


def retro_layer_forward(params, hidden_states, chunk_embeds, rot, cos, sin):
    """hidden_states: (1, S, D); chunk_embeds: (1, S, D). Returns (hidden_states,)."""
    x = hidden_states[0]
    emb = chunk_embeds[0]

    # Per-head weight layout prepared wrapper-side (free, plain XLA ops) so the
    # kernel never slices activations on the 128-lane axis.
    wq_h = params["wq"].reshape(HIDDEN, N_HEADS, HEAD_DIM).transpose(1, 0, 2)
    wk_h = params["wk"].reshape(HIDDEN, N_HEADS, HEAD_DIM).transpose(1, 0, 2)
    wv_h = params["wv"].reshape(HIDDEN, N_HEADS, HEAD_DIM).transpose(1, 0, 2)
    wo_h = params["wo"].reshape(N_HEADS, HEAD_DIM, HIDDEN)

    operands = (x, emb,
                params["input_ln"], params["pre_cca_ln"], params["post_ln"],
                wq_h, wk_h, wv_h, wo_h,
                params["wg"], params["wu"], params["wd"],
                rot, cos, sin)

    h = pl.pallas_call(
        retro_layer_kernel,
        out_shape=jax.ShapeDtypeStruct(x.shape, x.dtype),
        in_specs=[_vmem_spec() for _ in operands],
        out_specs=_vmem_spec(),
        input_output_aliases={0: 0},   # residual buffer reused for the output
    )(*operands)

    # output_attentions=False, use_cache=False -> outputs = (hidden_states,)
    return (h[None],)


# ---------------- host-side constant tables -------------------------------------
def rope_tables(seq, head_dim, dtype=jnp.float32):
    inv_freq = 1.0 / (ROPE_THETA ** (jnp.arange(0, head_dim, 2, dtype=dtype) / head_dim))
    pos = jnp.arange(seq, dtype=dtype)
    freqs = pos[:, None] * inv_freq[None, :]          # (S, head_dim/2)
    emb = jnp.concatenate([freqs, freqs], axis=-1)    # (S, head_dim)
    return jnp.cos(emb), jnp.sin(emb)


def rope_rotation_matrix(head_dim, dtype=jnp.float32):
    # t @ R == rotate_half(t) == concat([-t[:, d/2:], t[:, :d/2]], axis=-1)
    hd2 = head_dim // 2
    idx = jnp.arange(hd2)
    r = jnp.zeros((head_dim, head_dim), dtype)
    r = r.at[idx + hd2, idx].set(-1.0)
    r = r.at[idx, idx + hd2].set(1.0)
    return r


# ---------------- deterministic setup & run --------------------------------------
def init_params(key):
    ks = jax.random.split(key, 10)
    s = 0.05
    return {
        "input_ln":   jnp.ones((1, HIDDEN), jnp.float32),
        "pre_cca_ln": jnp.ones((1, HIDDEN), jnp.float32),
        "post_ln":    jnp.ones((1, HIDDEN), jnp.float32),
        "wq": s * jax.random.normal(ks[0], (HIDDEN, HIDDEN), jnp.float32),
        "wk": s * jax.random.normal(ks[1], (HIDDEN, HIDDEN), jnp.float32),
        "wv": s * jax.random.normal(ks[2], (HIDDEN, HIDDEN), jnp.float32),
        "wo": s * jax.random.normal(ks[3], (HIDDEN, HIDDEN), jnp.float32),
        "wg": s * jax.random.normal(ks[4], (HIDDEN, INTERMEDIATE), jnp.float32),
        "wu": s * jax.random.normal(ks[5], (HIDDEN, INTERMEDIATE), jnp.float32),
        "wd": s * jax.random.normal(ks[6], (INTERMEDIATE, HIDDEN), jnp.float32),
        "embed_tokens": s * jax.random.normal(ks[7], (VOCAB, HIDDEN), jnp.float32),
    }


if __name__ == "__main__":
    key = jax.random.PRNGKey(0)
    k_par, k_hid, k_ids, k_chunk = jax.random.split(key, 4)

    params = init_params(k_par)

    # main-path hidden states (batch=1, seq=SEQ, hidden=HIDDEN)
    hidden_states = jax.random.normal(k_hid, (1, SEQ, HIDDEN), jnp.float32)

    # model.model.input_ids_biollama (only the last chunk_length entries are used)
    input_ids = jax.random.randint(k_ids, (1, SEQ), 0, VOCAB)
    cutoff = min(input_ids.shape[1], CHUNK_LENGTH)

    # TODO(synk): medcpt_FAISS_retrieval + tokenizer decode/encode have no device
    # equivalent; retrieved-chunk token ids are synthesized deterministically.
    chunk_ids = jax.random.randint(k_chunk, (1, cutoff), 0, VOCAB)
    chunk_embeds = jnp.take(params["embed_tokens"], chunk_ids, axis=0)  # (1, S, D)

    cos, sin = rope_tables(SEQ, HEAD_DIM)
    rot = rope_rotation_matrix(HEAD_DIM)

    outputs = retro_layer_forward(params, hidden_states, chunk_embeds, rot, cos, sin)
    out = jax.block_until_ready(outputs[0])
    assert out.shape == (1, SEQ, HIDDEN) and bool(jnp.all(jnp.isfinite(out)))
    print("KERNEL_OK")
</pallas_src>

<mosaic_0001>
module attributes {stable_mosaic.version = 11 : i64} {
  func.func @retro_layer_kernel(%arg0: memref<8x64xf32, #tpu.memory_space<vmem>>, %arg1: memref<8x64xf32, #tpu.memory_space<vmem>>, %arg2: memref<1x64xf32, #tpu.memory_space<vmem>>, %arg3: memref<1x64xf32, #tpu.memory_space<vmem>>, %arg4: memref<1x64xf32, #tpu.memory_space<vmem>>, %arg5: memref<2x64x32xf32, #tpu.memory_space<vmem>>, %arg6: memref<2x64x32xf32, #tpu.memory_space<vmem>>, %arg7: memref<2x64x32xf32, #tpu.memory_space<vmem>>, %arg8: memref<2x32x64xf32, #tpu.memory_space<vmem>>, %arg9: memref<64x128xf32, #tpu.memory_space<vmem>>, %arg10: memref<64x128xf32, #tpu.memory_space<vmem>>, %arg11: memref<128x64xf32, #tpu.memory_space<vmem>>, %arg12: memref<32x32xf32, #tpu.memory_space<vmem>>, %arg13: memref<8x32xf32, #tpu.memory_space<vmem>>, %arg14: memref<8x32xf32, #tpu.memory_space<vmem>>, %arg15: memref<8x64xf32, #tpu.memory_space<vmem>>) attributes {dimension_semantics = [], scalar_prefetch = 0 : i64, scratch_operands = 0 : i64, tpu.core_type = #tpu.core_type<tc>} {
    %c0 = arith.constant 0 : index
    %c0_0 = arith.constant 0 : index
    %0 = vector.load %arg0[%c0, %c0_0] : memref<8x64xf32, #tpu.memory_space<vmem>>, vector<8x64xf32>
    %c0_1 = arith.constant 0 : index
    %c0_2 = arith.constant 0 : index
    %1 = vector.load %arg1[%c0_1, %c0_2] : memref<8x64xf32, #tpu.memory_space<vmem>>, vector<8x64xf32>
    %c0_3 = arith.constant 0 : index
    %c0_4 = arith.constant 0 : index
    %2 = vector.load %arg13[%c0_3, %c0_4] : memref<8x32xf32, #tpu.memory_space<vmem>>, vector<8x32xf32>
    %c0_5 = arith.constant 0 : index
    %c0_6 = arith.constant 0 : index
    %3 = vector.load %arg14[%c0_5, %c0_6] : memref<8x32xf32, #tpu.memory_space<vmem>>, vector<8x32xf32>
    %c0_7 = arith.constant 0 : index
    %c0_8 = arith.constant 0 : index
    %4 = vector.load %arg12[%c0_7, %c0_8] : memref<32x32xf32, #tpu.memory_space<vmem>>, vector<32x32xf32>
    %5 = tpu.iota {dimensions = array<i32: 0>} : vector<8x8xi32>
    %6 = tpu.iota {dimensions = array<i32: 1>} : vector<8x8xi32>
    %7 = arith.cmpi sle, %6, %5 : vector<8x8xi32>
    %cst = arith.constant 0.000000e+00 : f32
    %cst_9 = arith.constant -1.000000e+09 : f32
    %8 = vector.broadcast %cst : f32 to vector<8x8xf32>
    %9 = vector.broadcast %cst_9 : f32 to vector<8x8xf32>
    %10 = arith.select %7, %8, %9 : vector<8x8xi1>, vector<8x8xf32>
    %c0_10 = arith.constant 0 : index
    %c0_11 = arith.constant 0 : index
    %11 = vector.load %arg2[%c0_10, %c0_11] : memref<1x64xf32, #tpu.memory_space<vmem>>, vector<1x64xf32>
    %12 = arith.mulf %0, %0 : vector<8x64xf32>
    %cst_12 = arith.constant dense<0.000000e+00> : vector<8xf32>
    %13 = vector.multi_reduction <add>, %12, %cst_12 [1] : vector<8x64xf32> to vector<8xf32>
    %14 = vector.shape_cast %13 : vector<8xf32> to vector<8x1xf32>
    %cst_13 = arith.constant 6.400000e+01 : f32
    %15 = vector.broadcast %cst_13 : f32 to vector<8x1xf32>
    %16 = arith.divf %14, %15 : vector<8x1xf32>
    %cst_14 = arith.constant 9.99999997E-7 : f32
    %17 = vector.broadcast %cst_14 : f32 to vector<8x1xf32>
    %18 = arith.addf %16, %17 : vector<8x1xf32>
    %19 = math.rsqrt %18 : vector<8x1xf32>
    %20 = vector.broadcast %19 : vector<8x1xf32> to vector<8x64xf32>
    %21 = arith.mulf %0, %20 : vector<8x64xf32>
    %22 = vector.broadcast %11 : vector<1x64xf32> to vector<8x64xf32>
    %23 = arith.mulf %21, %22 : vector<8x64xf32>
    %c0_15 = arith.constant 0 : index
    %c0_16 = arith.constant 0 : index
    %c0_17 = arith.constant 0 : index
    %24 = vector.load %arg5[%c0_15, %c0_16, %c0_17] : memref<2x64x32xf32, #tpu.memory_space<vmem>>, vector<1x64x32xf32>
    %25 = vector.shape_cast %24 : vector<1x64x32xf32> to vector<64x32xf32>
    %cst_18 = arith.constant dense<0.000000e+00> : vector<8x32xf32>
    %26 = tpu.matmul %23, %25, %cst_18 {dimension_numbers = #tpu.dot_dimension_numbers<[1], [0], [0], [1], [0, 0, 1, 1], [], []>} : vector<8x64xf32>, vector<64x32xf32>, vector<8x32xf32> -> vector<8x32xf32>
    %27 = arith.mulf %26, %2 : vector<8x32xf32>
    %cst_19 = arith.constant dense<0.000000e+00> : vector<8x32xf32>
    %28 = tpu.matmul %26, %4, %cst_19 {dimension_numbers = #tpu.dot_dimension_numbers<[1], [0], [0], [1], [0, 0, 1, 1], [], []>} : vector<8x32xf32>, vector<32x32xf32>, vector<8x32xf32> -> vector<8x32xf32>
    %29 = arith.mulf %28, %3 : vector<8x32xf32>
    %30 = arith.addf %27, %29 : vector<8x32xf32>
    %c0_20 = arith.constant 0 : index
    %c0_21 = arith.constant 0 : index
    %c0_22 = arith.constant 0 : index
    %31 = vector.load %arg6[%c0_20, %c0_21, %c0_22] : memref<2x64x32xf32, #tpu.memory_space<vmem>>, vector<1x64x32xf32>
    %32 = vector.shape_cast %31 : vector<1x64x32xf32> to vector<64x32xf32>
    %cst_23 = arith.constant dense<0.000000e+00> : vector<8x32xf32>
    %33 = tpu.matmul %23, %32, %cst_23 {dimension_numbers = #tpu.dot_dimension_numbers<[1], [0], [0], [1], [0, 0, 1, 1], [], []>} : vector<8x64xf32>, vector<64x32xf32>, vector<8x32xf32> -> vector<8x32xf32>
    %34 = arith.mulf %33, %2 : vector<8x32xf32>
    %cst_24 = arith.constant dense<0.000000e+00> : vector<8x32xf32>
    %35 = tpu.matmul %33, %4, %cst_24 {dimension_numbers = #tpu.dot_dimension_numbers<[1], [0], [0], [1], [0, 0, 1, 1], [], []>} : vector<8x32xf32>, vector<32x32xf32>, vector<8x32xf32> -> vector<8x32xf32>
    %36 = arith.mulf %35, %3 : vector<8x32xf32>
    %37 = arith.addf %34, %36 : vector<8x32xf32>
    %c0_25 = arith.constant 0 : index
    %c0_26 = arith.constant 0 : index
    %c0_27 = arith.constant 0 : index
    %38 = vector.load %arg7[%c0_25, %c0_26, %c0_27] : memref<2x64x32xf32, #tpu.memory_space<vmem>>, vector<1x64x32xf32>
    %39 = vector.shape_cast %38 : vector<1x64x32xf32> to vector<64x32xf32>
    %cst_28 = arith.constant dense<0.000000e+00> : vector<8x32xf32>
    %40 = tpu.matmul %23, %39, %cst_28 {dimension_numbers = #tpu.dot_dimension_numbers<[1], [0], [0], [1], [0, 0, 1, 1], [], []>} : vector<8x64xf32>, vector<64x32xf32>, vector<8x32xf32> -> vector<8x32xf32>
    %cst_29 = arith.constant dense<0.000000e+00> : vector<8x8xf32>
    %41 = tpu.matmul %30, %37, %cst_29 {dimension_numbers = #tpu.dot_dimension_numbers<[1], [1], [0], [0], [0, 0, 1, 0], [], []>} : vector<8x32xf32>, vector<8x32xf32>, vector<8x8xf32> -> vector<8x8xf32>
    %cst_30 = arith.constant 0.176776692 : f32
    %42 = vector.broadcast %cst_30 : f32 to vector<8x8xf32>
    %43 = arith.mulf %41, %42 : vector<8x8xf32>
    %44 = arith.addf %43, %10 : vector<8x8xf32>
    %cst_31 = arith.constant dense<0xFF800000> : vector<8xf32>
    %45 = vector.multi_reduction <maximumf>, %44, %cst_31 [1] : vector<8x8xf32> to vector<8xf32>
    %46 = vector.shape_cast %45 : vector<8xf32> to vector<8x1xf32>
    %47 = vector.broadcast %46 : vector<8x1xf32> to vector<8x8xf32>
    %48 = arith.subf %44, %47 : vector<8x8xf32>
    %49 = math.exp %48 : vector<8x8xf32>
    %cst_32 = arith.constant dense<0.000000e+00> : vector<8xf32>
    %50 = vector.multi_reduction <add>, %49, %cst_32 [1] : vector<8x8xf32> to vector<8xf32>
    %51 = vector.shape_cast %50 : vector<8xf32> to vector<8x1xf32>
    %52 = tpu.reciprocal %51 {approx = true} : vector<8x1xf32> -> vector<8x1xf32>
    %53 = vector.broadcast %52 : vector<8x1xf32> to vector<8x8xf32>
    %54 = arith.mulf %49, %53 : vector<8x8xf32>
    %cst_33 = arith.constant dense<0.000000e+00> : vector<8x32xf32>
    %55 = tpu.matmul %54, %40, %cst_33 {dimension_numbers = #tpu.dot_dimension_numbers<[1], [0], [0], [1], [0, 0, 1, 1], [], []>} : vector<8x8xf32>, vector<8x32xf32>, vector<8x32xf32> -> vector<8x32xf32>
    %c0_34 = arith.constant 0 : index
    %c0_35 = arith.constant 0 : index
    %c0_36 = arith.constant 0 : index
    %56 = vector.load %arg8[%c0_34, %c0_35, %c0_36] : memref<2x32x64xf32, #tpu.memory_space<vmem>>, vector<1x32x64xf32>
    %57 = vector.shape_cast %56 : vector<1x32x64xf32> to vector<32x64xf32>
    %cst_37 = arith.constant dense<0.000000e+00> : vector<8x64xf32>
    %58 = tpu.matmul %55, %57, %cst_37 {dimension_numbers = #tpu.dot_dimension_numbers<[1], [0], [0], [1], [0, 0, 1, 1], [], []>} : vector<8x32xf32>, vector<32x64xf32>, vector<8x64xf32> -> vector<8x64xf32>
    %c1 = arith.constant 1 : index
    %c0_38 = arith.constant 0 : index
    %c0_39 = arith.constant 0 : index
    %59 = vector.load %arg5[%c1, %c0_38, %c0_39] : memref<2x64x32xf32, #tpu.memory_space<vmem>>, vector<1x64x32xf32>
    %60 = vector.shape_cast %59 : vector<1x64x32xf32> to vector<64x32xf32>
    %cst_40 = arith.constant dense<0.000000e+00> : vector<8x32xf32>
    %61 = tpu.matmul %23, %60, %cst_40 {dimension_numbers = #tpu.dot_dimension_numbers<[1], [0], [0], [1], [0, 0, 1, 1], [], []>} : vector<8x64xf32>, vector<64x32xf32>, vector<8x32xf32> -> vector<8x32xf32>
    %62 = arith.mulf %61, %2 : vector<8x32xf32>
    %cst_41 = arith.constant dense<0.000000e+00> : vector<8x32xf32>
    %63 = tpu.matmul %61, %4, %cst_41 {dimension_numbers = #tpu.dot_dimension_numbers<[1], [0], [0], [1], [0, 0, 1, 1], [], []>} : vector<8x32xf32>, vector<32x32xf32>, vector<8x32xf32> -> vector<8x32xf32>
    %64 = arith.mulf %63, %3 : vector<8x32xf32>
    %65 = arith.addf %62, %64 : vector<8x32xf32>
    %c1_42 = arith.constant 1 : index
    %c0_43 = arith.constant 0 : index
    %c0_44 = arith.constant 0 : index
    %66 = vector.load %arg6[%c1_42, %c0_43, %c0_44] : memref<2x64x32xf32, #tpu.memory_space<vmem>>, vector<1x64x32xf32>
    %67 = vector.shape_cast %66 : vector<1x64x32xf32> to vector<64x32xf32>
    %cst_45 = arith.constant dense<0.000000e+00> : vector<8x32xf32>
    %68 = tpu.matmul %23, %67, %cst_45 {dimension_numbers = #tpu.dot_dimension_numbers<[1], [0], [0], [1], [0, 0, 1, 1], [], []>} : vector<8x64xf32>, vector<64x32xf32>, vector<8x32xf32> -> vector<8x32xf32>
    %69 = arith.mulf %68, %2 : vector<8x32xf32>
    %cst_46 = arith.constant dense<0.000000e+00> : vector<8x32xf32>
    %70 = tpu.matmul %68, %4, %cst_46 {dimension_numbers = #tpu.dot_dimension_numbers<[1], [0], [0], [1], [0, 0, 1, 1], [], []>} : vector<8x32xf32>, vector<32x32xf32>, vector<8x32xf32> -> vector<8x32xf32>
    %71 = arith.mulf %70, %3 : vector<8x32xf32>
    %72 = arith.addf %69, %71 : vector<8x32xf32>
    %c1_47 = arith.constant 1 : index
    %c0_48 = arith.constant 0 : index
    %c0_49 = arith.constant 0 : index
    %73 = vector.load %arg7[%c1_47, %c0_48, %c0_49] : memref<2x64x32xf32, #tpu.memory_space<vmem>>, vector<1x64x32xf32>
    %74 = vector.shape_cast %73 : vector<1x64x32xf32> to vector<64x32xf32>
    %cst_50 = arith.constant dense<0.000000e+00> : vector<8x32xf32>
    %75 = tpu.matmul %23, %74, %cst_50 {dimension_numbers = #tpu.dot_dimension_numbers<[1], [0], [0], [1], [0, 0, 1, 1], [], []>} : vector<8x64xf32>, vector<64x32xf32>, vector<8x32xf32> -> vector<8x32xf32>
    %cst_51 = arith.constant dense<0.000000e+00> : vector<8x8xf32>
    %76 = tpu.matmul %65, %72, %cst_51 {dimension_numbers = #tpu.dot_dimension_numbers<[1], [1], [0], [0], [0, 0, 1, 0], [], []>} : vector<8x32xf32>, vector<8x32xf32>, vector<8x8xf32> -> vector<8x8xf32>
    %cst_52 = arith.constant 0.176776692 : f32
    %77 = vector.broadcast %cst_52 : f32 to vector<8x8xf32>
    %78 = arith.mulf %76, %77 : vector<8x8xf32>
    %79 = arith.addf %78, %10 : vector<8x8xf32>
    %cst_53 = arith.constant dense<0xFF800000> : vector<8xf32>
    %80 = vector.multi_reduction <maximumf>, %79, %cst_53 [1] : vector<8x8xf32> to vector<8xf32>
    %81 = vector.shape_cast %80 : vector<8xf32> to vector<8x1xf32>
    %82 = vector.broadcast %81 : vector<8x1xf32> to vector<8x8xf32>
    %83 = arith.subf %79, %82 : vector<8x8xf32>
    %84 = math.exp %83 : vector<8x8xf32>
    %cst_54 = arith.constant dense<0.000000e+00> : vector<8xf32>
    %85 = vector.multi_reduction <add>, %84, %cst_54 [1] : vector<8x8xf32> to vector<8xf32>
    %86 = vector.shape_cast %85 : vector<8xf32> to vector<8x1xf32>
    %87 = tpu.reciprocal %86 {approx = true} : vector<8x1xf32> -> vector<8x1xf32>
    %88 = vector.broadcast %87 : vector<8x1xf32> to vector<8x8xf32>
    %89 = arith.mulf %84, %88 : vector<8x8xf32>
    %cst_55 = arith.constant dense<0.000000e+00> : vector<8x32xf32>
    %90 = tpu.matmul %89, %75, %cst_55 {dimension_numbers = #tpu.dot_dimension_numbers<[1], [0], [0], [1], [0, 0, 1, 1], [], []>} : vector<8x8xf32>, vector<8x32xf32>, vector<8x32xf32> -> vector<8x32xf32>
    %c1_56 = arith.constant 1 : index
    %c0_57 = arith.constant 0 : index
    %c0_58 = arith.constant 0 : index
    %91 = vector.load %arg8[%c1_56, %c0_57, %c0_58] : memref<2x32x64xf32, #tpu.memory_space<vmem>>, vector<1x32x64xf32>
    %92 = vector.shape_cast %91 : vector<1x32x64xf32> to vector<32x64xf32>
    %cst_59 = arith.constant dense<0.000000e+00> : vector<8x64xf32>
    %93 = tpu.matmul %90, %92, %cst_59 {dimension_numbers = #tpu.dot_dimension_numbers<[1], [0], [0], [1], [0, 0, 1, 1], [], []>} : vector<8x32xf32>, vector<32x64xf32>, vector<8x64xf32> -> vector<8x64xf32>
    %94 = arith.addf %58, %93 : vector<8x64xf32>
    %95 = arith.addf %0, %94 : vector<8x64xf32>
    %c0_60 = arith.constant 0 : index
    %c0_61 = arith.constant 0 : index
    %96 = vector.load %arg3[%c0_60, %c0_61] : memref<1x64xf32, #tpu.memory_space<vmem>>, vector<1x64xf32>
    %97 = arith.mulf %1, %1 : vector<8x64xf32>
    %cst_62 = arith.constant dense<0.000000e+00> : vector<8xf32>
    %98 = vector.multi_reduction <add>, %97, %cst_62 [1] : vector<8x64xf32> to vector<8xf32>
    %99 = vector.shape_cast %98 : vector<8xf32> to vector<8x1xf32>
    %cst_63 = arith.constant 6.400000e+01 : f32
    %100 = vector.broadcast %cst_63 : f32 to vector<8x1xf32>
    %101 = arith.divf %99, %100 : vector<8x1xf32>
    %cst_64 = arith.constant 9.99999997E-7 : f32
    %102 = vector.broadcast %cst_64 : f32 to vector<8x1xf32>
    %103 = arith.addf %101, %102 : vector<8x1xf32>
    %104 = math.rsqrt %103 : vector<8x1xf32>
    %105 = vector.broadcast %104 : vector<8x1xf32> to vector<8x64xf32>
    %106 = arith.mulf %1, %105 : vector<8x64xf32>
    %107 = vector.broadcast %96 : vector<1x64xf32> to vector<8x64xf32>
    %108 = arith.mulf %106, %107 : vector<8x64xf32>
    %c0_65 = arith.constant 0 : index
    %c0_66 = arith.constant 0 : index
    %c0_67 = arith.constant 0 : index
    %109 = vector.load %arg5[%c0_65, %c0_66, %c0_67] : memref<2x64x32xf32, #tpu.memory_space<vmem>>, vector<1x64x32xf32>
    %110 = vector.shape_cast %109 : vector<1x64x32xf32> to vector<64x32xf32>
    %cst_68 = arith.constant dense<0.000000e+00> : vector<8x32xf32>
    %111 = tpu.matmul %108, %110, %cst_68 {dimension_numbers = #tpu.dot_dimension_numbers<[1], [0], [0], [1], [0, 0, 1, 1], [], []>} : vector<8x64xf32>, vector<64x32xf32>, vector<8x32xf32> -> vector<8x32xf32>
    %112 = arith.mulf %111, %2 : vector<8x32xf32>
    %cst_69 = arith.constant dense<0.000000e+00> : vector<8x32xf32>
    %113 = tpu.matmul %111, %4, %cst_69 {dimension_numbers = #tpu.dot_dimension_numbers<[1], [0], [0], [1], [0, 0, 1, 1], [], []>} : vector<8x32xf32>, vector<32x32xf32>, vector<8x32xf32> -> vector<8x32xf32>
    %114 = arith.mulf %113, %3 : vector<8x32xf32>
    %115 = arith.addf %112, %114 : vector<8x32xf32>
    %c0_70 = arith.constant 0 : index
    %c0_71 = arith.constant 0 : index
    %c0_72 = arith.constant 0 : index
    %116 = vector.load %arg6[%c0_70, %c0_71, %c0_72] : memref<2x64x32xf32, #tpu.memory_space<vmem>>, vector<1x64x32xf32>
    %117 = vector.shape_cast %116 : vector<1x64x32xf32> to vector<64x32xf32>
    %cst_73 = arith.constant dense<0.000000e+00> : vector<8x32xf32>
    %118 = tpu.matmul %108, %117, %cst_73 {dimension_numbers = #tpu.dot_dimension_numbers<[1], [0], [0], [1], [0, 0, 1, 1], [], []>} : vector<8x64xf32>, vector<64x32xf32>, vector<8x32xf32> -> vector<8x32xf32>
    %119 = arith.mulf %118, %2 : vector<8x32xf32>
    %cst_74 = arith.constant dense<0.000000e+00> : vector<8x32xf32>
    %120 = tpu.matmul %118, %4, %cst_74 {dimension_numbers = #tpu.dot_dimension_numbers<[1], [0], [0], [1], [0, 0, 1, 1], [], []>} : vector<8x32xf32>, vector<32x32xf32>, vector<8x32xf32> -> vector<8x32xf32>
    %121 = arith.mulf %120, %3 : vector<8x32xf32>
    %122 = arith.addf %119, %121 : vector<8x32xf32>
    %c0_75 = arith.constant 0 : index
    %c0_76 = arith.constant 0 : index
    %c0_77 = arith.constant 0 : index
    %123 = vector.load %arg7[%c0_75, %c0_76, %c0_77] : memref<2x64x32xf32, #tpu.memory_space<vmem>>, vector<1x64x32xf32>
    %124 = vector.shape_cast %123 : vector<1x64x32xf32> to vector<64x32xf32>
    %cst_78 = arith.constant dense<0.000000e+00> : vector<8x32xf32>
    %125 = tpu.matmul %108, %124, %cst_78 {dimension_numbers = #tpu.dot_dimension_numbers<[1], [0], [0], [1], [0, 0, 1, 1], [], []>} : vector<8x64xf32>, vector<64x32xf32>, vector<8x32xf32> -> vector<8x32xf32>
    %cst_79 = arith.constant dense<0.000000e+00> : vector<8x8xf32>
    %126 = tpu.matmul %115, %122, %cst_79 {dimension_numbers = #tpu.dot_dimension_numbers<[1], [1], [0], [0], [0, 0, 1, 0], [], []>} : vector<8x32xf32>, vector<8x32xf32>, vector<8x8xf32> -> vector<8x8xf32>
    %cst_80 = arith.constant 0.176776692 : f32
    %127 = vector.broadcast %cst_80 : f32 to vector<8x8xf32>
    %128 = arith.mulf %126, %127 : vector<8x8xf32>
    %129 = arith.addf %128, %10 : vector<8x8xf32>
    %cst_81 = arith.constant dense<0xFF800000> : vector<8xf32>
    %130 = vector.multi_reduction <maximumf>, %129, %cst_81 [1] : vector<8x8xf32> to vector<8xf32>
    %131 = vector.shape_cast %130 : vector<8xf32> to vector<8x1xf32>
    %132 = vector.broadcast %131 : vector<8x1xf32> to vector<8x8xf32>
    %133 = arith.subf %129, %132 : vector<8x8xf32>
    %134 = math.exp %133 : vector<8x8xf32>
    %cst_82 = arith.constant dense<0.000000e+00> : vector<8xf32>
    %135 = vector.multi_reduction <add>, %134, %cst_82 [1] : vector<8x8xf32> to vector<8xf32>
    %136 = vector.shape_cast %135 : vector<8xf32> to vector<8x1xf32>
    %137 = tpu.reciprocal %136 {approx = true} : vector<8x1xf32> -> vector<8x1xf32>
    %138 = vector.broadcast %137 : vector<8x1xf32> to vector<8x8xf32>
    %139 = arith.mulf %134, %138 : vector<8x8xf32>
    %cst_83 = arith.constant dense<0.000000e+00> : vector<8x32xf32>
    %140 = tpu.matmul %139, %125, %cst_83 {dimension_numbers = #tpu.dot_dimension_numbers<[1], [0], [0], [1], [0, 0, 1, 1], [], []>} : vector<8x8xf32>, vector<8x32xf32>, vector<8x32xf32> -> vector<8x32xf32>
    %c0_84 = arith.constant 0 : index
    %c0_85 = arith.constant 0 : index
    %c0_86 = arith.constant 0 : index
    %141 = vector.load %arg8[%c0_84, %c0_85, %c0_86] : memref<2x32x64xf32, #tpu.memory_space<vmem>>, vector<1x32x64xf32>
    %142 = vector.shape_cast %141 : vector<1x32x64xf32> to vector<32x64xf32>
    %cst_87 = arith.constant dense<0.000000e+00> : vector<8x64xf32>
    %143 = tpu.matmul %140, %142, %cst_87 {dimension_numbers = #tpu.dot_dimension_numbers<[1], [0], [0], [1], [0, 0, 1, 1], [], []>} : vector<8x32xf32>, vector<32x64xf32>, vector<8x64xf32> -> vector<8x64xf32>
    %c1_88 = arith.constant 1 : index
    %c0_89 = arith.constant 0 : index
    %c0_90 = arith.constant 0 : index
    %144 = vector.load %arg5[%c1_88, %c0_89, %c0_90] : memref<2x64x32xf32, #tpu.memory_space<vmem>>, vector<1x64x32xf32>
    %145 = vector.shape_cast %144 : vector<1x64x32xf32> to vector<64x32xf32>
    %cst_91 = arith.constant dense<0.000000e+00> : vector<8x32xf32>
    %146 = tpu.matmul %108, %145, %cst_91 {dimension_numbers = #tpu.dot_dimension_numbers<[1], [0], [0], [1], [0, 0, 1, 1], [], []>} : vector<8x64xf32>, vector<64x32xf32>, vector<8x32xf32> -> vector<8x32xf32>
    %147 = arith.mulf %146, %2 : vector<8x32xf32>
    %cst_92 = arith.constant dense<0.000000e+00> : vector<8x32xf32>
    %148 = tpu.matmul %146, %4, %cst_92 {dimension_numbers = #tpu.dot_dimension_numbers<[1], [0], [0], [1], [0, 0, 1, 1], [], []>} : vector<8x32xf32>, vector<32x32xf32>, vector<8x32xf32> -> vector<8x32xf32>
    %149 = arith.mulf %148, %3 : vector<8x32xf32>
    %150 = arith.addf %147, %149 : vector<8x32xf32>
    %c1_93 = arith.constant 1 : index
    %c0_94 = arith.constant 0 : index
    %c0_95 = arith.constant 0 : index
    %151 = vector.load %arg6[%c1_93, %c0_94, %c0_95] : memref<2x64x32xf32, #tpu.memory_space<vmem>>, vector<1x64x32xf32>
    %152 = vector.shape_cast %151 : vector<1x64x32xf32> to vector<64x32xf32>
    %cst_96 = arith.constant dense<0.000000e+00> : vector<8x32xf32>
    %153 = tpu.matmul %108, %152, %cst_96 {dimension_numbers = #tpu.dot_dimension_numbers<[1], [0], [0], [1], [0, 0, 1, 1], [], []>} : vector<8x64xf32>, vector<64x32xf32>, vector<8x32xf32> -> vector<8x32xf32>
    %154 = arith.mulf %153, %2 : vector<8x32xf32>
    %cst_97 = arith.constant dense<0.000000e+00> : vector<8x32xf32>
    %155 = tpu.matmul %153, %4, %cst_97 {dimension_numbers = #tpu.dot_dimension_numbers<[1], [0], [0], [1], [0, 0, 1, 1], [], []>} : vector<8x32xf32>, vector<32x32xf32>, vector<8x32xf32> -> vector<8x32xf32>
    %156 = arith.mulf %155, %3 : vector<8x32xf32>
    %157 = arith.addf %154, %156 : vector<8x32xf32>
    %c1_98 = arith.constant 1 : index
    %c0_99 = arith.constant 0 : index
    %c0_100 = arith.constant 0 : index
    %158 = vector.load %arg7[%c1_98, %c0_99, %c0_100] : memref<2x64x32xf32, #tpu.memory_space<vmem>>, vector<1x64x32xf32>
    %159 = vector.shape_cast %158 : vector<1x64x32xf32> to vector<64x32xf32>
    %cst_101 = arith.constant dense<0.000000e+00> : vector<8x32xf32>
    %160 = tpu.matmul %108, %159, %cst_101 {dimension_numbers = #tpu.dot_dimension_numbers<[1], [0], [0], [1], [0, 0, 1, 1], [], []>} : vector<8x64xf32>, vector<64x32xf32>, vector<8x32xf32> -> vector<8x32xf32>
    %cst_102 = arith.constant dense<0.000000e+00> : vector<8x8xf32>
    %161 = tpu.matmul %150, %157, %cst_102 {dimension_numbers = #tpu.dot_dimension_numbers<[1], [1], [0], [0], [0, 0, 1, 0], [], []>} : vector<8x32xf32>, vector<8x32xf32>, vector<8x8xf32> -> vector<8x8xf32>
    %cst_103 = arith.constant 0.176776692 : f32
    %162 = vector.broadcast %cst_103 : f32 to vector<8x8xf32>
    %163 = arith.mulf %161, %162 : vector<8x8xf32>
    %164 = arith.addf %163, %10 : vector<8x8xf32>
    %cst_104 = arith.constant dense<0xFF800000> : vector<8xf32>
    %165 = vector.multi_reduction <maximumf>, %164, %cst_104 [1] : vector<8x8xf32> to vector<8xf32>
    %166 = vector.shape_cast %165 : vector<8xf32> to vector<8x1xf32>
    %167 = vector.broadcast %166 : vector<8x1xf32> to vector<8x8xf32>
    %168 = arith.subf %164, %167 : vector<8x8xf32>
    %169 = math.exp %168 : vector<8x8xf32>
    %cst_105 = arith.constant dense<0.000000e+00> : vector<8xf32>
    %170 = vector.multi_reduction <add>, %169, %cst_105 [1] : vector<8x8xf32> to vector<8xf32>
    %171 = vector.shape_cast %170 : vector<8xf32> to vector<8x1xf32>
    %172 = tpu.reciprocal %171 {approx = true} : vector<8x1xf32> -> vector<8x1xf32>
    %173 = vector.broadcast %172 : vector<8x1xf32> to vector<8x8xf32>
    %174 = arith.mulf %169, %173 : vector<8x8xf32>
    %cst_106 = arith.constant dense<0.000000e+00> : vector<8x32xf32>
    %175 = tpu.matmul %174, %160, %cst_106 {dimension_numbers = #tpu.dot_dimension_numbers<[1], [0], [0], [1], [0, 0, 1, 1], [], []>} : vector<8x8xf32>, vector<8x32xf32>, vector<8x32xf32> -> vector<8x32xf32>
    %c1_107 = arith.constant 1 : index
    %c0_108 = arith.constant 0 : index
    %c0_109 = arith.constant 0 : index
    %176 = vector.load %arg8[%c1_107, %c0_108, %c0_109] : memref<2x32x64xf32, #tpu.memory_space<vmem>>, vector<1x32x64xf32>
    %177 = vector.shape_cast %176 : vector<1x32x64xf32> to vector<32x64xf32>
    %cst_110 = arith.constant dense<0.000000e+00> : vector<8x64xf32>
    %178 = tpu.matmul %175, %177, %cst_110 {dimension_numbers = #tpu.dot_dimension_numbers<[1], [0], [0], [1], [0, 0, 1, 1], [], []>} : vector<8x32xf32>, vector<32x64xf32>, vector<8x64xf32> -> vector<8x64xf32>
    %179 = arith.addf %143, %178 : vector<8x64xf32>
    %180 = arith.addf %95, %179 : vector<8x64xf32>
    %c0_111 = arith.constant 0 : index
    %c0_112 = arith.constant 0 : index
    %181 = vector.load %arg4[%c0_111, %c0_112] : memref<1x64xf32, #tpu.memory_space<vmem>>, vector<1x64xf32>
    %182 = arith.mulf %180, %180 : vector<8x64xf32>
    %cst_113 = arith.constant dense<0.000000e+00> : vector<8xf32>
    %183 = vector.multi_reduction <add>, %182, %cst_113 [1] : vector<8x64xf32> to vector<8xf32>
    %184 = vector.shape_cast %183 : vector<8xf32> to vector<8x1xf32>
    %cst_114 = arith.constant 6.400000e+01 : f32
    %185 = vector.broadcast %cst_114 : f32 to vector<8x1xf32>
    %186 = arith.divf %184, %185 : vector<8x1xf32>
    %cst_115 = arith.constant 9.99999997E-7 : f32
    %187 = vector.broadcast %cst_115 : f32 to vector<8x1xf32>
    %188 = arith.addf %186, %187 : vector<8x1xf32>
    %189 = math.rsqrt %188 : vector<8x1xf32>
    %190 = vector.broadcast %189 : vector<8x1xf32> to vector<8x64xf32>
    %191 = arith.mulf %180, %190 : vector<8x64xf32>
    %192 = vector.broadcast %181 : vector<1x64xf32> to vector<8x64xf32>
    %193 = arith.mulf %191, %192 : vector<8x64xf32>
    %c0_116 = arith.constant 0 : index
    %c0_117 = arith.constant 0 : index
    %194 = vector.load %arg9[%c0_116, %c0_117] : memref<64x128xf32, #tpu.memory_space<vmem>>, vector<64x128xf32>
    %cst_118 = arith.constant dense<0.000000e+00> : vector<8x128xf32>
    %195 = tpu.matmul %193, %194, %cst_118 {dimension_numbers = #tpu.dot_dimension_numbers<[1], [0], [0], [1], [0, 0, 1, 1], [], []>} : vector<8x64xf32>, vector<64x128xf32>, vector<8x128xf32> -> vector<8x128xf32>
    %c0_119 = arith.constant 0 : index
    %c0_120 = arith.constant 0 : index
    %196 = vector.load %arg10[%c0_119, %c0_120] : memref<64x128xf32, #tpu.memory_space<vmem>>, vector<64x128xf32>
    %cst_121 = arith.constant dense<0.000000e+00> : vector<8x128xf32>
    %197 = tpu.matmul %193, %196, %cst_121 {dimension_numbers = #tpu.dot_dimension_numbers<[1], [0], [0], [1], [0, 0, 1, 1], [], []>} : vector<8x64xf32>, vector<64x128xf32>, vector<8x128xf32> -> vector<8x128xf32>
    %198 = arith.negf %195 : vector<8x128xf32>
    %199 = math.exp %198 : vector<8x128xf32>
    %cst_122 = arith.constant 1.000000e+00 : f32
    %200 = vector.broadcast %cst_122 : f32 to vector<8x128xf32>
    %201 = arith.addf %200, %199 : vector<8x128xf32>
    %202 = arith.divf %200, %201 : vector<8x128xf32>
    %203 = arith.mulf %195, %202 : vector<8x128xf32>
    %204 = arith.mulf %203, %197 : vector<8x128xf32>
    %c0_123 = arith.constant 0 : index
    %c0_124 = arith.constant 0 : index
    %205 = vector.load %arg11[%c0_123, %c0_124] : memref<128x64xf32, #tpu.memory_space<vmem>>, vector<128x64xf32>
    %cst_125 = arith.constant dense<0.000000e+00> : vector<8x64xf32>
    %206 = tpu.matmul %204, %205, %cst_125 {dimension_numbers = #tpu.dot_dimension_numbers<[1], [0], [0], [1], [0, 0, 1, 1], [], []>} : vector<8x128xf32>, vector<128x64xf32>, vector<8x64xf32> -> vector<8x64xf32>
    %207 = arith.addf %180, %206 : vector<8x64xf32>
    %c0_126 = arith.constant 0 : index
    %c0_127 = arith.constant 0 : index
    %208 = vector.load %arg15[%c0_126, %c0_127] : memref<8x64xf32, #tpu.memory_space<vmem>>, vector<8x64xf32>
    tpu.vector_store %arg15[%c0_126, %c0_127], %207 {strides = array<i32>} : memref<8x64xf32, #tpu.memory_space<vmem>>, vector<8x64xf32>,
    return
  }
}

</mosaic_0001>

<llo_original>
// kernel: tpu_custom_call.1
$region0: #{tpu_custom_call.1}
  #allocation0 [shape = 'u32[]', space=smem, size = 0x4, offset = 0x4, fixed_abs, tag = 'smem constant byte address 0x4 - core index']
  #allocation1 [shape = 'u32[144,128]{1,0:T(1,128)}', space=vmem, size = 0x12000, scoped, tag = 'internal scratch']
  %s0 = inlined_call_operand.hbm [shape: f32[8,64], index: 0, kind: input, shape index: {}, may-alias: {0,15}]
  %s1 = inlined_call_operand.vmem [shape: f32[8,64], index: 1, kind: input, shape index: {}]
  %s2 = inlined_call_operand.vmem [shape: f32[1,64], index: 2, kind: input, shape index: {}]
  %s3 = inlined_call_operand.vmem [shape: f32[1,64], index: 3, kind: input, shape index: {}]
  %s4 = inlined_call_operand.vmem [shape: f32[1,64], index: 4, kind: input, shape index: {}]
  %s5 = inlined_call_operand.vmem [shape: f32[2,64,32], index: 5, kind: input, shape index: {}]
  %s6 = inlined_call_operand.vmem [shape: f32[2,64,32], index: 6, kind: input, shape index: {}]
  %s7 = inlined_call_operand.vmem [shape: f32[2,64,32], index: 7, kind: input, shape index: {}]
  %s8 = inlined_call_operand.vmem [shape: f32[2,32,64], index: 8, kind: input, shape index: {}]
  %s9 = inlined_call_operand.vmem [shape: f32[64,128], index: 9, kind: input, shape index: {}]
  %s10 = inlined_call_operand.vmem [shape: f32[64,128], index: 10, kind: input, shape index: {}]
  %s11 = inlined_call_operand.vmem [shape: f32[128,64], index: 11, kind: input, shape index: {}]
  %s12 = inlined_call_operand.vmem [shape: f32[32,32], index: 12, kind: input, shape index: {}]
  %s13 = inlined_call_operand.vmem [shape: f32[8,32], index: 13, kind: input, shape index: {}]
  %s14 = inlined_call_operand.vmem [shape: f32[8,32], index: 14, kind: input, shape index: {}]
  %s15 = inlined_call_operand.hbm [shape: f32[8,64], index: 15, kind: output, shape index: {}, may-alias: {0,15}]
  %s16 = sld [smem:[#allocation0]]
  $region74: #{tpu_custom_call.1} parent=0
    _
  %s18 = ssub.s32 1, %s16
  %s19 = scalar_select 0, %s18, %s16
  $region1: #{tpu_custom_call.1} parent=0
    #allocation2 [shape = 'u8[4096]{0}', space=vmem, size = 0x1000, scoped, tag = 'input window, operand 0, single buffered']
    #allocation3 [shape = 's32[1]{0}', space=sflag, size = 0x4, scoped, tag = 'scoped memory for tpu_custom_call.1']
    #allocation4 [shape = 's32[1]{0}', space=sflag, size = 0x4, scoped, tag = 'scoped memory for tpu_custom_call.1']
    #allocation5 [shape = 'u8[4096]{0}', space=vmem, size = 0x1000, scoped, tag = 'output window, operand 0, single buffered']
    %20 = vsyncpa [#allocation3], 0
    %21 = vsyncpa [#allocation4], 0
    // Predicated region
    $region2: #{tpu_custom_call.1} parent=1 // pred_check
      _
    $region3: #{tpu_custom_call.1} parent=1 // pred_check_branch
      %23 = sbr.rel (0) target = $region5
    $region4: #{tpu_custom_call.1} parent=1 // pred_region
      %s25 = ssub.s32 128, 128
      %26 = vsyncadd [#allocation3], %s25
      %s28 = sshll.u32 [#allocation2], 4
      %s29 = int_to_ptr.vmem [resolvable:$true] %s28
      %31 = dma.hbm_to_vmem [thread:$0]  %s0, 128, %s29, [#allocation3]
    $region5: #{tpu_custom_call.1} parent=1 // pred_fallthru
      _
    // Predicated region
    $region6: #{tpu_custom_call.1} parent=1 // pred_check
      _
    $region7: #{tpu_custom_call.1} parent=1 // pred_check_branch
      %33 = sbr.rel (0) target = $region9
    $region8: #{tpu_custom_call.1} parent=1 // pred_region
      _
    $region9: #{tpu_custom_call.1} parent=1 // pred_fallthru
      _
    // Predicated region
    $region10: #{tpu_custom_call.1} parent=1 // pred_check
      _
    $region11: #{tpu_custom_call.1} parent=1 // pred_check_branch
      %35 = sbr.rel (0) target = $region13
    $region12: #{tpu_custom_call.1} parent=1 // pred_region
      _
    $region13: #{tpu_custom_call.1} parent=1 // pred_fallthru
      _
    // Predicated region
    $region14: #{tpu_custom_call.1} parent=1 // pred_check
      _
    $region15: #{tpu_custom_call.1} parent=1 // pred_check_branch
      %37 = sbr.rel (0) target = $region17
    $region16: #{tpu_custom_call.1} parent=1 // pred_region
      _
    $region17: #{tpu_custom_call.1} parent=1 // pred_fallthru
      _
    // Predicated region
    $region18: #{tpu_custom_call.1} parent=1 // pred_check
      _
    $region19: #{tpu_custom_call.1} parent=1 // pred_check_branch
      %39 = sbr.rel (0) target = $region21
    $region20: #{tpu_custom_call.1} parent=1 // pred_region
      _
    $region21: #{tpu_custom_call.1} parent=1 // pred_fallthru
      _
    // Predicated region
    $region22: #{tpu_custom_call.1} parent=1 // pred_check
      _
    $region23: #{tpu_custom_call.1} parent=1 // pred_check_branch
      %41 = sbr.rel (0) target = $region25
    $region24: #{tpu_custom_call.1} parent=1 // pred_region
      _
    $region25: #{tpu_custom_call.1} parent=1 // pred_fallthru
      _
    // Predicated region
    $region26: #{tpu_custom_call.1} parent=1 // pred_check
      _
    $region27: #{tpu_custom_call.1} parent=1 // pred_check_branch
      %43 = sbr.rel (0) target = $region29
    $region28: #{tpu_custom_call.1} parent=1 // pred_region
      _
    $region29: #{tpu_custom_call.1} parent=1 // pred_fallthru
      _
    // Predicated region
    $region30: #{tpu_custom_call.1} parent=1 // pred_check
      _
    $region31: #{tpu_custom_call.1} parent=1 // pred_check_branch
      %45 = sbr.rel (0) target = $region33
    $region32: #{tpu_custom_call.1} parent=1 // pred_region
      _
    $region33: #{tpu_custom_call.1} parent=1 // pred_fallthru
      _
    // Predicated region
    $region34: #{tpu_custom_call.1} parent=1 // pred_check
      _
    $region35: #{tpu_custom_call.1} parent=1 // pred_check_branch
      %47 = sbr.rel (0) target = $region37
    $region36: #{tpu_custom_call.1} parent=1 // pred_region
      _
    $region37: #{tpu_custom_call.1} parent=1 // pred_fallthru
      _
    // Predicated region
    $region38: #{tpu_custom_call.1} parent=1 // pred_check
      _
    $region39: #{tpu_custom_call.1} parent=1 // pred_check_branch
      %49 = sbr.rel (0) target = $region41
    $region40: #{tpu_custom_call.1} parent=1 // pred_region
      _
    $region41: #{tpu_custom_call.1} parent=1 // pred_fallthru
      _
    // Predicated region
    $region42: #{tpu_custom_call.1} parent=1 // pred_check
      _
    $region43: #{tpu_custom_call.1} parent=1 // pred_check_branch
      %51 = sbr.rel (0) target = $region45
    $region44: #{tpu_custom_call.1} parent=1 // pred_region
      _
    $region45: #{tpu_custom_call.1} parent=1 // pred_fallthru
      _
    // Predicated region
    $region46: #{tpu_custom_call.1} parent=1 // pred_check
      _
    $region47: #{tpu_custom_call.1} parent=1 // pred_check_branch
      %53 = sbr.rel (0) target = $region49
    $region48: #{tpu_custom_call.1} parent=1 // pred_region
      _
    $region49: #{tpu_custom_call.1} parent=1 // pred_fallthru
      _
    // Predicated region
    $region50: #{tpu_custom_call.1} parent=1 // pred_check
      _
    $region51: #{tpu_custom_call.1} parent=1 // pred_check_branch
      %55 = sbr.rel (0) target = $region53
    $region52: #{tpu_custom_call.1} parent=1 // pred_region
      _
    $region53: #{tpu_custom_call.1} parent=1 // pred_fallthru
      _
    // Predicated region
    $region54: #{tpu_custom_call.1} parent=1 // pred_check
      _
    $region55: #{tpu_custom_call.1} parent=1 // pred_check_branch
      %57 = sbr.rel (0) target = $region57
    $region56: #{tpu_custom_call.1} parent=1 // pred_region
      _
    $region57: #{tpu_custom_call.1} parent=1 // pred_fallthru
      _
    // Predicated region
    $region58: #{tpu_custom_call.1} parent=1 // pred_check
      _
    $region59: #{tpu_custom_call.1} parent=1 // pred_check_branch
      %59 = sbr.rel (0) target = $region61
    $region60: #{tpu_custom_call.1} parent=1 // pred_region
      _
    $region61: #{tpu_custom_call.1} parent=1 // pred_fallthru
      _
    // Predicated region
    $region62: #{tpu_custom_call.1} parent=1 // pred_check
      _
    $region63: #{tpu_custom_call.1} parent=1 // pred_check_branch
      %61 = sbr.rel (0) target = $region65
    $region64: #{tpu_custom_call.1} parent=1 // pred_region
      %62 = dma.done [#allocation3], 128
    $region65: #{tpu_custom_call.1} parent=1 // pred_fallthru
      _
    %v63 = vld [vmem:[#allocation2] sm:$0xff]
    %v64 = vld [vmem:[%s1] sm:$0xff]
    %v65 = vld [vmem:[%s13] sm:$0xff]
    %v66 = vld [vmem:[%s14] sm:$0xff]
    %v67 = vld [vmem:[%s12] sm:$0xff]
    %v68 = vld [vmem:[%s12 + $0x8] sm:$0xff]
    %v69 = vld [vmem:[%s12 + $0x10] sm:$0xff]
    %v70 = vld [vmem:[%s12 + $0x18] sm:$0xff]
    %v71 = vlaneseq
    %v72 = vshrl.u32 %v71, 7
    %v73 = vlaneseq
    %v74 = vand.u32 %v73, 127
    %vm75 = vcmp.le.s32.totalorder %v74, %v72
    %v76 = vsel %vm75, 0.0, -1e+09
    %v77 = vld [vmem:[%s2] sm:$0x1]
    %v78 = vmul.f32 %v63, %v63
    %vm79 = vcmask 523264
    %v80 = vsel %vm79, %v78, 0.0
    %81 = vadd.xlane.f32.xlu0 %v80
    %v82 = vpop.xlane.xlu0 %81
    %v83 = vrcp.pop 64.0
    %v84 = vmul.f32 %v82, %v83
    %v85 = vadd.f32 %v84, 1e-06
    %v86 = vrsqrt.pop %v85
    %v87 = vmul.f32 %v63, %v86
    %v89 = vlaneseq
    %v90 = vshrl.u32 %v89, 7
    %v91 = vsub.s32 0, %v90
    %v92 = vrot.slane %v77, %v91
    %v94 = vmul.f32 %v87, %v92
    %v95 = vld [vmem:[%s5] sm:$0xff]
    %v96 = vld [vmem:[%s5 + $0x8] sm:$0xff]
    %v97 = vld [vmem:[%s5 + $0x10] sm:$0xff]
    %v98 = vld [vmem:[%s5 + $0x18] sm:$0xff]
    %v99 = vld [vmem:[%s5 + $0x20] sm:$0xff]
    %v100 = vld [vmem:[%s5 + $0x28] sm:$0xff]
    %v101 = vld [vmem:[%s5 + $0x30] sm:$0xff]
    %v102 = vld [vmem:[%s5 + $0x38] sm:$0xff]
    %v104 = vsel %vm79, %v94, 0
    %106 = vmatprep.subr.mxu0 0.0
    %107 = vmatpush1.msra.mxu0 %v95
    %108 = vmatprep.subr.mxu0 0.0
    %109 = vmatpush1.msra.mxu0 %v96
    %110 = vmatprep.subr.mxu0 0.0
    %111 = vmatpush1.msra.mxu0 %v97
    %112 = vmatprep.subr.mxu0 0.0
    %113 = vmatpush1.msra.mxu0 %v98
    %114 = vmatprep.subr.mxu0 0.0
    %115 = vmatpush1.msra.mxu0 %v99
    %116 = vmatprep.subr.mxu0 0.0
    %117 = vmatpush1.msra.mxu0 %v100
    %118 = vmatprep.subr.mxu0 0.0
    %119 = vmatpush1.msra.mxu0 %v101
    %120 = vmatprep.subr.mxu0 0.0
    %121 = vmatpush1.msra.mxu0 %v102
    %122 = vmatprep.subr.mxu0 0.0
    %123 = vmatpush1.msra.mxu0 0.0
    %124 = vmatprep.subr.mxu0 0.0
    %125 = vmatpush1.msra.mxu0 0.0
    %126 = vmatprep.subr.mxu0 0.0
    %127 = vmatpush1.msra.mxu0 0.0
    %128 = vmatprep.subr.mxu0 0.0
    %129 = vmatpush1.msra.mxu0 0.0
    %130 = vmatprep.subr.mxu0 0.0
    %131 = vmatpush1.msra.mxu0 0.0
    %132 = vmatprep.subr.mxu0 0.0
    %133 = vmatpush1.msra.mxu0 0.0
    %134 = vmatprep.subr.mxu0 0.0
    %135 = vmatpush1.msra.mxu0 0.0
    %136 = vmatprep.subr.mxu0 0.0
    %137 = vmatpush1.msra.mxu0 0.0
    %138 = vmatprep.subr.mxu0 0.0
    %139 = vmatpush1.msra.mxu0 0.0
    %140 = vmatprep.subr.mxu0 0.0
    %141 = vmatpush1.msra.mxu0 0.0
    %142 = vmatprep.subr.mxu0 0.0
    %143 = vmatpush1.msra.mxu0 0.0
    %144 = vmatprep.subr.mxu0 0.0
    %145 = vmatpush1.msra.mxu0 0.0
    %146 = vmatprep.subr.mxu0 0.0
    %147 = vmatpush1.msra.mxu0 0.0
    %148 = vmatprep.subr.mxu0 0.0
    %149 = vmatpush1.msra.mxu0 0.0
    %150 = vmatprep.subr.mxu0 0.0
    %151 = vmatpush1.msra.mxu0 0.0
    %152 = vmatprep.subr.mxu0 0.0
    %153 = vmatpush1.msra.mxu0 0.0
    %154 = vmatprep.subr.mxu0 0.0
    %155 = vmatpush1.msra.mxu0 0.0
    %156 = vmatprep.subr.mxu0 0.0
    %157 = vmatpush1.msra.mxu0 0.0
    %158 = vmatprep.subr.mxu0 0.0
    %159 = vmatpush1.msra.mxu0 0.0
    %160 = vmatprep.subr.mxu0 0.0
    %161 = vmatpush1.msra.mxu0 0.0
    %162 = vmatprep.subr.mxu0 0.0
    %163 = vmatpush1.msra.mxu0 0.0
    %164 = vmatprep.subr.mxu0 0.0
    %165 = vmatpush1.msra.mxu0 0.0
    %166 = vmatprep.subr.mxu0 0.0
    %167 = vmatpush1.msra.mxu0 0.0
    %168 = vmatprep.subr.mxu0 0.0
    %169 = vmatpush1.msra.mxu0 0.0
    %170 = vmatprep.mubr.f32.mxu0 0.0
    %171 = vmatmul.mubr.f32.gmra.mrb[0].mxu0 %v104
    %v172 = vpop.f32.mrb[0].mxu0
    %v173 = vadd.f32 0.0, %v172
    %v174 = vpop.f32.mrb[0].mxu0
    %175 = vdwg.mxu0
    %v176 = vmul.f32 %v173, %v65
    %vm177 = vcmask 261120
    %v179 = vsel %vm177, %v173, 0
    %181 = vmatprep.subr.mxu0 0.0
    %182 = vmatpush1.msra.mxu0 %v67
    %183 = vmatprep.subr.mxu0 0.0
    %184 = vmatpush1.msra.mxu0 %v68
    %185 = vmatprep.subr.mxu0 0.0
    %186 = vmatpush1.msra.mxu0 %v69
    %187 = vmatprep.subr.mxu0 0.0
    %188 = vmatpush1.msra.mxu0 %v70
    %189 = vmatprep.subr.mxu0 0.0
    %190 = vmatpush1.msra.mxu0 0.0
    %191 = vmatprep.subr.mxu0 0.0
    %192 = vmatpush1.msra.mxu0 0.0
    %193 = vmatprep.subr.mxu0 0.0
    %194 = vmatpush1.msra.mxu0 0.0
    %195 = vmatprep.subr.mxu0 0.0
    %196 = vmatpush1.msra.mxu0 0.0
    %197 = vmatprep.subr.mxu0 0.0
    %198 = vmatpush1.msra.mxu0 0.0
    %199 = vmatprep.subr.mxu0 0.0
    %200 = vmatpush1.msra.mxu0 0.0
    %201 = vmatprep.subr.mxu0 0.0
    %202 = vmatpush1.msra.mxu0 0.0
    %203 = vmatprep.subr.mxu0 0.0
    %204 = vmatpush1.msra.mxu0 0.0
    %205 = vmatprep.subr.mxu0 0.0
    %206 = vmatpush1.msra.mxu0 0.0
    %207 = vmatprep.subr.mxu0 0.0
    %208 = vmatpush1.msra.mxu0 0.0
    %209 = vmatprep.subr.mxu0 0.0
    %210 = vmatpush1.msra.mxu0 0.0
    %211 = vmatprep.subr.mxu0 0.0
    %212 = vmatpush1.msra.mxu0 0.0
    %213 = vmatprep.subr.mxu0 0.0
    %214 = vmatpush1.msra.mxu0 0.0
    %215 = vmatprep.subr.mxu0 0.0
    %216 = vmatpush1.msra.mxu0 0.0
    %217 = vmatprep.subr.mxu0 0.0
    %218 = vmatpush1.msra.mxu0 0.0
    %219 = vmatprep.subr.mxu0 0.0
    %220 = vmatpush1.msra.mxu0 0.0
    %221 = vmatprep.subr.mxu0 0.0
    %222 = vmatpush1.msra.mxu0 0.0
    %223 = vmatprep.subr.mxu0 0.0
    %224 = vmatpush1.msra.mxu0 0.0
    %225 = vmatprep.subr.mxu0 0.0
    %226 = vmatpush1.msra.mxu0 0.0
    %227 = vmatprep.subr.mxu0 0.0
    %228 = vmatpush1.msra.mxu0 0.0
    %229 = vmatprep.subr.mxu0 0.0
    %230 = vmatpush1.msra.mxu0 0.0
    %231 = vmatprep.subr.mxu0 0.0
    %232 = vmatpush1.msra.mxu0 0.0
    %233 = vmatprep.subr.mxu0 0.0
    %234 = vmatpush1.msra.mxu0 0.0
    %235 = vmatprep.subr.mxu0 0.0
    %236 = vmatpush1.msra.mxu0 0.0
    %237 = vmatprep.subr.mxu0 0.0
    %238 = vmatpush1.msra.mxu0 0.0
    %239 = vmatprep.subr.mxu0 0.0
    %240 = vmatpush1.msra.mxu0 0.0
    %241 = vmatprep.subr.mxu0 0.0
    %242 = vmatpush1.msra.mxu0 0.0
    %243 = vmatprep.subr.mxu0 0.0
    %244 = vmatpush1.msra.mxu0 0.0
    %245 = vmatprep.mubr.f32.mxu0 0.0
    %246 = vmatmul.mubr.f32.gmra.mrb[0].mxu0 %v179
    %v247 = vpop.f32.mrb[0].mxu0
    %v248 = vadd.f32 0.0, %v247
    %v249 = vpop.f32.mrb[0].mxu0
    %250 = vdwg.mxu0
    %v251 = vmul.f32 %v248, %v66
    %v252 = vadd.f32 %v176, %v251
    %v253 = vld [vmem:[%s6] sm:$0xff]
    %v254 = vld [vmem:[%s6 + $0x8] sm:$0xff]
    %v255 = vld [vmem:[%s6 + $0x10] sm:$0xff]
    %v256 = vld [vmem:[%s6 + $0x18] sm:$0xff]
    %v257 = vld [vmem:[%s6 + $0x20] sm:$0xff]
    %v258 = vld [vmem:[%s6 + $0x28] sm:$0xff]
    %v259 = vld [vmem:[%s6 + $0x30] sm:$0xff]
    %v260 = vld [vmem:[%s6 + $0x38] sm:$0xff]
    %261 = vmatprep.subr.mxu0 0.0
    %262 = vmatpush1.msra.mxu0 %v253
    %263 = vmatprep.subr.mxu0 0.0
    %264 = vmatpush1.msra.mxu0 %v254
    %265 = vmatprep.subr.mxu0 0.0
    %266 = vmatpush1.msra.mxu0 %v255
    %267 = vmatprep.subr.mxu0 0.0
    %268 = vmatpush1.msra.mxu0 %v256
    %269 = vmatprep.subr.mxu0 0.0
    %270 = vmatpush1.msra.mxu0 %v257
    %271 = vmatprep.subr.mxu0 0.0
    %272 = vmatpush1.msra.mxu0 %v258
    %273 = vmatprep.subr.mxu0 0.0
    %274 = vmatpush1.msra.mxu0 %v259
    %275 = vmatprep.subr.mxu0 0.0
    %276 = vmatpush1.msra.mxu0 %v260
    %277 = vmatprep.subr.mxu0 0.0
    %278 = vmatpush1.msra.mxu0 0.0
    %279 = vmatprep.subr.mxu0 0.0
    %280 = vmatpush1.msra.mxu0 0.0
    %281 = vmatprep.subr.mxu0 0.0
    %282 = vmatpush1.msra.mxu0 0.0
    %283 = vmatprep.subr.mxu0 0.0
    %284 = vmatpush1.msra.mxu0 0.0
    %285 = vmatprep.subr.mxu0 0.0
    %286 = vmatpush1.msra.mxu0 0.0
    %287 = vmatprep.subr.mxu0 0.0
    %288 = vmatpush1.msra.mxu0 0.0
    %289 = vmatprep.subr.mxu0 0.0
    %290 = vmatpush1.msra.mxu0 0.0
    %291 = vmatprep.subr.mxu0 0.0
    %292 = vmatpush1.msra.mxu0 0.0
    %293 = vmatprep.subr.mxu0 0.0
    %294 = vmatpush1.msra.mxu0 0.0
    %295 = vmatprep.subr.mxu0 0.0
    %296 = vmatpush1.msra.mxu0 0.0
    %297 = vmatprep.subr.mxu0 0.0
    %298 = vmatpush1.msra.mxu0 0.0
    %299 = vmatprep.subr.mxu0 0.0
    %300 = vmatpush1.msra.mxu0 0.0
    %301 = vmatprep.subr.mxu0 0.0
    %302 = vmatpush1.msra.mxu0 0.0
    %303 = vmatprep.subr.mxu0 0.0
    %304 = vmatpush1.msra.mxu0 0.0
    %305 = vmatprep.subr.mxu0 0.0
    %306 = vmatpush1.msra.mxu0 0.0
    %307 = vmatprep.subr.mxu0 0.0
    %308 = vmatpush1.msra.mxu0 0.0
    %309 = vmatprep.subr.mxu0 0.0
    %310 = vmatpush1.msra.mxu0 0.0
    %311 = vmatprep.subr.mxu0 0.0
    %312 = vmatpush1.msra.mxu0 0.0
    %313 = vmatprep.subr.mxu0 0.0
    %314 = vmatpush1.msra.mxu0 0.0
    %315 = vmatprep.subr.mxu0 0.0
    %316 = vmatpush1.msra.mxu0 0.0
    %317 = vmatprep.subr.mxu0 0.0
    %318 = vmatpush1.msra.mxu0 0.0
    %319 = vmatprep.subr.mxu0 0.0
    %320 = vmatpush1.msra.mxu0 0.0
    %321 = vmatprep.subr.mxu0 0.0
    %322 = vmatpush1.msra.mxu0 0.0
    %323 = vmatprep.subr.mxu0 0.0
    %324 = vmatpush1.msra.mxu0 0.0
    %325 = vmatprep.mubr.f32.mxu0 0.0
    %326 = vmatmul.mubr.f32.gmra.mrb[0].mxu0 %v104
    %v327 = vpop.f32.mrb[0].mxu0
    %v328 = vadd.f32 0.0, %v327
    %v329 = vpop.f32.mrb[0].mxu0
    %330 = vdwg.mxu0
    %v331 = vmul.f32 %v328, %v65
    %v333 = vsel %vm177, %v328, 0
    %335 = vmatprep.subr.mxu0 0.0
    %336 = vmatpush1.msra.mxu0 %v67
    %337 = vmatprep.subr.mxu0 0.0
    %338 = vmatpush1.msra.mxu0 %v68
    %339 = vmatprep.subr.mxu0 0.0
    %340 = vmatpush1.msra.mxu0 %v69
    %341 = vmatprep.subr.mxu0 0.0
    %342 = vmatpush1.msra.mxu0 %v70
    %343 = vmatprep.subr.mxu0 0.0
    %344 = vmatpush1.msra.mxu0 0.0
    %345 = vmatprep.subr.mxu0 0.0
    %346 = vmatpush1.msra.mxu0 0.0
    %347 = vmatprep.subr.mxu0 0.0
    %348 = vmatpush1.msra.mxu0 0.0
    %349 = vmatprep.subr.mxu0 0.0
    %350 = vmatpush1.msra.mxu0 0.0
    %351 = vmatprep.subr.mxu0 0.0
    %352 = vmatpush1.msra.mxu0 0.0
    %353 = vmatprep.subr.mxu0 0.0
    %354 = vmatpush1.msra.mxu0 0.0
    %355 = vmatprep.subr.mxu0 0.0
    %356 = vmatpush1.msra.mxu0 0.0
    %357 = vmatprep.subr.mxu0 0.0
    %358 = vmatpush1.msra.mxu0 0.0
    %359 = vmatprep.subr.mxu0 0.0
    %360 = vmatpush1.msra.mxu0 0.0
    %361 = vmatprep.subr.mxu0 0.0
    %362 = vmatpush1.msra.mxu0 0.0
    %363 = vmatprep.subr.mxu0 0.0
    %364 = vmatpush1.msra.mxu0 0.0
    %365 = vmatprep.subr.mxu0 0.0
    %366 = vmatpush1.msra.mxu0 0.0
    %367 = vmatprep.subr.mxu0 0.0
    %368 = vmatpush1.msra.mxu0 0.0
    %369 = vmatprep.subr.mxu0 0.0
    %370 = vmatpush1.msra.mxu0 0.0
    %371 = vmatprep.subr.mxu0 0.0
    %372 = vmatpush1.msra.mxu0 0.0
    %373 = vmatprep.subr.mxu0 0.0
    %374 = vmatpush1.msra.mxu0 0.0
    %375 = vmatprep.subr.mxu0 0.0
    %376 = vmatpush1.msra.mxu0 0.0
    %377 = vmatprep.subr.mxu0 0.0
    %378 = vmatpush1.msra.mxu0 0.0
    %379 = vmatprep.subr.mxu0 0.0
    %380 = vmatpush1.msra.mxu0 0.0
    %381 = vmatprep.subr.mxu0 0.0
    %382 = vmatpush1.msra.mxu0 0.0
    %383 = vmatprep.subr.mxu0 0.0
    %384 = vmatpush1.msra.mxu0 0.0
    %385 = vmatprep.subr.mxu0 0.0
    %386 = vmatpush1.msra.mxu0 0.0
    %387 = vmatprep.subr.mxu0 0.0
    %388 = vmatpush1.msra.mxu0 0.0
    %389 = vmatprep.subr.mxu0 0.0
    %390 = vmatpush1.msra.mxu0 0.0
    %391 = vmatprep.subr.mxu0 0.0
    %392 = vmatpush1.msra.mxu0 0.0
    %393 = vmatprep.subr.mxu0 0.0
    %394 = vmatpush1.msra.mxu0 0.0
    %395 = vmatprep.subr.mxu0 0.0
    %396 = vmatpush1.msra.mxu0 0.0
    %397 = vmatprep.subr.mxu0 0.0
    %398 = vmatpush1.msra.mxu0 0.0
    %399 = vmatprep.mubr.f32.mxu0 0.0
    %400 = vmatmul.mubr.f32.gmra.mrb[0].mxu0 %v333
    %v401 = vpop.f32.mrb[0].mxu0
    %v402 = vadd.f32 0.0, %v401
    %v403 = vpop.f32.mrb[0].mxu0
    %404 = vdwg.mxu0
    %v405 = vmul.f32 %v402, %v66
    %v406 = vadd.f32 %v331, %v405
    %v407 = vld [vmem:[%s7] sm:$0xff]
    %v408 = vld [vmem:[%s7 + $0x8] sm:$0xff]
    %v409 = vld [vmem:[%s7 + $0x10] sm:$0xff]
    %v410 = vld [vmem:[%s7 + $0x18] sm:$0xff]
    %v411 = vld [vmem:[%s7 + $0x20] sm:$0xff]
    %v412 = vld [vmem:[%s7 + $0x28] sm:$0xff]
    %v413 = vld [vmem:[%s7 + $0x30] sm:$0xff]
    %v414 = vld [vmem:[%s7 + $0x38] sm:$0xff]
    %415 = vmatprep.subr.mxu0 0.0
    %416 = vmatpush1.msra.mxu0 %v407
    %417 = vmatprep.subr.mxu0 0.0
    %418 = vmatpush1.msra.mxu0 %v408
    %419 = vmatprep.subr.mxu0 0.0
    %420 = vmatpush1.msra.mxu0 %v409
    %421 = vmatprep.subr.mxu0 0.0
    %422 = vmatpush1.msra.mxu0 %v410
    %423 = vmatprep.subr.mxu0 0.0
    %424 = vmatpush1.msra.mxu0 %v411
    %425 = vmatprep.subr.mxu0 0.0
    %426 = vmatpush1.msra.mxu0 %v412
    %427 = vmatprep.subr.mxu0 0.0
    %428 = vmatpush1.msra.mxu0 %v413
    %429 = vmatprep.subr.mxu0 0.0
    %430 = vmatpush1.msra.mxu0 %v414
    %431 = vmatprep.subr.mxu0 0.0
    %432 = vmatpush1.msra.mxu0 0.0
    %433 = vmatprep.subr.mxu0 0.0
    %434 = vmatpush1.msra.mxu0 0.0
    %435 = vmatprep.subr.mxu0 0.0
    %436 = vmatpush1.msra.mxu0 0.0
    %437 = vmatprep.subr.mxu0 0.0
    %438 = vmatpush1.msra.mxu0 0.0
    %439 = vmatprep.subr.mxu0 0.0
    %440 = vmatpush1.msra.mxu0 0.0
    %441 = vmatprep.subr.mxu0 0.0
    %442 = vmatpush1.msra.mxu0 0.0
    %443 = vmatprep.subr.mxu0 0.0
    %444 = vmatpush1.msra.mxu0 0.0
    %445 = vmatprep.subr.mxu0 0.0
    %446 = vmatpush1.msra.mxu0 0.0
    %447 = vmatprep.subr.mxu0 0.0
    %448 = vmatpush1.msra.mxu0 0.0
    %449 = vmatprep.subr.mxu0 0.0
    %450 = vmatpush1.msra.mxu0 0.0
    %451 = vmatprep.subr.mxu0 0.0
    %452 = vmatpush1.msra.mxu0 0.0
    %453 = vmatprep.subr.mxu0 0.0
    %454 = vmatpush1.msra.mxu0 0.0
    %455 = vmatprep.subr.mxu0 0.0
    %456 = vmatpush1.msra.mxu0 0.0
    %457 = vmatprep.subr.mxu0 0.0
    %458 = vmatpush1.msra.mxu0 0.0
    %459 = vmatprep.subr.mxu0 0.0
    %460 = vmatpush1.msra.mxu0 0.0
    %461 = vmatprep.subr.mxu0 0.0
    %462 = vmatpush1.msra.mxu0 0.0
    %463 = vmatprep.subr.mxu0 0.0
    %464 = vmatpush1.msra.mxu0 0.0
    %465 = vmatprep.subr.mxu0 0.0
    %466 = vmatpush1.msra.mxu0 0.0
    %467 = vmatprep.subr.mxu0 0.0
    %468 = vmatpush1.msra.mxu0 0.0
    %469 = vmatprep.subr.mxu0 0.0
    %470 = vmatpush1.msra.mxu0 0.0
    %471 = vmatprep.subr.mxu0 0.0
    %472 = vmatpush1.msra.mxu0 0.0
    %473 = vmatprep.subr.mxu0 0.0
    %474 = vmatpush1.msra.mxu0 0.0
    %475 = vmatprep.subr.mxu0 0.0
    %476 = vmatpush1.msra.mxu0 0.0
    %477 = vmatprep.subr.mxu0 0.0
    %478 = vmatpush1.msra.mxu0 0.0
    %479 = vmatprep.mubr.f32.mxu0 0.0
    %480 = vmatmul.mubr.f32.gmra.mrb[0].mxu0 %v104
    %v481 = vpop.f32.mrb[0].mxu0
    %v482 = vadd.f32 0.0, %v481
    %v483 = vpop.f32.mrb[0].mxu0
    %484 = vdwg.mxu0
    %v486 = vsel %vm177, %v252, 0
    %v489 = vsel %vm177, %v406, 0
    %491 = vmatprep.subr.mxu0 0.0
    %492 = vmatpush1.xpose.msra.mxu0 %v489
    %493 = vmatprep.subr.mxu0 0.0
    %494 = vmatpush1.xpose.msra.mxu0 0.0
    %495 = vmatprep.subr.mxu0 0.0
    %496 = vmatpush1.xpose.msra.mxu0 0.0
    %497 = vmatprep.subr.mxu0 0.0
    %498 = vmatpush1.xpose.msra.mxu0 0.0
    %499 = vmatprep.subr.mxu0 0.0
    %500 = vmatpush1.xpose.msra.mxu0 0.0
    %501 = vmatprep.subr.mxu0 0.0
    %502 = vmatpush1.xpose.msra.mxu0 0.0
    %503 = vmatprep.subr.mxu0 0.0
    %504 = vmatpush1.xpose.msra.mxu0 0.0
    %505 = vmatprep.subr.mxu0 0.0
    %506 = vmatpush1.xpose.msra.mxu0 0.0
    %507 = vmatprep.subr.mxu0 0.0
    %508 = vmatpush1.xpose.msra.mxu0 0.0
    %509 = vmatprep.subr.mxu0 0.0
    %510 = vmatpush1.xpose.msra.mxu0 0.0
    %511 = vmatprep.subr.mxu0 0.0
    %512 = vmatpush1.xpose.msra.mxu0 0.0
    %513 = vmatprep.subr.mxu0 0.0
    %514 = vmatpush1.xpose.msra.mxu0 0.0
    %515 = vmatprep.subr.mxu0 0.0
    %516 = vmatpush1.xpose.msra.mxu0 0.0
    %517 = vmatprep.subr.mxu0 0.0
    %518 = vmatpush1.xpose.msra.mxu0 0.0
    %519 = vmatprep.subr.mxu0 0.0
    %520 = vmatpush1.xpose.msra.mxu0 0.0
    %521 = vmatprep.subr.mxu0 0.0
    %522 = vmatpush1.xpose.msra.mxu0 0.0
    %523 = vmatprep.subr.mxu0 0.0
    %524 = vmatpush1.xpose.msra.mxu0 0.0
    %525 = vmatprep.subr.mxu0 0.0
    %526 = vmatpush1.xpose.msra.mxu0 0.0
    %527 = vmatprep.subr.mxu0 0.0
    %528 = vmatpush1.xpose.msra.mxu0 0.0
    %529 = vmatprep.subr.mxu0 0.0
    %530 = vmatpush1.xpose.msra.mxu0 0.0
    %531 = vmatprep.subr.mxu0 0.0
    %532 = vmatpush1.xpose.msra.mxu0 0.0
    %533 = vmatprep.subr.mxu0 0.0
    %534 = vmatpush1.xpose.msra.mxu0 0.0
    %535 = vmatprep.subr.mxu0 0.0
    %536 = vmatpush1.xpose.msra.mxu0 0.0
    %537 = vmatprep.subr.mxu0 0.0
    %538 = vmatpush1.xpose.msra.mxu0 0.0
    %539 = vmatprep.subr.mxu0 0.0
    %540 = vmatpush1.xpose.msra.mxu0 0.0
    %541 = vmatprep.subr.mxu0 0.0
    %542 = vmatpush1.xpose.msra.mxu0 0.0
    %543 = vmatprep.subr.mxu0 0.0
    %544 = vmatpush1.xpose.msra.mxu0 0.0
    %545 = vmatprep.subr.mxu0 0.0
    %546 = vmatpush1.xpose.msra.mxu0 0.0
    %547 = vmatprep.subr.mxu0 0.0
    %548 = vmatpush1.xpose.msra.mxu0 0.0
    %549 = vmatprep.subr.mxu0 0.0
    %550 = vmatpush1.xpose.msra.mxu0 0.0
    %551 = vmatprep.subr.mxu0 0.0
    %552 = vmatpush1.xpose.msra.mxu0 0.0
    %553 = vmatprep.subr.mxu0 0.0
    %554 = vmatpush1.xpose.msra.mxu0 0.0
    %555 = vmatprep.mubr.f32.mxu0 0.0
    %556 = vmatmul.mubr.f32.gmra.mrb[0].mxu0 %v486
    %v557 = vpop.f32.mrb[0].mxu0
    %v558 = vadd.f32 0.0, %v557
    %v559 = vpop.f32.mrb[0].mxu0
    %560 = vdwg.mxu0
    %v561 = vmul.f32 %v558, 0.17677669
    %v562 = vadd.f32 %v561, %v76
    %vm563 = vcmask 64512
    %v564 = vsel %vm563, %v562, -inf
    %565 = vmax.xlane.f32.xlu0 %v564
    %v566 = vpop.xlane.xlu0 %565
    %v567 = vsub.f32 %v562, %v566
    %v568 = vmul.f32 %v567, 1.442695
    %v569 = vpow.pop %v568
    %v570 = vsel %vm563, %v569, 0.0
    %571 = vadd.xlane.f32.xlu0 %v570
    %v572 = vpop.xlane.xlu0 %571
    %v573 = vrcp.pop %v572
    %v574 = vmul.f32 %v569, %v573
    %v576 = vsel %vm563, %v574, 0
    %578 = vmatprep.subr.mxu0 0.0
    %579 = vmatpush1.msra.mxu0 %v482
    %580 = vmatprep.subr.mxu0 0.0
    %581 = vmatpush1.msra.mxu0 0.0
    %582 = vmatprep.subr.mxu0 0.0
    %583 = vmatpush1.msra.mxu0 0.0
    %584 = vmatprep.subr.mxu0 0.0
    %585 = vmatpush1.msra.mxu0 0.0
    %586 = vmatprep.subr.mxu0 0.0
    %587 = vmatpush1.msra.mxu0 0.0
    %588 = vmatprep.subr.mxu0 0.0
    %589 = vmatpush1.msra.mxu0 0.0
    %590 = vmatprep.subr.mxu0 0.0
    %591 = vmatpush1.msra.mxu0 0.0
    %592 = vmatprep.subr.mxu0 0.0
    %593 = vmatpush1.msra.mxu0 0.0
    %594 = vmatprep.subr.mxu0 0.0
    %595 = vmatpush1.msra.mxu0 0.0
    %596 = vmatprep.subr.mxu0 0.0
    %597 = vmatpush1.msra.mxu0 0.0
    %598 = vmatprep.subr.mxu0 0.0
    %599 = vmatpush1.msra.mxu0 0.0
    %600 = vmatprep.subr.mxu0 0.0
    %601 = vmatpush1.msra.mxu0 0.0
    %602 = vmatprep.subr.mxu0 0.0
    %603 = vmatpush1.msra.mxu0 0.0
    %604 = vmatprep.subr.mxu0 0.0
    %605 = vmatpush1.msra.mxu0 0.0
    %606 = vmatprep.subr.mxu0 0.0
    %607 = vmatpush1.msra.mxu0 0.0
    %608 = vmatprep.subr.mxu0 0.0
    %609 = vmatpush1.msra.mxu0 0.0
    %610 = vmatprep.subr.mxu0 0.0
    %611 = vmatpush1.msra.mxu0 0.0
    %612 = vmatprep.subr.mxu0 0.0
    %613 = vmatpush1.msra.mxu0 0.0
    %614 = vmatprep.subr.mxu0 0.0
    %615 = vmatpush1.msra.mxu0 0.0
    %616 = vmatprep.subr.mxu0 0.0
    %617 = vmatpush1.msra.mxu0 0.0
    %618 = vmatprep.subr.mxu0 0.0
    %619 = vmatpush1.msra.mxu0 0.0
    %620 = vmatprep.subr.mxu0 0.0
    %621 = vmatpush1.msra.mxu0 0.0
    %622 = vmatprep.subr.mxu0 0.0
    %623 = vmatpush1.msra.mxu0 0.0
    %624 = vmatprep.subr.mxu0 0.0
    %625 = vmatpush1.msra.mxu0 0.0
    %626 = vmatprep.subr.mxu0 0.0
    %627 = vmatpush1.msra.mxu0 0.0
    %628 = vmatprep.subr.mxu0 0.0
    %629 = vmatpush1.msra.mxu0 0.0
    %630 = vmatprep.subr.mxu0 0.0
    %631 = vmatpush1.msra.mxu0 0.0
    %632 = vmatprep.subr.mxu0 0.0
    %633 = vmatpush1.msra.mxu0 0.0
    %634 = vmatprep.subr.mxu0 0.0
    %635 = vmatpush1.msra.mxu0 0.0
    %636 = vmatprep.subr.mxu0 0.0
    %637 = vmatpush1.msra.mxu0 0.0
    %638 = vmatprep.subr.mxu0 0.0
    %639 = vmatpush1.msra.mxu0 0.0
    %640 = vmatprep.subr.mxu0 0.0
    %641 = vmatpush1.msra.mxu0 0.0
    %642 = vmatprep.mubr.f32.mxu0 0.0
    %643 = vmatmul.mubr.f32.gmra.mrb[0].mxu0 %v576
    %v644 = vpop.f32.mrb[0].mxu0
    %v645 = vadd.f32 0.0, %v644
    %v646 = vpop.f32.mrb[0].mxu0
    %647 = vdwg.mxu0
    %v648 = vld [vmem:[%s8] sm:$0xff]
    %v649 = vld [vmem:[%s8 + $0x8] sm:$0xff]
    %v650 = vld [vmem:[%s8 + $0x10] sm:$0xff]
    %v651 = vld [vmem:[%s8 + $0x18] sm:$0xff]
    %s652 = scalar_lea.vmem %s5, 64
    %v653 = vld [vmem:[%s652] sm:$0xff]
    %v654 = vld [vmem:[%s652 + $0x8] sm:$0xff]
    %v655 = vld [vmem:[%s652 + $0x10] sm:$0xff]
    %v656 = vld [vmem:[%s652 + $0x18] sm:$0xff]
    %v657 = vld [vmem:[%s652 + $0x20] sm:$0xff]
    %v658 = vld [vmem:[%s652 + $0x28] sm:$0xff]
    %v659 = vld [vmem:[%s652 + $0x30] sm:$0xff]
    %v660 = vld [vmem:[%s652 + $0x38] sm:$0xff]
    %661 = vmatprep.subr.mxu0 0.0
    %662 = vmatpush1.msra.mxu0 %v653
    %663 = vmatprep.subr.mxu0 0.0
    %664 = vmatpush1.msra.mxu0 %v654
    %665 = vmatprep.subr.mxu0 0.0
    %666 = vmatpush1.msra.mxu0 %v655
    %667 = vmatprep.subr.mxu0 0.0
    %668 = vmatpush1.msra.mxu0 %v656
    %669 = vmatprep.subr.mxu0 0.0
    %670 = vmatpush1.msra.mxu0 %v657
    %671 = vmatprep.subr.mxu0 0.0
    %672 = vmatpush1.msra.mxu0 %v658
    %673 = vmatprep.subr.mxu0 0.0
    %674 = vmatpush1.msra.mxu0 %v659
    %675 = vmatprep.subr.mxu0 0.0
    %676 = vmatpush1.msra.mxu0 %v660
    %677 = vmatprep.subr.mxu0 0.0
    %678 = vmatpush1.msra.mxu0 0.0
    %679 = vmatprep.subr.mxu0 0.0
    %680 = vmatpush1.msra.mxu0 0.0
    %681 = vmatprep.subr.mxu0 0.0
    %682 = vmatpush1.msra.mxu0 0.0
    %683 = vmatprep.subr.mxu0 0.0
    %684 = vmatpush1.msra.mxu0 0.0
    %685 = vmatprep.subr.mxu0 0.0
    %686 = vmatpush1.msra.mxu0 0.0
    %687 = vmatprep.subr.mxu0 0.0
    %688 = vmatpush1.msra.mxu0 0.0
    %689 = vmatprep.subr.mxu0 0.0
    %690 = vmatpush1.msra.mxu0 0.0
    %691 = vmatprep.subr.mxu0 0.0
    %692 = vmatpush1.msra.mxu0 0.0
    %693 = vmatprep.subr.mxu0 0.0
    %694 = vmatpush1.msra.mxu0 0.0
    %695 = vmatprep.subr.mxu0 0.0
    %696 = vmatpush1.msra.mxu0 0.0
    %697 = vmatprep.subr.mxu0 0.0
    %698 = vmatpush1.msra.mxu0 0.0
    %699 = vmatprep.subr.mxu0 0.0
    %700 = vmatpush1.msra.mxu0 0.0
    %701 = vmatprep.subr.mxu0 0.0
    %702 = vmatpush1.msra.mxu0 0.0
    %703 = vmatprep.subr.mxu0 0.0
    %704 = vmatpush1.msra.mxu0 0.0
    %705 = vmatprep.subr.mxu0 0.0
    %706 = vmatpush1.msra.mxu0 0.0
    %707 = vmatprep.subr.mxu0 0.0
    %708 = vmatpush1.msra.mxu0 0.0
    %709 = vmatprep.subr.mxu0 0.0
    %710 = vmatpush1.msra.mxu0 0.0
    %711 = vmatprep.subr.mxu0 0.0
    %712 = vmatpush1.msra.mxu0 0.0
    %713 = vmatprep.subr.mxu0 0.0
    %714 = vmatpush1.msra.mxu0 0.0
    %715 = vmatprep.subr.mxu0 0.0
    %716 = vmatpush1.msra.mxu0 0.0
    %717 = vmatprep.subr.mxu0 0.0
    %718 = vmatpush1.msra.mxu0 0.0
    %719 = vmatprep.subr.mxu0 0.0
    %720 = vmatpush1.msra.mxu0 0.0
    %721 = vmatprep.subr.mxu0 0.0
    %722 = vmatpush1.msra.mxu0 0.0
    %723 = vmatprep.subr.mxu0 0.0
    %724 = vmatpush1.msra.mxu0 0.0
    %725 = vmatprep.mubr.f32.mxu0 0.0
    %726 = vmatmul.mubr.f32.gmra.mrb[0].mxu0 %v104
    %v727 = vpop.f32.mrb[0].mxu0
    %v728 = vadd.f32 0.0, %v727
    %v729 = vpop.f32.mrb[0].mxu0
    %730 = vdwg.mxu0
    %v731 = vmul.f32 %v728, %v65
    %v733 = vsel %vm177, %v728, 0
    %735 = vmatprep.subr.mxu0 0.0
    %736 = vmatpush1.msra.mxu0 %v67
    %737 = vmatprep.subr.mxu0 0.0
    %738 = vmatpush1.msra.mxu0 %v68
    %739 = vmatprep.subr.mxu0 0.0
    %740 = vmatpush1.msra.mxu0 %v69
    %741 = vmatprep.subr.mxu0 0.0
    %742 = vmatpush1.msra.mxu0 %v70
    %743 = vmatprep.subr.mxu0 0.0
    %744 = vmatpush1.msra.mxu0 0.0
    %745 = vmatprep.subr.mxu0 0.0
    %746 = vmatpush1.msra.mxu0 0.0
    %747 = vmatprep.subr.mxu0 0.0
    %748 = vmatpush1.msra.mxu0 0.0
    %749 = vmatprep.subr.mxu0 0.0
    %750 = vmatpush1.msra.mxu0 0.0
    %751 = vmatprep.subr.mxu0 0.0
    %752 = vmatpush1.msra.mxu0 0.0
    %753 = vmatprep.subr.mxu0 0.0
    %754 = vmatpush1.msra.mxu0 0.0
    %755 = vmatprep.subr.mxu0 0.0
    %756 = vmatpush1.msra.mxu0 0.0
    %757 = vmatprep.subr.mxu0 0.0
    %758 = vmatpush1.msra.mxu0 0.0
    %759 = vmatprep.subr.mxu0 0.0
    %760 = vmatpush1.msra.mxu0 0.0
    %761 = vmatprep.subr.mxu0 0.0
    %762 = vmatpush1.msra.mxu0 0.0
    %763 = vmatprep.subr.mxu0 0.0
    %764 = vmatpush1.msra.mxu0 0.0
    %765 = vmatprep.subr.mxu0 0.0
    %766 = vmatpush1.msra.mxu0 0.0
    %767 = vmatprep.subr.mxu0 0.0
    %768 = vmatpush1.msra.mxu0 0.0
    %769 = vmatprep.subr.mxu0 0.0
    %770 = vmatpush1.msra.mxu0 0.0
    %771 = vmatprep.subr.mxu0 0.0
    %772 = vmatpush1.msra.mxu0 0.0
    %773 = vmatprep.subr.mxu0 0.0
    %774 = vmatpush1.msra.mxu0 0.0
    %775 = vmatprep.subr.mxu0 0.0
    %776 = vmatpush1.msra.mxu0 0.0
    %777 = vmatprep.subr.mxu0 0.0
    %778 = vmatpush1.msra.mxu0 0.0
    %779 = vmatprep.subr.mxu0 0.0
    %780 = vmatpush1.msra.mxu0 0.0
    %781 = vmatprep.subr.mxu0 0.0
    %782 = vmatpush1.msra.mxu0 0.0
    %783 = vmatprep.subr.mxu0 0.0
    %784 = vmatpush1.msra.mxu0 0.0
    %785 = vmatprep.subr.mxu0 0.0
    %786 = vmatpush1.msra.mxu0 0.0
    %787 = vmatprep.subr.mxu0 0.0
    %788 = vmatpush1.msra.mxu0 0.0
    %789 = vmatprep.subr.mxu0 0.0
    %790 = vmatpush1.msra.mxu0 0.0
    %791 = vmatprep.subr.mxu0 0.0
    %792 = vmatpush1.msra.mxu0 0.0
    %793 = vmatprep.subr.mxu0 0.0
    %794 = vmatpush1.msra.mxu0 0.0
    %795 = vmatprep.subr.mxu0 0.0
    %796 = vmatpush1.msra.mxu0 0.0
    %797 = vmatprep.subr.mxu0 0.0
    %798 = vmatpush1.msra.mxu0 0.0
    %799 = vmatprep.mubr.f32.mxu0 0.0
    %800 = vmatmul.mubr.f32.gmra.mrb[0].mxu0 %v733
    %v801 = vpop.f32.mrb[0].mxu0
    %v802 = vadd.f32 0.0, %v801
    %v803 = vpop.f32.mrb[0].mxu0
    %804 = vdwg.mxu0
    %v805 = vmul.f32 %v802, %v66
    %v806 = vadd.f32 %v731, %v805
    %s807 = scalar_lea.vmem %s6, 64
    %v808 = vld [vmem:[%s807] sm:$0xff]
    %v809 = vld [vmem:[%s807 + $0x8] sm:$0xff]
    %v810 = vld [vmem:[%s807 + $0x10] sm:$0xff]
    %v811 = vld [vmem:[%s807 + $0x18] sm:$0xff]
    %v812 = vld [vmem:[%s807 + $0x20] sm:$0xff]
    %v813 = vld [vmem:[%s807 + $0x28] sm:$0xff]
    %v814 = vld [vmem:[%s807 + $0x30] sm:$0xff]
    %v815 = vld [vmem:[%s807 + $0x38] sm:$0xff]
    %816 = vmatprep.subr.mxu0 0.0
    %817 = vmatpush1.msra.mxu0 %v808
    %818 = vmatprep.subr.mxu0 0.0
    %819 = vmatpush1.msra.mxu0 %v809
    %820 = vmatprep.subr.mxu0 0.0
    %821 = vmatpush1.msra.mxu0 %v810
    %822 = vmatprep.subr.mxu0 0.0
    %823 = vmatpush1.msra.mxu0 %v811
    %824 = vmatprep.subr.mxu0 0.0
    %825 = vmatpush1.msra.mxu0 %v812
    %826 = vmatprep.subr.mxu0 0.0
    %827 = vmatpush1.msra.mxu0 %v813
    %828 = vmatprep.subr.mxu0 0.0
    %829 = vmatpush1.msra.mxu0 %v814
    %830 = vmatprep.subr.mxu0 0.0
    %831 = vmatpush1.msra.mxu0 %v815
    %832 = vmatprep.subr.mxu0 0.0
    %833 = vmatpush1.msra.mxu0 0.0
    %834 = vmatprep.subr.mxu0 0.0
    %835 = vmatpush1.msra.mxu0 0.0
    %836 = vmatprep.subr.mxu0 0.0
    %837 = vmatpush1.msra.mxu0 0.0
    %838 = vmatprep.subr.mxu0 0.0
    %839 = vmatpush1.msra.mxu0 0.0
    %840 = vmatprep.subr.mxu0 0.0
    %841 = vmatpush1.msra.mxu0 0.0
    %842 = vmatprep.subr.mxu0 0.0
    %843 = vmatpush1.msra.mxu0 0.0
    %844 = vmatprep.subr.mxu0 0.0
    %845 = vmatpush1.msra.mxu0 0.0
    %846 = vmatprep.subr.mxu0 0.0
    %847 = vmatpush1.msra.mxu0 0.0
    %848 = vmatprep.subr.mxu0 0.0
    %849 = vmatpush1.msra.mxu0 0.0
    %850 = vmatprep.subr.mxu0 0.0
    %851 = vmatpush1.msra.mxu0 0.0
    %852 = vmatprep.subr.mxu0 0.0
    %853 = vmatpush1.msra.mxu0 0.0
    %854 = vmatprep.subr.mxu0 0.0
    %855 = vmatpush1.msra.mxu0 0.0
    %856 = vmatprep.subr.mxu0 0.0
    %857 = vmatpush1.msra.mxu0 0.0
    %858 = vmatprep.subr.mxu0 0.0
    %859 = vmatpush1.msra.mxu0 0.0
    %860 = vmatprep.subr.mxu0 0.0
    %861 = vmatpush1.msra.mxu0 0.0
    %862 = vmatprep.subr.mxu0 0.0
    %863 = vmatpush1.msra.mxu0 0.0
    %864 = vmatprep.subr.mxu0 0.0
    %865 = vmatpush1.msra.mxu0 0.0
    %866 = vmatprep.subr.mxu0 0.0
    %867 = vmatpush1.msra.mxu0 0.0
    %868 = vmatprep.subr.mxu0 0.0
    %869 = vmatpush1.msra.mxu0 0.0
    %870 = vmatprep.subr.mxu0 0.0
    %871 = vmatpush1.msra.mxu0 0.0
    %872 = vmatprep.subr.mxu0 0.0
    %873 = vmatpush1.msra.mxu0 0.0
    %874 = vmatprep.subr.mxu0 0.0
    %875 = vmatpush1.msra.mxu0 0.0
    %876 = vmatprep.subr.mxu0 0.0
    %877 = vmatpush1.msra.mxu0 0.0
    %878 = vmatprep.subr.mxu0 0.0
    %879 = vmatpush1.msra.mxu0 0.0
    %880 = vmatprep.mubr.f32.mxu0 0.0
    %881 = vmatmul.mubr.f32.gmra.mrb[0].mxu0 %v104
    %v882 = vpop.f32.mrb[0].mxu0
    %v883 = vadd.f32 0.0, %v882
    %v884 = vpop.f32.mrb[0].mxu0
    %885 = vdwg.mxu0
    %v886 = vmul.f32 %v883, %v65
    %v888 = vsel %vm177, %v883, 0
    %890 = vmatprep.subr.mxu0 0.0
    %891 = vmatpush1.msra.mxu0 %v67
    %892 = vmatprep.subr.mxu0 0.0
    %893 = vmatpush1.msra.mxu0 %v68
    %894 = vmatprep.subr.mxu0 0.0
    %895 = vmatpush1.msra.mxu0 %v69
    %896 = vmatprep.subr.mxu0 0.0
    %897 = vmatpush1.msra.mxu0 %v70
    %898 = vmatprep.subr.mxu0 0.0
    %899 = vmatpush1.msra.mxu0 0.0
    %900 = vmatprep.subr.mxu0 0.0
    %901 = vmatpush1.msra.mxu0 0.0
    %902 = vmatprep.subr.mxu0 0.0
    %903 = vmatpush1.msra.mxu0 0.0
    %904 = vmatprep.subr.mxu0 0.0
    %905 = vmatpush1.msra.mxu0 0.0
    %906 = vmatprep.subr.mxu0 0.0
    %907 = vmatpush1.msra.mxu0 0.0
    %908 = vmatprep.subr.mxu0 0.0
    %909 = vmatpush1.msra.mxu0 0.0
    %910 = vmatprep.subr.mxu0 0.0
    %911 = vmatpush1.msra.mxu0 0.0
    %912 = vmatprep.subr.mxu0 0.0
    %913 = vmatpush1.msra.mxu0 0.0
    %914 = vmatprep.subr.mxu0 0.0
    %915 = vmatpush1.msra.mxu0 0.0
    %916 = vmatprep.subr.mxu0 0.0
    %917 = vmatpush1.msra.mxu0 0.0
    %918 = vmatprep.subr.mxu0 0.0
    %919 = vmatpush1.msra.mxu0 0.0
    %920 = vmatprep.subr.mxu0 0.0
    %921 = vmatpush1.msra.mxu0 0.0
    %922 = vmatprep.subr.mxu0 0.0
    %923 = vmatpush1.msra.mxu0 0.0
    %924 = vmatprep.subr.mxu0 0.0
    %925 = vmatpush1.msra.mxu0 0.0
    %926 = vmatprep.subr.mxu0 0.0
    %927 = vmatpush1.msra.mxu0 0.0
    %928 = vmatprep.subr.mxu0 0.0
    %929 = vmatpush1.msra.mxu0 0.0
    %930 = vmatprep.subr.mxu0 0.0
    %931 = vmatpush1.msra.mxu0 0.0
    %932 = vmatprep.subr.mxu0 0.0
    %933 = vmatpush1.msra.mxu0 0.0
    %934 = vmatprep.subr.mxu0 0.0
    %935 = vmatpush1.msra.mxu0 0.0
    %936 = vmatprep.subr.mxu0 0.0
    %937 = vmatpush1.msra.mxu0 0.0
    %938 = vmatprep.subr.mxu0 0.0
    %939 = vmatpush1.msra.mxu0 0.0
    %940 = vmatprep.subr.mxu0 0.0
    %941 = vmatpush1.msra.mxu0 0.0
    %942 = vmatprep.subr.mxu0 0.0
    %943 = vmatpush1.msra.mxu0 0.0
    %944 = vmatprep.subr.mxu0 0.0
    %945 = vmatpush1.msra.mxu0 0.0
    %946 = vmatprep.subr.mxu0 0.0
    %947 = vmatpush1.msra.mxu0 0.0
    %948 = vmatprep.subr.mxu0 0.0
    %949 = vmatpush1.msra.mxu0 0.0
    %950 = vmatprep.subr.mxu0 0.0
    %951 = vmatpush1.msra.mxu0 0.0
    %952 = vmatprep.subr.mxu0 0.0
    %953 = vmatpush1.msra.mxu0 0.0
    %954 = vmatprep.mubr.f32.mxu0 0.0
    %955 = vmatmul.mubr.f32.gmra.mrb[0].mxu0 %v888
    %v956 = vpop.f32.mrb[0].mxu0
    %v957 = vadd.f32 0.0, %v956
    %v958 = vpop.f32.mrb[0].mxu0
    %959 = vdwg.mxu0
    %v960 = vmul.f32 %v957, %v66
    %v961 = vadd.f32 %v886, %v960
    %s962 = scalar_lea.vmem %s7, 64
    %v963 = vld [vmem:[%s962] sm:$0xff]
    %v964 = vld [vmem:[%s962 + $0x8] sm:$0xff]
    %v965 = vld [vmem:[%s962 + $0x10] sm:$0xff]
    %v966 = vld [vmem:[%s962 + $0x18] sm:$0xff]
    %v967 = vld [vmem:[%s962 + $0x20] sm:$0xff]
    %v968 = vld [vmem:[%s962 + $0x28] sm:$0xff]
    %v969 = vld [vmem:[%s962 + $0x30] sm:$0xff]
    %v970 = vld [vmem:[%s962 + $0x38] sm:$0xff]
    %971 = vmatprep.subr.mxu0 0.0
    %972 = vmatpush1.msra.mxu0 %v963
    %973 = vmatprep.subr.mxu0 0.0
    %974 = vmatpush1.msra.mxu0 %v964
    %975 = vmatprep.subr.mxu0 0.0
    %976 = vmatpush1.msra.mxu0 %v965
    %977 = vmatprep.subr.mxu0 0.0
    %978 = vmatpush1.msra.mxu0 %v966
    %979 = vmatprep.subr.mxu0 0.0
    %980 = vmatpush1.msra.mxu0 %v967
    %981 = vmatprep.subr.mxu0 0.0
    %982 = vmatpush1.msra.mxu0 %v968
    %983 = vmatprep.subr.mxu0 0.0
    %984 = vmatpush1.msra.mxu0 %v969
    %985 = vmatprep.subr.mxu0 0.0
    %986 = vmatpush1.msra.mxu0 %v970
    %987 = vmatprep.subr.mxu0 0.0
    %988 = vmatpush1.msra.mxu0 0.0
    %989 = vmatprep.subr.mxu0 0.0
    %990 = vmatpush1.msra.mxu0 0.0
    %991 = vmatprep.subr.mxu0 0.0
    %992 = vmatpush1.msra.mxu0 0.0
    %993 = vmatprep.subr.mxu0 0.0
    %994 = vmatpush1.msra.mxu0 0.0
    %995 = vmatprep.subr.mxu0 0.0
    %996 = vmatpush1.msra.mxu0 0.0
    %997 = vmatprep.subr.mxu0 0.0
    %998 = vmatpush1.msra.mxu0 0.0
    %999 = vmatprep.subr.mxu0 0.0
    %1000 = vmatpush1.msra.mxu0 0.0
    %1001 = vmatprep.subr.mxu0 0.0
    %1002 = vmatpush1.msra.mxu0 0.0
    %1003 = vmatprep.subr.mxu0 0.0
    %1004 = vmatpush1.msra.mxu0 0.0
    %1005 = vmatprep.subr.mxu0 0.0
    %1006 = vmatpush1.msra.mxu0 0.0
    %1007 = vmatprep.subr.mxu0 0.0
    %1008 = vmatpush1.msra.mxu0 0.0
    %1009 = vmatprep.subr.mxu0 0.0
    %1010 = vmatpush1.msra.mxu0 0.0
    %1011 = vmatprep.subr.mxu0 0.0
    %1012 = vmatpush1.msra.mxu0 0.0
    %1013 = vmatprep.subr.mxu0 0.0
    %1014 = vmatpush1.msra.mxu0 0.0
    %1015 = vmatprep.subr.mxu0 0.0
    %1016 = vmatpush1.msra.mxu0 0.0
    %1017 = vmatprep.subr.mxu0 0.0
    %1018 = vmatpush1.msra.mxu0 0.0
    %1019 = vmatprep.subr.mxu0 0.0
    %1020 = vmatpush1.msra.mxu0 0.0
    %1021 = vmatprep.subr.mxu0 0.0
    %1022 = vmatpush1.msra.mxu0 0.0
    %1023 = vmatprep.subr.mxu0 0.0
    %1024 = vmatpush1.msra.mxu0 0.0
    %1025 = vmatprep.subr.mxu0 0.0
    %1026 = vmatpush1.msra.mxu0 0.0
    %1027 = vmatprep.subr.mxu0 0.0
    %1028 = vmatpush1.msra.mxu0 0.0
    %1029 = vmatprep.subr.mxu0 0.0
    %1030 = vmatpush1.msra.mxu0 0.0
    %1031 = vmatprep.subr.mxu0 0.0
    %1032 = vmatpush1.msra.mxu0 0.0
    %1033 = vmatprep.subr.mxu0 0.0
    %1034 = vmatpush1.msra.mxu0 0.0
    %1035 = vmatprep.mubr.f32.mxu0 0.0
    %1036 = vmatmul.mubr.f32.gmra.mrb[0].mxu0 %v104
    %v1037 = vpop.f32.mrb[0].mxu0
    %v1038 = vadd.f32 0.0, %v1037
    %v1039 = vpop.f32.mrb[0].mxu0
    %1040 = vdwg.mxu0
    %v1042 = vsel %vm177, %v806, 0
    %v1045 = vsel %vm177, %v961, 0
    %1047 = vmatprep.subr.mxu0 0.0
    %1048 = vmatpush1.xpose.msra.mxu0 %v1045
    %1049 = vmatprep.subr.mxu0 0.0
    %1050 = vmatpush1.xpose.msra.mxu0 0.0
    %1051 = vmatprep.subr.mxu0 0.0
    %1052 = vmatpush1.xpose.msra.mxu0 0.0
    %1053 = vmatprep.subr.mxu0 0.0
    %1054 = vmatpush1.xpose.msra.mxu0 0.0
    %1055 = vmatprep.subr.mxu0 0.0
    %1056 = vmatpush1.xpose.msra.mxu0 0.0
    %1057 = vmatprep.subr.mxu0 0.0
    %1058 = vmatpush1.xpose.msra.mxu0 0.0
    %1059 = vmatprep.subr.mxu0 0.0
    %1060 = vmatpush1.xpose.msra.mxu0 0.0
    %1061 = vmatprep.subr.mxu0 0.0
    %1062 = vmatpush1.xpose.msra.mxu0 0.0
    %1063 = vmatprep.subr.mxu0 0.0
    %1064 = vmatpush1.xpose.msra.mxu0 0.0
    %1065 = vmatprep.subr.mxu0 0.0
    %1066 = vmatpush1.xpose.msra.mxu0 0.0
    %1067 = vmatprep.subr.mxu0 0.0
    %1068 = vmatpush1.xpose.msra.mxu0 0.0
    %1069 = vmatprep.subr.mxu0 0.0
    %1070 = vmatpush1.xpose.msra.mxu0 0.0
    %1071 = vmatprep.subr.mxu0 0.0
    %1072 = vmatpush1.xpose.msra.mxu0 0.0
    %1073 = vmatprep.subr.mxu0 0.0
    %1074 = vmatpush1.xpose.msra.mxu0 0.0
    %1075 = vmatprep.subr.mxu0 0.0
    %1076 = vmatpush1.xpose.msra.mxu0 0.0
    %1077 = vmatprep.subr.mxu0 0.0
    %1078 = vmatpush1.xpose.msra.mxu0 0.0
    %1079 = vmatprep.subr.mxu0 0.0
    %1080 = vmatpush1.xpose.msra.mxu0 0.0
    %1081 = vmatprep.subr.mxu0 0.0
    %1082 = vmatpush1.xpose.msra.mxu0 0.0
    %1083 = vmatprep.subr.mxu0 0.0
    %1084 = vmatpush1.xpose.msra.mxu0 0.0
    %1085 = vmatprep.subr.mxu0 0.0
    %1086 = vmatpush1.xpose.msra.mxu0 0.0
    %1087 = vmatprep.subr.mxu0 0.0
    %1088 = vmatpush1.xpose.msra.mxu0 0.0
    %1089 = vmatprep.subr.mxu0 0.0
    %1090 = vmatpush1.xpose.msra.mxu0 0.0
    %1091 = vmatprep.subr.mxu0 0.0
    %1092 = vmatpush1.xpose.msra.mxu0 0.0
    %1093 = vmatprep.subr.mxu0 0.0
    %1094 = vmatpush1.xpose.msra.mxu0 0.0
    %1095 = vmatprep.subr.mxu0 0.0
    %1096 = vmatpush1.xpose.msra.mxu0 0.0
    %1097 = vmatprep.subr.mxu0 0.0
    %1098 = vmatpush1.xpose.msra.mxu0 0.0
    %1099 = vmatprep.subr.mxu0 0.0
    %1100 = vmatpush1.xpose.msra.mxu0 0.0
    %1101 = vmatprep.subr.mxu0 0.0
    %1102 = vmatpush1.xpose.msra.mxu0 0.0
    %1103 = vmatprep.subr.mxu0 0.0
    %1104 = vmatpush1.xpose.msra.mxu0 0.0
    %1105 = vmatprep.subr.mxu0 0.0
    %1106 = vmatpush1.xpose.msra.mxu0 0.0
    %1107 = vmatprep.subr.mxu0 0.0
    %1108 = vmatpush1.xpose.msra.mxu0 0.0
    %1109 = vmatprep.subr.mxu0 0.0
    %1110 = vmatpush1.xpose.msra.mxu0 0.0
    %1111 = vmatprep.mubr.f32.mxu0 0.0
    %1112 = vmatmul.mubr.f32.gmra.mrb[0].mxu0 %v1042
    %v1113 = vpop.f32.mrb[0].mxu0
    %v1114 = vadd.f32 0.0, %v1113
    %v1115 = vpop.f32.mrb[0].mxu0
    %1116 = vdwg.mxu0
    %v1117 = vmul.f32 %v1114, 0.17677669
    %v1118 = vadd.f32 %v1117, %v76
    %v1119 = vsel %vm563, %v1118, -inf
    %1120 = vmax.xlane.f32.xlu0 %v1119
    %v1121 = vpop.xlane.xlu0 %1120
    %v1122 = vsub.f32 %v1118, %v1121
    %v1123 = vmul.f32 %v1122, 1.442695
    %v1124 = vpow.pop %v1123
    %v1125 = vsel %vm563, %v1124, 0.0
    %1126 = vadd.xlane.f32.xlu0 %v1125
    %v1127 = vpop.xlane.xlu0 %1126
    %v1128 = vrcp.pop %v1127
    %v1129 = vmul.f32 %v1124, %v1128
    %v1131 = vsel %vm563, %v1129, 0
    %1133 = vmatprep.subr.mxu0 0.0
    %1134 = vmatpush1.msra.mxu0 %v1038
    %1135 = vmatprep.subr.mxu0 0.0
    %1136 = vmatpush1.msra.mxu0 0.0
    %1137 = vmatprep.subr.mxu0 0.0
    %1138 = vmatpush1.msra.mxu0 0.0
    %1139 = vmatprep.subr.mxu0 0.0
    %1140 = vmatpush1.msra.mxu0 0.0
    %1141 = vmatprep.subr.mxu0 0.0
    %1142 = vmatpush1.msra.mxu0 0.0
    %1143 = vmatprep.subr.mxu0 0.0
    %1144 = vmatpush1.msra.mxu0 0.0
    %1145 = vmatprep.subr.mxu0 0.0
    %1146 = vmatpush1.msra.mxu0 0.0
    %1147 = vmatprep.subr.mxu0 0.0
    %1148 = vmatpush1.msra.mxu0 0.0
    %1149 = vmatprep.subr.mxu0 0.0
    %1150 = vmatpush1.msra.mxu0 0.0
    %1151 = vmatprep.subr.mxu0 0.0
    %1152 = vmatpush1.msra.mxu0 0.0
    %1153 = vmatprep.subr.mxu0 0.0
    %1154 = vmatpush1.msra.mxu0 0.0
    %1155 = vmatprep.subr.mxu0 0.0
    %1156 = vmatpush1.msra.mxu0 0.0
    %1157 = vmatprep.subr.mxu0 0.0
    %1158 = vmatpush1.msra.mxu0 0.0
    %1159 = vmatprep.subr.mxu0 0.0
    %1160 = vmatpush1.msra.mxu0 0.0
    %1161 = vmatprep.subr.mxu0 0.0
    %1162 = vmatpush1.msra.mxu0 0.0
    %1163 = vmatprep.subr.mxu0 0.0
    %1164 = vmatpush1.msra.mxu0 0.0
    %1165 = vmatprep.subr.mxu0 0.0
    %1166 = vmatpush1.msra.mxu0 0.0
    %1167 = vmatprep.subr.mxu0 0.0
    %1168 = vmatpush1.msra.mxu0 0.0
    %1169 = vmatprep.subr.mxu0 0.0
    %1170 = vmatpush1.msra.mxu0 0.0
    %1171 = vmatprep.subr.mxu0 0.0
    %1172 = vmatpush1.msra.mxu0 0.0
    %1173 = vmatprep.subr.mxu0 0.0
    %1174 = vmatpush1.msra.mxu0 0.0
    %1175 = vmatprep.subr.mxu0 0.0
    %1176 = vmatpush1.msra.mxu0 0.0
    %1177 = vmatprep.subr.mxu0 0.0
    %1178 = vmatpush1.msra.mxu0 0.0
    %1179 = vmatprep.subr.mxu0 0.0
    %1180 = vmatpush1.msra.mxu0 0.0
    %1181 = vmatprep.subr.mxu0 0.0
    %1182 = vmatpush1.msra.mxu0 0.0
    %1183 = vmatprep.subr.mxu0 0.0
    %1184 = vmatpush1.msra.mxu0 0.0
    %1185 = vmatprep.subr.mxu0 0.0
    %1186 = vmatpush1.msra.mxu0 0.0
    %1187 = vmatprep.subr.mxu0 0.0
    %1188 = vmatpush1.msra.mxu0 0.0
    %1189 = vmatprep.subr.mxu0 0.0
    %1190 = vmatpush1.msra.mxu0 0.0
    %1191 = vmatprep.subr.mxu0 0.0
    %1192 = vmatpush1.msra.mxu0 0.0
    %1193 = vmatprep.subr.mxu0 0.0
    %1194 = vmatpush1.msra.mxu0 0.0
    %1195 = vmatprep.subr.mxu0 0.0
    %1196 = vmatpush1.msra.mxu0 0.0
    %1197 = vmatprep.mubr.f32.mxu0 0.0
    %1198 = vmatmul.mubr.f32.gmra.mrb[0].mxu0 %v1131
    %v1199 = vpop.f32.mrb[0].mxu0
    %v1200 = vadd.f32 0.0, %v1199
    %v1201 = vpop.f32.mrb[0].mxu0
    %1202 = vdwg.mxu0
    %s1203 = scalar_lea.vmem %s8, 32
    %v1204 = vld [vmem:[%s1203] sm:$0xff]
    %v1205 = vld [vmem:[%s1203 + $0x8] sm:$0xff]
    %v1206 = vld [vmem:[%s1203 + $0x10] sm:$0xff]
    %v1207 = vld [vmem:[%s1203 + $0x18] sm:$0xff]
    %v1209 = vsel %vm177, %v1200, 0
    %1211 = vmatprep.subr.mxu0 0.0
    %1212 = vmatpush1.msra.mxu0 %v1204
    %1213 = vmatprep.subr.mxu0 0.0
    %1214 = vmatpush1.msra.mxu0 %v1205
    %1215 = vmatprep.subr.mxu0 0.0
    %1216 = vmatpush1.msra.mxu0 %v1206
    %1217 = vmatprep.subr.mxu0 0.0
    %1218 = vmatpush1.msra.mxu0 %v1207
    %1219 = vmatprep.subr.mxu0 0.0
    %1220 = vmatpush1.msra.mxu0 0.0
    %1221 = vmatprep.subr.mxu0 0.0
    %1222 = vmatpush1.msra.mxu0 0.0
    %1223 = vmatprep.subr.mxu0 0.0
    %1224 = vmatpush1.msra.mxu0 0.0
    %1225 = vmatprep.subr.mxu0 0.0
    %1226 = vmatpush1.msra.mxu0 0.0
    %1227 = vmatprep.subr.mxu0 0.0
    %1228 = vmatpush1.msra.mxu0 0.0
    %1229 = vmatprep.subr.mxu0 0.0
    %1230 = vmatpush1.msra.mxu0 0.0
    %1231 = vmatprep.subr.mxu0 0.0
    %1232 = vmatpush1.msra.mxu0 0.0
    %1233 = vmatprep.subr.mxu0 0.0
    %1234 = vmatpush1.msra.mxu0 0.0
    %1235 = vmatprep.subr.mxu0 0.0
    %1236 = vmatpush1.msra.mxu0 0.0
    %1237 = vmatprep.subr.mxu0 0.0
    %1238 = vmatpush1.msra.mxu0 0.0
    %1239 = vmatprep.subr.mxu0 0.0
    %1240 = vmatpush1.msra.mxu0 0.0
    %1241 = vmatprep.subr.mxu0 0.0
    %1242 = vmatpush1.msra.mxu0 0.0
    %1243 = vmatprep.subr.mxu0 0.0
    %1244 = vmatpush1.msra.mxu0 0.0
    %1245 = vmatprep.subr.mxu0 0.0
    %1246 = vmatpush1.msra.mxu0 0.0
    %1247 = vmatprep.subr.mxu0 0.0
    %1248 = vmatpush1.msra.mxu0 0.0
    %1249 = vmatprep.subr.mxu0 0.0
    %1250 = vmatpush1.msra.mxu0 0.0
    %1251 = vmatprep.subr.mxu0 0.0
    %1252 = vmatpush1.msra.mxu0 0.0
    %1253 = vmatprep.subr.mxu0 0.0
    %1254 = vmatpush1.msra.mxu0 0.0
    %1255 = vmatprep.subr.mxu0 0.0
    %1256 = vmatpush1.msra.mxu0 0.0
    %1257 = vmatprep.subr.mxu0 0.0
    %1258 = vmatpush1.msra.mxu0 0.0
    %1259 = vmatprep.subr.mxu0 0.0
    %1260 = vmatpush1.msra.mxu0 0.0
    %1261 = vmatprep.subr.mxu0 0.0
    %1262 = vmatpush1.msra.mxu0 0.0
    %1263 = vmatprep.subr.mxu0 0.0
    %1264 = vmatpush1.msra.mxu0 0.0
    %1265 = vmatprep.subr.mxu0 0.0
    %1266 = vmatpush1.msra.mxu0 0.0
    %1267 = vmatprep.subr.mxu0 0.0
    %1268 = vmatpush1.msra.mxu0 0.0
    %1269 = vmatprep.subr.mxu0 0.0
    %1270 = vmatpush1.msra.mxu0 0.0
    %1271 = vmatprep.subr.mxu0 0.0
    %1272 = vmatpush1.msra.mxu0 0.0
    %1273 = vmatprep.subr.mxu0 0.0
    %1274 = vmatpush1.msra.mxu0 0.0
    %1275 = vmatprep.mubr.f32.mxu0 0.0
    %1276 = vmatmul.mubr.f32.gmra.mrb[0].mxu0 %v1209
    %v1277 = vpop.f32.mrb[0].mxu0
    %v1278 = vadd.f32 0.0, %v1277
    %v1279 = vpop.f32.mrb[0].mxu0
    %1280 = vdwg.mxu0
    %v1282 = vsel %vm177, %v645, 0
    %1284 = vmatprep.subr.mxu0 0.0
    %1285 = vmatpush1.msra.mxu0 %v648
    %1286 = vmatprep.subr.mxu0 0.0
    %1287 = vmatpush1.msra.mxu0 %v649
    %1288 = vmatprep.subr.mxu0 0.0
    %1289 = vmatpush1.msra.mxu0 %v650
    %1290 = vmatprep.subr.mxu0 0.0
    %1291 = vmatpush1.msra.mxu0 %v651
    %1292 = vmatprep.subr.mxu0 0.0
    %1293 = vmatpush1.msra.mxu0 0.0
    %1294 = vmatprep.subr.mxu0 0.0
    %1295 = vmatpush1.msra.mxu0 0.0
    %1296 = vmatprep.subr.mxu0 0.0
    %1297 = vmatpush1.msra.mxu0 0.0
    %1298 = vmatprep.subr.mxu0 0.0
    %1299 = vmatpush1.msra.mxu0 0.0
    %1300 = vmatprep.subr.mxu0 0.0
    %1301 = vmatpush1.msra.mxu0 0.0
    %1302 = vmatprep.subr.mxu0 0.0
    %1303 = vmatpush1.msra.mxu0 0.0
    %1304 = vmatprep.subr.mxu0 0.0
    %1305 = vmatpush1.msra.mxu0 0.0
    %1306 = vmatprep.subr.mxu0 0.0
    %1307 = vmatpush1.msra.mxu0 0.0
    %1308 = vmatprep.subr.mxu0 0.0
    %1309 = vmatpush1.msra.mxu0 0.0
    %1310 = vmatprep.subr.mxu0 0.0
    %1311 = vmatpush1.msra.mxu0 0.0
    %1312 = vmatprep.subr.mxu0 0.0
    %1313 = vmatpush1.msra.mxu0 0.0
    %1314 = vmatprep.subr.mxu0 0.0
    %1315 = vmatpush1.msra.mxu0 0.0
    %1316 = vmatprep.subr.mxu0 0.0
    %1317 = vmatpush1.msra.mxu0 0.0
    %1318 = vmatprep.subr.mxu0 0.0
    %1319 = vmatpush1.msra.mxu0 0.0
    %1320 = vmatprep.subr.mxu0 0.0
    %1321 = vmatpush1.msra.mxu0 0.0
    %1322 = vmatprep.subr.mxu0 0.0
    %1323 = vmatpush1.msra.mxu0 0.0
    %1324 = vmatprep.subr.mxu0 0.0
    %1325 = vmatpush1.msra.mxu0 0.0
    %1326 = vmatprep.subr.mxu0 0.0
    %1327 = vmatpush1.msra.mxu0 0.0
    %1328 = vmatprep.subr.mxu0 0.0
    %1329 = vmatpush1.msra.mxu0 0.0
    %1330 = vmatprep.subr.mxu0 0.0
    %1331 = vmatpush1.msra.mxu0 0.0
    %1332 = vmatprep.subr.mxu0 0.0
    %1333 = vmatpush1.msra.mxu0 0.0
    %1334 = vmatprep.subr.mxu0 0.0
    %1335 = vmatpush1.msra.mxu0 0.0
    %1336 = vmatprep.subr.mxu0 0.0
    %1337 = vmatpush1.msra.mxu0 0.0
    %1338 = vmatprep.subr.mxu0 0.0
    %1339 = vmatpush1.msra.mxu0 0.0
    %1340 = vmatprep.subr.mxu0 0.0
    %1341 = vmatpush1.msra.mxu0 0.0
    %1342 = vmatprep.subr.mxu0 0.0
    %1343 = vmatpush1.msra.mxu0 0.0
    %1344 = vmatprep.subr.mxu0 0.0
    %1345 = vmatpush1.msra.mxu0 0.0
    %1346 = vmatprep.subr.mxu0 0.0
    %1347 = vmatpush1.msra.mxu0 0.0
    %1348 = vmatprep.mubr.f32.mxu0 0.0
    %1349 = vmatmul.mubr.f32.gmra.mrb[0].mxu0 %v1282
    %v1350 = vpop.f32.mrb[0].mxu0
    %v1351 = vadd.f32 %v1278, %v1350
    %v1352 = vpop.f32.mrb[0].mxu0
    %1353 = vdwg.mxu0
    %v1354 = vadd.f32 %v63, %v1351
    %v1355 = vld [vmem:[%s3] sm:$0x1]
    %v1356 = vmul.f32 %v64, %v64
    %v1357 = vsel %vm79, %v1356, 0.0
    %1358 = vadd.xlane.f32.xlu0 %v1357
    %v1359 = vpop.xlane.xlu0 %1358
    %v1360 = vmul.f32 %v1359, %v83
    %v1361 = vadd.f32 %v1360, 1e-06
    %v1362 = vrsqrt.pop %v1361
    %v1363 = vmul.f32 %v64, %v1362
    %v1365 = vlaneseq
    %v1366 = vshrl.u32 %v1365, 7
    %v1367 = vsub.s32 0, %v1366
    %v1368 = vrot.slane %v1355, %v1367
    %v1370 = vmul.f32 %v1363, %v1368
    %v1372 = vsel %vm79, %v1370, 0
    %1374 = vmatprep.subr.mxu0 0.0
    %1375 = vmatpush1.msra.mxu0 %v95
    %1376 = vmatprep.subr.mxu0 0.0
    %1377 = vmatpush1.msra.mxu0 %v96
    %1378 = vmatprep.subr.mxu0 0.0
    %1379 = vmatpush1.msra.mxu0 %v97
    %1380 = vmatprep.subr.mxu0 0.0
    %1381 = vmatpush1.msra.mxu0 %v98
    %1382 = vmatprep.subr.mxu0 0.0
    %1383 = vmatpush1.msra.mxu0 %v99
    %1384 = vmatprep.subr.mxu0 0.0
    %1385 = vmatpush1.msra.mxu0 %v100
    %1386 = vmatprep.subr.mxu0 0.0
    %1387 = vmatpush1.msra.mxu0 %v101
    %1388 = vmatprep.subr.mxu0 0.0
    %1389 = vmatpush1.msra.mxu0 %v102
    %1390 = vmatprep.subr.mxu0 0.0
    %1391 = vmatpush1.msra.mxu0 0.0
    %1392 = vmatprep.subr.mxu0 0.0
    %1393 = vmatpush1.msra.mxu0 0.0
    %1394 = vmatprep.subr.mxu0 0.0
    %1395 = vmatpush1.msra.mxu0 0.0
    %1396 = vmatprep.subr.mxu0 0.0
    %1397 = vmatpush1.msra.mxu0 0.0
    %1398 = vmatprep.subr.mxu0 0.0
    %1399 = vmatpush1.msra.mxu0 0.0
    %1400 = vmatprep.subr.mxu0 0.0
    %1401 = vmatpush1.msra.mxu0 0.0
    %1402 = vmatprep.subr.mxu0 0.0
    %1403 = vmatpush1.msra.mxu0 0.0
    %1404 = vmatprep.subr.mxu0 0.0
    %1405 = vmatpush1.msra.mxu0 0.0
    %1406 = vmatprep.subr.mxu0 0.0
    %1407 = vmatpush1.msra.mxu0 0.0
    %1408 = vmatprep.subr.mxu0 0.0
    %1409 = vmatpush1.msra.mxu0 0.0
    %1410 = vmatprep.subr.mxu0 0.0
    %1411 = vmatpush1.msra.mxu0 0.0
    %1412 = vmatprep.subr.mxu0 0.0
    %1413 = vmatpush1.msra.mxu0 0.0
    %1414 = vmatprep.subr.mxu0 0.0
    %1415 = vmatpush1.msra.mxu0 0.0
    %1416 = vmatprep.subr.mxu0 0.0
    %1417 = vmatpush1.msra.mxu0 0.0
    %1418 = vmatprep.subr.mxu0 0.0
    %1419 = vmatpush1.msra.mxu0 0.0
    %1420 = vmatprep.subr.mxu0 0.0
    %1421 = vmatpush1.msra.mxu0 0.0
    %1422 = vmatprep.subr.mxu0 0.0
    %1423 = vmatpush1.msra.mxu0 0.0
    %1424 = vmatprep.subr.mxu0 0.0
    %1425 = vmatpush1.msra.mxu0 0.0
    %1426 = vmatprep.subr.mxu0 0.0
    %1427 = vmatpush1.msra.mxu0 0.0
    %1428 = vmatprep.subr.mxu0 0.0
    %1429 = vmatpush1.msra.mxu0 0.0
    %1430 = vmatprep.subr.mxu0 0.0
    %1431 = vmatpush1.msra.mxu0 0.0
    %1432 = vmatprep.subr.mxu0 0.0
    %1433 = vmatpush1.msra.mxu0 0.0
    %1434 = vmatprep.subr.mxu0 0.0
    %1435 = vmatpush1.msra.mxu0 0.0
    %1436 = vmatprep.subr.mxu0 0.0
    %1437 = vmatpush1.msra.mxu0 0.0
    %1438 = vmatprep.mubr.f32.mxu0 0.0
    %1439 = vmatmul.mubr.f32.gmra.mrb[0].mxu0 %v1372
    %v1440 = vpop.f32.mrb[0].mxu0
    %v1441 = vadd.f32 0.0, %v1440
    %v1442 = vpop.f32.mrb[0].mxu0
    %1443 = vdwg.mxu0
    %v1444 = vmul.f32 %v1441, %v65
    %v1446 = vsel %vm177, %v1441, 0
    %1448 = vmatprep.subr.mxu0 0.0
    %1449 = vmatpush1.msra.mxu0 %v67
    %1450 = vmatprep.subr.mxu0 0.0
    %1451 = vmatpush1.msra.mxu0 %v68
    %1452 = vmatprep.subr.mxu0 0.0
    %1453 = vmatpush1.msra.mxu0 %v69
    %1454 = vmatprep.subr.mxu0 0.0
    %1455 = vmatpush1.msra.mxu0 %v70
    %1456 = vmatprep.subr.mxu0 0.0
    %1457 = vmatpush1.msra.mxu0 0.0
    %1458 = vmatprep.subr.mxu0 0.0
    %1459 = vmatpush1.msra.mxu0 0.0
    %1460 = vmatprep.subr.mxu0 0.0
    %1461 = vmatpush1.msra.mxu0 0.0
    %1462 = vmatprep.subr.mxu0 0.0
    %1463 = vmatpush1.msra.mxu0 0.0
    %1464 = vmatprep.subr.mxu0 0.0
    %1465 = vmatpush1.msra.mxu0 0.0
    %1466 = vmatprep.subr.mxu0 0.0
    %1467 = vmatpush1.msra.mxu0 0.0
    %1468 = vmatprep.subr.mxu0 0.0
    %1469 = vmatpush1.msra.mxu0 0.0
    %1470 = vmatprep.subr.mxu0 0.0
    %1471 = vmatpush1.msra.mxu0 0.0
    %1472 = vmatprep.subr.mxu0 0.0
    %1473 = vmatpush1.msra.mxu0 0.0
    %1474 = vmatprep.subr.mxu0 0.0
    %1475 = vmatpush1.msra.mxu0 0.0
    %1476 = vmatprep.subr.mxu0 0.0
    %1477 = vmatpush1.msra.mxu0 0.0
    %1478 = vmatprep.subr.mxu0 0.0
    %1479 = vmatpush1.msra.mxu0 0.0
    %1480 = vmatprep.subr.mxu0 0.0
    %1481 = vmatpush1.msra.mxu0 0.0
    %1482 = vmatprep.subr.mxu0 0.0
    %1483 = vmatpush1.msra.mxu0 0.0
    %1484 = vmatprep.subr.mxu0 0.0
    %1485 = vmatpush1.msra.mxu0 0.0
    %1486 = vmatprep.subr.mxu0 0.0
    %1487 = vmatpush1.msra.mxu0 0.0
    %1488 = vmatprep.subr.mxu0 0.0
    %1489 = vmatpush1.msra.mxu0 0.0
    %1490 = vmatprep.subr.mxu0 0.0
    %1491 = vmatpush1.msra.mxu0 0.0
    %1492 = vmatprep.subr.mxu0 0.0
    %1493 = vmatpush1.msra.mxu0 0.0
    %1494 = vmatprep.subr.mxu0 0.0
    %1495 = vmatpush1.msra.mxu0 0.0
    %1496 = vmatprep.subr.mxu0 0.0
    %1497 = vmatpush1.msra.mxu0 0.0
    %1498 = vmatprep.subr.mxu0 0.0
    %1499 = vmatpush1.msra.mxu0 0.0
    %1500 = vmatprep.subr.mxu0 0.0
    %1501 = vmatpush1.msra.mxu0 0.0
    %1502 = vmatprep.subr.mxu0 0.0
    %1503 = vmatpush1.msra.mxu0 0.0
    %1504 = vmatprep.subr.mxu0 0.0
    %1505 = vmatpush1.msra.mxu0 0.0
    %1506 = vmatprep.subr.mxu0 0.0
    %1507 = vmatpush1.msra.mxu0 0.0
    %1508 = vmatprep.subr.mxu0 0.0
    %1509 = vmatpush1.msra.mxu0 0.0
    %1510 = vmatprep.subr.mxu0 0.0
    %1511 = vmatpush1.msra.mxu0 0.0
    %1512 = vmatprep.mubr.f32.mxu0 0.0
    %1513 = vmatmul.mubr.f32.gmra.mrb[0].mxu0 %v1446
    %v1514 = vpop.f32.mrb[0].mxu0
    %v1515 = vadd.f32 0.0, %v1514
    %v1516 = vpop.f32.mrb[0].mxu0
    %1517 = vdwg.mxu0
    %v1518 = vmul.f32 %v1515, %v66
    %v1519 = vadd.f32 %v1444, %v1518
    %1520 = vmatprep.subr.mxu0 0.0
    %1521 = vmatpush1.msra.mxu0 %v253
    %1522 = vmatprep.subr.mxu0 0.0
    %1523 = vmatpush1.msra.mxu0 %v254
    %1524 = vmatprep.subr.mxu0 0.0
    %1525 = vmatpush1.msra.mxu0 %v255
    %1526 = vmatprep.subr.mxu0 0.0
    %1527 = vmatpush1.msra.mxu0 %v256
    %1528 = vmatprep.subr.mxu0 0.0
    %1529 = vmatpush1.msra.mxu0 %v257
    %1530 = vmatprep.subr.mxu0 0.0
    %1531 = vmatpush1.msra.mxu0 %v258
    %1532 = vmatprep.subr.mxu0 0.0
    %1533 = vmatpush1.msra.mxu0 %v259
    %1534 = vmatprep.subr.mxu0 0.0
    %1535 = vmatpush1.msra.mxu0 %v260
    %1536 = vmatprep.subr.mxu0 0.0
    %1537 = vmatpush1.msra.mxu0 0.0
    %1538 = vmatprep.subr.mxu0 0.0
    %1539 = vmatpush1.msra.mxu0 0.0
    %1540 = vmatprep.subr.mxu0 0.0
    %1541 = vmatpush1.msra.mxu0 0.0
    %1542 = vmatprep.subr.mxu0 0.0
    %1543 = vmatpush1.msra.mxu0 0.0
    %1544 = vmatprep.subr.mxu0 0.0
    %1545 = vmatpush1.msra.mxu0 0.0
    %1546 = vmatprep.subr.mxu0 0.0
    %1547 = vmatpush1.msra.mxu0 0.0
    %1548 = vmatprep.subr.mxu0 0.0
    %1549 = vmatpush1.msra.mxu0 0.0
    %1550 = vmatprep.subr.mxu0 0.0
    %1551 = vmatpush1.msra.mxu0 0.0
    %1552 = vmatprep.subr.mxu0 0.0
    %1553 = vmatpush1.msra.mxu0 0.0
    %1554 = vmatprep.subr.mxu0 0.0
    %1555 = vmatpush1.msra.mxu0 0.0
    %1556 = vmatprep.subr.mxu0 0.0
    %1557 = vmatpush1.msra.mxu0 0.0
    %1558 = vmatprep.subr.mxu0 0.0
    %1559 = vmatpush1.msra.mxu0 0.0
    %1560 = vmatprep.subr.mxu0 0.0
    %1561 = vmatpush1.msra.mxu0 0.0
    %1562 = vmatprep.subr.mxu0 0.0
    %1563 = vmatpush1.msra.mxu0 0.0
    %1564 = vmatprep.subr.mxu0 0.0
    %1565 = vmatpush1.msra.mxu0 0.0
    %1566 = vmatprep.subr.mxu0 0.0
    %1567 = vmatpush1.msra.mxu0 0.0
    %1568 = vmatprep.subr.mxu0 0.0
    %1569 = vmatpush1.msra.mxu0 0.0
    %1570 = vmatprep.subr.mxu0 0.0
    %1571 = vmatpush1.msra.mxu0 0.0
    %1572 = vmatprep.subr.mxu0 0.0
    %1573 = vmatpush1.msra.mxu0 0.0
    %1574 = vmatprep.subr.mxu0 0.0
    %1575 = vmatpush1.msra.mxu0 0.0
    %1576 = vmatprep.subr.mxu0 0.0
    %1577 = vmatpush1.msra.mxu0 0.0
    %1578 = vmatprep.subr.mxu0 0.0
    %1579 = vmatpush1.msra.mxu0 0.0
    %1580 = vmatprep.subr.mxu0 0.0
    %1581 = vmatpush1.msra.mxu0 0.0
    %1582 = vmatprep.subr.mxu0 0.0
    %1583 = vmatpush1.msra.mxu0 0.0
    %1584 = vmatprep.mubr.f32.mxu0 0.0
    %1585 = vmatmul.mubr.f32.gmra.mrb[0].mxu0 %v1372
    %v1586 = vpop.f32.mrb[0].mxu0
    %v1587 = vadd.f32 0.0, %v1586
    %v1588 = vpop.f32.mrb[0].mxu0
    %1589 = vdwg.mxu0
    %v1590 = vmul.f32 %v1587, %v65
    %v1592 = vsel %vm177, %v1587, 0
    %1594 = vmatprep.subr.mxu0 0.0
    %1595 = vmatpush1.msra.mxu0 %v67
    %1596 = vmatprep.subr.mxu0 0.0
    %1597 = vmatpush1.msra.mxu0 %v68
    %1598 = vmatprep.subr.mxu0 0.0
    %1599 = vmatpush1.msra.mxu0 %v69
    %1600 = vmatprep.subr.mxu0 0.0
    %1601 = vmatpush1.msra.mxu0 %v70
    %1602 = vmatprep.subr.mxu0 0.0
    %1603 = vmatpush1.msra.mxu0 0.0
    %1604 = vmatprep.subr.mxu0 0.0
    %1605 = vmatpush1.msra.mxu0 0.0
    %1606 = vmatprep.subr.mxu0 0.0
    %1607 = vmatpush1.msra.mxu0 0.0
    %1608 = vmatprep.subr.mxu0 0.0
    %1609 = vmatpush1.msra.mxu0 0.0
    %1610 = vmatprep.subr.mxu0 0.0
    %1611 = vmatpush1.msra.mxu0 0.0
    %1612 = vmatprep.subr.mxu0 0.0
    %1613 = vmatpush1.msra.mxu0 0.0
    %1614 = vmatprep.subr.mxu0 0.0
    %1615 = vmatpush1.msra.mxu0 0.0
    %1616 = vmatprep.subr.mxu0 0.0
    %1617 = vmatpush1.msra.mxu0 0.0
    %1618 = vmatprep.subr.mxu0 0.0
    %1619 = vmatpush1.msra.mxu0 0.0
    %1620 = vmatprep.subr.mxu0 0.0
    %1621 = vmatpush1.msra.mxu0 0.0
    %1622 = vmatprep.subr.mxu0 0.0
    %1623 = vmatpush1.msra.mxu0 0.0
    %1624 = vmatprep.subr.mxu0 0.0
    %1625 = vmatpush1.msra.mxu0 0.0
    %1626 = vmatprep.subr.mxu0 0.0
    %1627 = vmatpush1.msra.mxu0 0.0
    %1628 = vmatprep.subr.mxu0 0.0
    %1629 = vmatpush1.msra.mxu0 0.0
    %1630 = vmatprep.subr.mxu0 0.0
    %1631 = vmatpush1.msra.mxu0 0.0
    %1632 = vmatprep.subr.mxu0 0.0
    %1633 = vmatpush1.msra.mxu0 0.0
    %1634 = vmatprep.subr.mxu0 0.0
    %1635 = vmatpush1.msra.mxu0 0.0
    %1636 = vmatprep.subr.mxu0 0.0
    %1637 = vmatpush1.msra.mxu0 0.0
    %1638 = vmatprep.subr.mxu0 0.0
    %1639 = vmatpush1.msra.mxu0 0.0
    %1640 = vmatprep.subr.mxu0 0.0
    %1641 = vmatpush1.msra.mxu0 0.0
    %1642 = vmatprep.subr.mxu0 0.0
    %1643 = vmatpush1.msra.mxu0 0.0
    %1644 = vmatprep.subr.mxu0 0.0
    %1645 = vmatpush1.msra.mxu0 0.0
    %1646 = vmatprep.subr.mxu0 0.0
    %1647 = vmatpush1.msra.mxu0 0.0
    %1648 = vmatprep.subr.mxu0 0.0
    %1649 = vmatpush1.msra.mxu0 0.0
    %1650 = vmatprep.subr.mxu0 0.0
    %1651 = vmatpush1.msra.mxu0 0.0
    %1652 = vmatprep.subr.mxu0 0.0
    %1653 = vmatpush1.msra.mxu0 0.0
    %1654 = vmatprep.subr.mxu0 0.0
    %1655 = vmatpush1.msra.mxu0 0.0
    %1656 = vmatprep.subr.mxu0 0.0
    %1657 = vmatpush1.msra.mxu0 0.0
    %1658 = vmatprep.mubr.f32.mxu0 0.0
    %1659 = vmatmul.mubr.f32.gmra.mrb[0].mxu0 %v1592
    %v1660 = vpop.f32.mrb[0].mxu0
    %v1661 = vadd.f32 0.0, %v1660
    %v1662 = vpop.f32.mrb[0].mxu0
    %1663 = vdwg.mxu0
    %v1664 = vmul.f32 %v1661, %v66
    %v1665 = vadd.f32 %v1590, %v1664
    %1666 = vmatprep.subr.mxu0 0.0
    %1667 = vmatpush1.msra.mxu0 %v407
    %1668 = vmatprep.subr.mxu0 0.0
    %1669 = vmatpush1.msra.mxu0 %v408
    %1670 = vmatprep.subr.mxu0 0.0
    %1671 = vmatpush1.msra.mxu0 %v409
    %1672 = vmatprep.subr.mxu0 0.0
    %1673 = vmatpush1.msra.mxu0 %v410
    %1674 = vmatprep.subr.mxu0 0.0
    %1675 = vmatpush1.msra.mxu0 %v411
    %1676 = vmatprep.subr.mxu0 0.0
    %1677 = vmatpush1.msra.mxu0 %v412
    %1678 = vmatprep.subr.mxu0 0.0
    %1679 = vmatpush1.msra.mxu0 %v413
    %1680 = vmatprep.subr.mxu0 0.0
    %1681 = vmatpush1.msra.mxu0 %v414
    %1682 = vmatprep.subr.mxu0 0.0
    %1683 = vmatpush1.msra.mxu0 0.0
    %1684 = vmatprep.subr.mxu0 0.0
    %1685 = vmatpush1.msra.mxu0 0.0
    %1686 = vmatprep.subr.mxu0 0.0
    %1687 = vmatpush1.msra.mxu0 0.0
    %1688 = vmatprep.subr.mxu0 0.0
    %1689 = vmatpush1.msra.mxu0 0.0
    %1690 = vmatprep.subr.mxu0 0.0
    %1691 = vmatpush1.msra.mxu0 0.0
    %1692 = vmatprep.subr.mxu0 0.0
    %1693 = vmatpush1.msra.mxu0 0.0
    %1694 = vmatprep.subr.mxu0 0.0
    %1695 = vmatpush1.msra.mxu0 0.0
    %1696 = vmatprep.subr.mxu0 0.0
    %1697 = vmatpush1.msra.mxu0 0.0
    %1698 = vmatprep.subr.mxu0 0.0
    %1699 = vmatpush1.msra.mxu0 0.0
    %1700 = vmatprep.subr.mxu0 0.0
    %1701 = vmatpush1.msra.mxu0 0.0
    %1702 = vmatprep.subr.mxu0 0.0
    %1703 = vmatpush1.msra.mxu0 0.0
    %1704 = vmatprep.subr.mxu0 0.0
    %1705 = vmatpush1.msra.mxu0 0.0
    %1706 = vmatprep.subr.mxu0 0.0
    %1707 = vmatpush1.msra.mxu0 0.0
    %1708 = vmatprep.subr.mxu0 0.0
    %1709 = vmatpush1.msra.mxu0 0.0
    %1710 = vmatprep.subr.mxu0 0.0
    %1711 = vmatpush1.msra.mxu0 0.0
    %1712 = vmatprep.subr.mxu0 0.0
    %1713 = vmatpush1.msra.mxu0 0.0
    %1714 = vmatprep.subr.mxu0 0.0
    %1715 = vmatpush1.msra.mxu0 0.0
    %1716 = vmatprep.subr.mxu0 0.0
    %1717 = vmatpush1.msra.mxu0 0.0
    %1718 = vmatprep.subr.mxu0 0.0
    %1719 = vmatpush1.msra.mxu0 0.0
    %1720 = vmatprep.subr.mxu0 0.0
    %1721 = vmatpush1.msra.mxu0 0.0
    %1722 = vmatprep.subr.mxu0 0.0
    %1723 = vmatpush1.msra.mxu0 0.0
    %1724 = vmatprep.subr.mxu0 0.0
    %1725 = vmatpush1.msra.mxu0 0.0
    %1726 = vmatprep.subr.mxu0 0.0
    %1727 = vmatpush1.msra.mxu0 0.0
    %1728 = vmatprep.subr.mxu0 0.0
    %1729 = vmatpush1.msra.mxu0 0.0
    %1730 = vmatprep.mubr.f32.mxu0 0.0
    %1731 = vmatmul.mubr.f32.gmra.mrb[0].mxu0 %v1372
    %v1732 = vpop.f32.mrb[0].mxu0
    %v1733 = vadd.f32 0.0, %v1732
    %v1734 = vpop.f32.mrb[0].mxu0
    %1735 = vdwg.mxu0
    %v1737 = vsel %vm177, %v1519, 0
    %v1740 = vsel %vm177, %v1665, 0
    %1742 = vmatprep.subr.mxu0 0.0
    %1743 = vmatpush1.xpose.msra.mxu0 %v1740
    %1744 = vmatprep.subr.mxu0 0.0
    %1745 = vmatpush1.xpose.msra.mxu0 0.0
    %1746 = vmatprep.subr.mxu0 0.0
    %1747 = vmatpush1.xpose.msra.mxu0 0.0
    %1748 = vmatprep.subr.mxu0 0.0
    %1749 = vmatpush1.xpose.msra.mxu0 0.0
    %1750 = vmatprep.subr.mxu0 0.0
    %1751 = vmatpush1.xpose.msra.mxu0 0.0
    %1752 = vmatprep.subr.mxu0 0.0
    %1753 = vmatpush1.xpose.msra.mxu0 0.0
    %1754 = vmatprep.subr.mxu0 0.0
    %1755 = vmatpush1.xpose.msra.mxu0 0.0
    %1756 = vmatprep.subr.mxu0 0.0
    %1757 = vmatpush1.xpose.msra.mxu0 0.0
    %1758 = vmatprep.subr.mxu0 0.0
    %1759 = vmatpush1.xpose.msra.mxu0 0.0
    %1760 = vmatprep.subr.mxu0 0.0
    %1761 = vmatpush1.xpose.msra.mxu0 0.0
    %1762 = vmatprep.subr.mxu0 0.0
    %1763 = vmatpush1.xpose.msra.mxu0 0.0
    %1764 = vmatprep.subr.mxu0 0.0
    %1765 = vmatpush1.xpose.msra.mxu0 0.0
    %1766 = vmatprep.subr.mxu0 0.0
    %1767 = vmatpush1.xpose.msra.mxu0 0.0
    %1768 = vmatprep.subr.mxu0 0.0
    %1769 = vmatpush1.xpose.msra.mxu0 0.0
    %1770 = vmatprep.subr.mxu0 0.0
    %1771 = vmatpush1.xpose.msra.mxu0 0.0
    %1772 = vmatprep.subr.mxu0 0.0
    %1773 = vmatpush1.xpose.msra.mxu0 0.0
    %1774 = vmatprep.subr.mxu0 0.0
    %1775 = vmatpush1.xpose.msra.mxu0 0.0
    %1776 = vmatprep.subr.mxu0 0.0
    %1777 = vmatpush1.xpose.msra.mxu0 0.0
    %1778 = vmatprep.subr.mxu0 0.0
    %1779 = vmatpush1.xpose.msra.mxu0 0.0
    %1780 = vmatprep.subr.mxu0 0.0
    %1781 = vmatpush1.xpose.msra.mxu0 0.0
    %1782 = vmatprep.subr.mxu0 0.0
    %1783 = vmatpush1.xpose.msra.mxu0 0.0
    %1784 = vmatprep.subr.mxu0 0.0
    %1785 = vmatpush1.xpose.msra.mxu0 0.0
    %1786 = vmatprep.subr.mxu0 0.0
    %1787 = vmatpush1.xpose.msra.mxu0 0.0
    %1788 = vmatprep.subr.mxu0 0.0
    %1789 = vmatpush1.xpose.msra.mxu0 0.0
    %1790 = vmatprep.subr.mxu0 0.0
    %1791 = vmatpush1.xpose.msra.mxu0 0.0
    %1792 = vmatprep.subr.mxu0 0.0
    %1793 = vmatpush1.xpose.msra.mxu0 0.0
    %1794 = vmatprep.subr.mxu0 0.0
    %1795 = vmatpush1.xpose.msra.mxu0 0.0
    %1796 = vmatprep.subr.mxu0 0.0
    %1797 = vmatpush1.xpose.msra.mxu0 0.0
    %1798 = vmatprep.subr.mxu0 0.0
    %1799 = vmatpush1.xpose.msra.mxu0 0.0
    %1800 = vmatprep.subr.mxu0 0.0
    %1801 = vmatpush1.xpose.msra.mxu0 0.0
    %1802 = vmatprep.subr.mxu0 0.0
    %1803 = vmatpush1.xpose.msra.mxu0 0.0
    %1804 = vmatprep.subr.mxu0 0.0
    %1805 = vmatpush1.xpose.msra.mxu0 0.0
    %1806 = vmatprep.mubr.f32.mxu0 0.0
    %1807 = vmatmul.mubr.f32.gmra.mrb[0].mxu0 %v1737
    %v1808 = vpop.f32.mrb[0].mxu0
    %v1809 = vadd.f32 0.0, %v1808
    %v1810 = vpop.f32.mrb[0].mxu0
    %1811 = vdwg.mxu0
    %v1812 = vmul.f32 %v1809, 0.17677669
    %v1813 = vadd.f32 %v1812, %v76
    %v1814 = vsel %vm563, %v1813, -inf
    %1815 = vmax.xlane.f32.xlu0 %v1814
    %v1816 = vpop.xlane.xlu0 %1815
    %v1817 = vsub.f32 %v1813, %v1816
    %v1818 = vmul.f32 %v1817, 1.442695
    %v1819 = vpow.pop %v1818
    %v1820 = vsel %vm563, %v1819, 0.0
    %1821 = vadd.xlane.f32.xlu0 %v1820
    %v1822 = vpop.xlane.xlu0 %1821
    %v1823 = vrcp.pop %v1822
    %v1824 = vmul.f32 %v1819, %v1823
    %v1826 = vsel %vm563, %v1824, 0
    %1828 = vmatprep.subr.mxu0 0.0
    %1829 = vmatpush1.msra.mxu0 %v1733
    %1830 = vmatprep.subr.mxu0 0.0
    %1831 = vmatpush1.msra.mxu0 0.0
    %1832 = vmatprep.subr.mxu0 0.0
    %1833 = vmatpush1.msra.mxu0 0.0
    %1834 = vmatprep.subr.mxu0 0.0
    %1835 = vmatpush1.msra.mxu0 0.0
    %1836 = vmatprep.subr.mxu0 0.0
    %1837 = vmatpush1.msra.mxu0 0.0
    %1838 = vmatprep.subr.mxu0 0.0
    %1839 = vmatpush1.msra.mxu0 0.0
    %1840 = vmatprep.subr.mxu0 0.0
    %1841 = vmatpush1.msra.mxu0 0.0
    %1842 = vmatprep.subr.mxu0 0.0
    %1843 = vmatpush1.msra.mxu0 0.0
    %1844 = vmatprep.subr.mxu0 0.0
    %1845 = vmatpush1.msra.mxu0 0.0
    %1846 = vmatprep.subr.mxu0 0.0
    %1847 = vmatpush1.msra.mxu0 0.0
    %1848 = vmatprep.subr.mxu0 0.0
    %1849 = vmatpush1.msra.mxu0 0.0
    %1850 = vmatprep.subr.mxu0 0.0
    %1851 = vmatpush1.msra.mxu0 0.0
    %1852 = vmatprep.subr.mxu0 0.0
    %1853 = vmatpush1.msra.mxu0 0.0
    %1854 = vmatprep.subr.mxu0 0.0
    %1855 = vmatpush1.msra.mxu0 0.0
    %1856 = vmatprep.subr.mxu0 0.0
    %1857 = vmatpush1.msra.mxu0 0.0
    %1858 = vmatprep.subr.mxu0 0.0
    %1859 = vmatpush1.msra.mxu0 0.0
    %1860 = vmatprep.subr.mxu0 0.0
    %1861 = vmatpush1.msra.mxu0 0.0
    %1862 = vmatprep.subr.mxu0 0.0
    %1863 = vmatpush1.msra.mxu0 0.0
    %1864 = vmatprep.subr.mxu0 0.0
    %1865 = vmatpush1.msra.mxu0 0.0
    %1866 = vmatprep.subr.mxu0 0.0
    %1867 = vmatpush1.msra.mxu0 0.0
    %1868 = vmatprep.subr.mxu0 0.0
    %1869 = vmatpush1.msra.mxu0 0.0
    %1870 = vmatprep.subr.mxu0 0.0
    %1871 = vmatpush1.msra.mxu0 0.0
    %1872 = vmatprep.subr.mxu0 0.0
    %1873 = vmatpush1.msra.mxu0 0.0
    %1874 = vmatprep.subr.mxu0 0.0
    %1875 = vmatpush1.msra.mxu0 0.0
    %1876 = vmatprep.subr.mxu0 0.0
    %1877 = vmatpush1.msra.mxu0 0.0
    %1878 = vmatprep.subr.mxu0 0.0
    %1879 = vmatpush1.msra.mxu0 0.0
    %1880 = vmatprep.subr.mxu0 0.0
    %1881 = vmatpush1.msra.mxu0 0.0
    %1882 = vmatprep.subr.mxu0 0.0
    %1883 = vmatpush1.msra.mxu0 0.0
    %1884 = vmatprep.subr.mxu0 0.0
    %1885 = vmatpush1.msra.mxu0 0.0
    %1886 = vmatprep.subr.mxu0 0.0
    %1887 = vmatpush1.msra.mxu0 0.0
    %1888 = vmatprep.subr.mxu0 0.0
    %1889 = vmatpush1.msra.mxu0 0.0
    %1890 = vmatprep.subr.mxu0 0.0
    %1891 = vmatpush1.msra.mxu0 0.0
    %1892 = vmatprep.mubr.f32.mxu0 0.0
    %1893 = vmatmul.mubr.f32.gmra.mrb[0].mxu0 %v1826
    %v1894 = vpop.f32.mrb[0].mxu0
    %v1895 = vadd.f32 0.0, %v1894
    %v1896 = vpop.f32.mrb[0].mxu0
    %1897 = vdwg.mxu0
    %1898 = vmatprep.subr.mxu0 0.0
    %1899 = vmatpush1.msra.mxu0 %v653
    %1900 = vmatprep.subr.mxu0 0.0
    %1901 = vmatpush1.msra.mxu0 %v654
    %1902 = vmatprep.subr.mxu0 0.0
    %1903 = vmatpush1.msra.mxu0 %v655
    %1904 = vmatprep.subr.mxu0 0.0
    %1905 = vmatpush1.msra.mxu0 %v656
    %1906 = vmatprep.subr.mxu0 0.0
    %1907 = vmatpush1.msra.mxu0 %v657
    %1908 = vmatprep.subr.mxu0 0.0
    %1909 = vmatpush1.msra.mxu0 %v658
    %1910 = vmatprep.subr.mxu0 0.0
    %1911 = vmatpush1.msra.mxu0 %v659
    %1912 = vmatprep.subr.mxu0 0.0
    %1913 = vmatpush1.msra.mxu0 %v660
    %1914 = vmatprep.subr.mxu0 0.0
    %1915 = vmatpush1.msra.mxu0 0.0
    %1916 = vmatprep.subr.mxu0 0.0
    %1917 = vmatpush1.msra.mxu0 0.0
    %1918 = vmatprep.subr.mxu0 0.0
    %1919 = vmatpush1.msra.mxu0 0.0
    %1920 = vmatprep.subr.mxu0 0.0
    %1921 = vmatpush1.msra.mxu0 0.0
    %1922 = vmatprep.subr.mxu0 0.0
    %1923 = vmatpush1.msra.mxu0 0.0
    %1924 = vmatprep.subr.mxu0 0.0
    %1925 = vmatpush1.msra.mxu0 0.0
    %1926 = vmatprep.subr.mxu0 0.0
    %1927 = vmatpush1.msra.mxu0 0.0
    %1928 = vmatprep.subr.mxu0 0.0
    %1929 = vmatpush1.msra.mxu0 0.0
    %1930 = vmatprep.subr.mxu0 0.0
    %1931 = vmatpush1.msra.mxu0 0.0
    %1932 = vmatprep.subr.mxu0 0.0
    %1933 = vmatpush1.msra.mxu0 0.0
    %1934 = vmatprep.subr.mxu0 0.0
    %1935 = vmatpush1.msra.mxu0 0.0
    %1936 = vmatprep.subr.mxu0 0.0
    %1937 = vmatpush1.msra.mxu0 0.0
    %1938 = vmatprep.subr.mxu0 0.0
    %1939 = vmatpush1.msra.mxu0 0.0
    %1940 = vmatprep.subr.mxu0 0.0
    %1941 = vmatpush1.msra.mxu0 0.0
    %1942 = vmatprep.subr.mxu0 0.0
    %1943 = vmatpush1.msra.mxu0 0.0
    %1944 = vmatprep.subr.mxu0 0.0
    %1945 = vmatpush1.msra.mxu0 0.0
    %1946 = vmatprep.subr.mxu0 0.0
    %1947 = vmatpush1.msra.mxu0 0.0
    %1948 = vmatprep.subr.mxu0 0.0
    %1949 = vmatpush1.msra.mxu0 0.0
    %1950 = vmatprep.subr.mxu0 0.0
    %1951 = vmatpush1.msra.mxu0 0.0
    %1952 = vmatprep.subr.mxu0 0.0
    %1953 = vmatpush1.msra.mxu0 0.0
    %1954 = vmatprep.subr.mxu0 0.0
    %1955 = vmatpush1.msra.mxu0 0.0
    %1956 = vmatprep.subr.mxu0 0.0
    %1957 = vmatpush1.msra.mxu0 0.0
    %1958 = vmatprep.subr.mxu0 0.0
    %1959 = vmatpush1.msra.mxu0 0.0
    %1960 = vmatprep.subr.mxu0 0.0
    %1961 = vmatpush1.msra.mxu0 0.0
    %1962 = vmatprep.mubr.f32.mxu0 0.0
    %1963 = vmatmul.mubr.f32.gmra.mrb[0].mxu0 %v1372
    %v1964 = vpop.f32.mrb[0].mxu0
    %v1965 = vadd.f32 0.0, %v1964
    %v1966 = vpop.f32.mrb[0].mxu0
    %1967 = vdwg.mxu0
    %v1968 = vmul.f32 %v1965, %v65
    %v1970 = vsel %vm177, %v1965, 0
    %1972 = vmatprep.subr.mxu0 0.0
    %1973 = vmatpush1.msra.mxu0 %v67
    %1974 = vmatprep.subr.mxu0 0.0
    %1975 = vmatpush1.msra.mxu0 %v68
    %1976 = vmatprep.subr.mxu0 0.0
    %1977 = vmatpush1.msra.mxu0 %v69
    %1978 = vmatprep.subr.mxu0 0.0
    %1979 = vmatpush1.msra.mxu0 %v70
    %1980 = vmatprep.subr.mxu0 0.0
    %1981 = vmatpush1.msra.mxu0 0.0
    %1982 = vmatprep.subr.mxu0 0.0
    %1983 = vmatpush1.msra.mxu0 0.0
    %1984 = vmatprep.subr.mxu0 0.0
    %1985 = vmatpush1.msra.mxu0 0.0
    %1986 = vmatprep.subr.mxu0 0.0
    %1987 = vmatpush1.msra.mxu0 0.0
    %1988 = vmatprep.subr.mxu0 0.0
    %1989 = vmatpush1.msra.mxu0 0.0
    %1990 = vmatprep.subr.mxu0 0.0
    %1991 = vmatpush1.msra.mxu0 0.0
    %1992 = vmatprep.subr.mxu0 0.0
    %1993 = vmatpush1.msra.mxu0 0.0
    %1994 = vmatprep.subr.mxu0 0.0
    %1995 = vmatpush1.msra.mxu0 0.0
    %1996 = vmatprep.subr.mxu0 0.0
    %1997 = vmatpush1.msra.mxu0 0.0
    %1998 = vmatprep.subr.mxu0 0.0
    %1999 = vmatpush1.msra.mxu0 0.0
    %2000 = vmatprep.subr.mxu0 0.0
    %2001 = vmatpush1.msra.mxu0 0.0
    %2002 = vmatprep.subr.mxu0 0.0
    %2003 = vmatpush1.msra.mxu0 0.0
    %2004 = vmatprep.subr.mxu0 0.0
    %2005 = vmatpush1.msra.mxu0 0.0
    %2006 = vmatprep.subr.mxu0 0.0
    %2007 = vmatpush1.msra.mxu0 0.0
    %2008 = vmatprep.subr.mxu0 0.0
    %2009 = vmatpush1.msra.mxu0 0.0
    %2010 = vmatprep.subr.mxu0 0.0
    %2011 = vmatpush1.msra.mxu0 0.0
    %2012 = vmatprep.subr.mxu0 0.0
    %2013 = vmatpush1.msra.mxu0 0.0
    %2014 = vmatprep.subr.mxu0 0.0
    %2015 = vmatpush1.msra.mxu0 0.0
    %2016 = vmatprep.subr.mxu0 0.0
    %2017 = vmatpush1.msra.mxu0 0.0
    %2018 = vmatprep.subr.mxu0 0.0
    %2019 = vmatpush1.msra.mxu0 0.0
    %2020 = vmatprep.subr.mxu0 0.0
    %2021 = vmatpush1.msra.mxu0 0.0
    %2022 = vmatprep.subr.mxu0 0.0
    %2023 = vmatpush1.msra.mxu0 0.0
    %2024 = vmatprep.subr.mxu0 0.0
    %2025 = vmatpush1.msra.mxu0 0.0
    %2026 = vmatprep.subr.mxu0 0.0
    %2027 = vmatpush1.msra.mxu0 0.0
    %2028 = vmatprep.subr.mxu0 0.0
    %2029 = vmatpush1.msra.mxu0 0.0
    %2030 = vmatprep.subr.mxu0 0.0
    %2031 = vmatpush1.msra.mxu0 0.0
    %2032 = vmatprep.subr.mxu0 0.0
    %2033 = vmatpush1.msra.mxu0 0.0
    %2034 = vmatprep.subr.mxu0 0.0
    %2035 = vmatpush1.msra.mxu0 0.0
    %2036 = vmatprep.mubr.f32.mxu0 0.0
    %2037 = vmatmul.mubr.f32.gmra.mrb[0].mxu0 %v1970
    %v2038 = vpop.f32.mrb[0].mxu0
    %v2039 = vadd.f32 0.0, %v2038
    %v2040 = vpop.f32.mrb[0].mxu0
    %2041 = vdwg.mxu0
    %v2042 = vmul.f32 %v2039, %v66
    %v2043 = vadd.f32 %v1968, %v2042
    %2044 = vmatprep.subr.mxu0 0.0
    %2045 = vmatpush1.msra.mxu0 %v808
    %2046 = vmatprep.subr.mxu0 0.0
    %2047 = vmatpush1.msra.mxu0 %v809
    %2048 = vmatprep.subr.mxu0 0.0
    %2049 = vmatpush1.msra.mxu0 %v810
    %2050 = vmatprep.subr.mxu0 0.0
    %2051 = vmatpush1.msra.mxu0 %v811
    %2052 = vmatprep.subr.mxu0 0.0
    %2053 = vmatpush1.msra.mxu0 %v812
    %2054 = vmatprep.subr.mxu0 0.0
    %2055 = vmatpush1.msra.mxu0 %v813
    %2056 = vmatprep.subr.mxu0 0.0
    %2057 = vmatpush1.msra.mxu0 %v814
    %2058 = vmatprep.subr.mxu0 0.0
    %2059 = vmatpush1.msra.mxu0 %v815
    %2060 = vmatprep.subr.mxu0 0.0
    %2061 = vmatpush1.msra.mxu0 0.0
    %2062 = vmatprep.subr.mxu0 0.0
    %2063 = vmatpush1.msra.mxu0 0.0
    %2064 = vmatprep.subr.mxu0 0.0
    %2065 = vmatpush1.msra.mxu0 0.0
    %2066 = vmatprep.subr.mxu0 0.0
    %2067 = vmatpush1.msra.mxu0 0.0
    %2068 = vmatprep.subr.mxu0 0.0
    %2069 = vmatpush1.msra.mxu0 0.0
    %2070 = vmatprep.subr.mxu0 0.0
    %2071 = vmatpush1.msra.mxu0 0.0
    %2072 = vmatprep.subr.mxu0 0.0
    %2073 = vmatpush1.msra.mxu0 0.0
    %2074 = vmatprep.subr.mxu0 0.0
    %2075 = vmatpush1.msra.mxu0 0.0
    %2076 = vmatprep.subr.mxu0 0.0
    %2077 = vmatpush1.msra.mxu0 0.0
    %2078 = vmatprep.subr.mxu0 0.0
    %2079 = vmatpush1.msra.mxu0 0.0
    %2080 = vmatprep.subr.mxu0 0.0
    %2081 = vmatpush1.msra.mxu0 0.0
    %2082 = vmatprep.subr.mxu0 0.0
    %2083 = vmatpush1.msra.mxu0 0.0
    %2084 = vmatprep.subr.mxu0 0.0
    %2085 = vmatpush1.msra.mxu0 0.0
    %2086 = vmatprep.subr.mxu0 0.0
    %2087 = vmatpush1.msra.mxu0 0.0
    %2088 = vmatprep.subr.mxu0 0.0
    %2089 = vmatpush1.msra.mxu0 0.0
    %2090 = vmatprep.subr.mxu0 0.0
    %2091 = vmatpush1.msra.mxu0 0.0
    %2092 = vmatprep.subr.mxu0 0.0
    %2093 = vmatpush1.msra.mxu0 0.0
    %2094 = vmatprep.subr.mxu0 0.0
    %2095 = vmatpush1.msra.mxu0 0.0
    %2096 = vmatprep.subr.mxu0 0.0
    %2097 = vmatpush1.msra.mxu0 0.0
    %2098 = vmatprep.subr.mxu0 0.0
    %2099 = vmatpush1.msra.mxu0 0.0
    %2100 = vmatprep.subr.mxu0 0.0
    %2101 = vmatpush1.msra.mxu0 0.0
    %2102 = vmatprep.subr.mxu0 0.0
    %2103 = vmatpush1.msra.mxu0 0.0
    %2104 = vmatprep.subr.mxu0 0.0
    %2105 = vmatpush1.msra.mxu0 0.0
    %2106 = vmatprep.subr.mxu0 0.0
    %2107 = vmatpush1.msra.mxu0 0.0
    %2108 = vmatprep.mubr.f32.mxu0 0.0
    %2109 = vmatmul.mubr.f32.gmra.mrb[0].mxu0 %v1372
    %v2110 = vpop.f32.mrb[0].mxu0
    %v2111 = vadd.f32 0.0, %v2110
    %v2112 = vpop.f32.mrb[0].mxu0
    %2113 = vdwg.mxu0
    %v2114 = vmul.f32 %v2111, %v65
    %v2116 = vsel %vm177, %v2111, 0
    %2118 = vmatprep.subr.mxu0 0.0
    %2119 = vmatpush1.msra.mxu0 %v67
    %2120 = vmatprep.subr.mxu0 0.0
    %2121 = vmatpush1.msra.mxu0 %v68
    %2122 = vmatprep.subr.mxu0 0.0
    %2123 = vmatpush1.msra.mxu0 %v69
    %2124 = vmatprep.subr.mxu0 0.0
    %2125 = vmatpush1.msra.mxu0 %v70
    %2126 = vmatprep.subr.mxu0 0.0
    %2127 = vmatpush1.msra.mxu0 0.0
    %2128 = vmatprep.subr.mxu0 0.0
    %2129 = vmatpush1.msra.mxu0 0.0
    %2130 = vmatprep.subr.mxu0 0.0
    %2131 = vmatpush1.msra.mxu0 0.0
    %2132 = vmatprep.subr.mxu0 0.0
    %2133 = vmatpush1.msra.mxu0 0.0
    %2134 = vmatprep.subr.mxu0 0.0
    %2135 = vmatpush1.msra.mxu0 0.0
    %2136 = vmatprep.subr.mxu0 0.0
    %2137 = vmatpush1.msra.mxu0 0.0
    %2138 = vmatprep.subr.mxu0 0.0
    %2139 = vmatpush1.msra.mxu0 0.0
    %2140 = vmatprep.subr.mxu0 0.0
    %2141 = vmatpush1.msra.mxu0 0.0
    %2142 = vmatprep.subr.mxu0 0.0
    %2143 = vmatpush1.msra.mxu0 0.0
    %2144 = vmatprep.subr.mxu0 0.0
    %2145 = vmatpush1.msra.mxu0 0.0
    %2146 = vmatprep.subr.mxu0 0.0
    %2147 = vmatpush1.msra.mxu0 0.0
    %2148 = vmatprep.subr.mxu0 0.0
    %2149 = vmatpush1.msra.mxu0 0.0
    %2150 = vmatprep.subr.mxu0 0.0
    %2151 = vmatpush1.msra.mxu0 0.0
    %2152 = vmatprep.subr.mxu0 0.0
    %2153 = vmatpush1.msra.mxu0 0.0
    %2154 = vmatprep.subr.mxu0 0.0
    %2155 = vmatpush1.msra.mxu0 0.0
    %2156 = vmatprep.subr.mxu0 0.0
    %2157 = vmatpush1.msra.mxu0 0.0
    %2158 = vmatprep.subr.mxu0 0.0
    %2159 = vmatpush1.msra.mxu0 0.0
    %2160 = vmatprep.subr.mxu0 0.0
    %2161 = vmatpush1.msra.mxu0 0.0
    %2162 = vmatprep.subr.mxu0 0.0
    %2163 = vmatpush1.msra.mxu0 0.0
    %2164 = vmatprep.subr.mxu0 0.0
    %2165 = vmatpush1.msra.mxu0 0.0
    %2166 = vmatprep.subr.mxu0 0.0
    %2167 = vmatpush1.msra.mxu0 0.0
    %2168 = vmatprep.subr.mxu0 0.0
    %2169 = vmatpush1.msra.mxu0 0.0
    %2170 = vmatprep.subr.mxu0 0.0
    %2171 = vmatpush1.msra.mxu0 0.0
    %2172 = vmatprep.subr.mxu0 0.0
    %2173 = vmatpush1.msra.mxu0 0.0
    %2174 = vmatprep.subr.mxu0 0.0
    %2175 = vmatpush1.msra.mxu0 0.0
    %2176 = vmatprep.subr.mxu0 0.0
    %2177 = vmatpush1.msra.mxu0 0.0
    %2178 = vmatprep.subr.mxu0 0.0
    %2179 = vmatpush1.msra.mxu0 0.0
    %2180 = vmatprep.subr.mxu0 0.0
    %2181 = vmatpush1.msra.mxu0 0.0
    %2182 = vmatprep.mubr.f32.mxu0 0.0
    %2183 = vmatmul.mubr.f32.gmra.mrb[0].mxu0 %v2116
    %v2184 = vpop.f32.mrb[0].mxu0
    %v2185 = vadd.f32 0.0, %v2184
    %v2186 = vpop.f32.mrb[0].mxu0
    %2187 = vdwg.mxu0
    %v2188 = vmul.f32 %v2185, %v66
    %v2189 = vadd.f32 %v2114, %v2188
    %2190 = vmatprep.subr.mxu0 0.0
    %2191 = vmatpush1.msra.mxu0 %v963
    %2192 = vmatprep.subr.mxu0 0.0
    %2193 = vmatpush1.msra.mxu0 %v964
    %2194 = vmatprep.subr.mxu0 0.0
    %2195 = vmatpush1.msra.mxu0 %v965
    %2196 = vmatprep.subr.mxu0 0.0
    %2197 = vmatpush1.msra.mxu0 %v966
    %2198 = vmatprep.subr.mxu0 0.0
    %2199 = vmatpush1.msra.mxu0 %v967
    %2200 = vmatprep.subr.mxu0 0.0
    %2201 = vmatpush1.msra.mxu0 %v968
    %2202 = vmatprep.subr.mxu0 0.0
    %2203 = vmatpush1.msra.mxu0 %v969
    %2204 = vmatprep.subr.mxu0 0.0
    %2205 = vmatpush1.msra.mxu0 %v970
    %2206 = vmatprep.subr.mxu0 0.0
    %2207 = vmatpush1.msra.mxu0 0.0
    %2208 = vmatprep.subr.mxu0 0.0
    %2209 = vmatpush1.msra.mxu0 0.0
    %2210 = vmatprep.subr.mxu0 0.0
    %2211 = vmatpush1.msra.mxu0 0.0
    %2212 = vmatprep.subr.mxu0 0.0
    %2213 = vmatpush1.msra.mxu0 0.0
    %2214 = vmatprep.subr.mxu0 0.0
    %2215 = vmatpush1.msra.mxu0 0.0
    %2216 = vmatprep.subr.mxu0 0.0
    %2217 = vmatpush1.msra.mxu0 0.0
    %2218 = vmatprep.subr.mxu0 0.0
    %2219 = vmatpush1.msra.mxu0 0.0
    %2220 = vmatprep.subr.mxu0 0.0
    %2221 = vmatpush1.msra.mxu0 0.0
    %2222 = vmatprep.subr.mxu0 0.0
    %2223 = vmatpush1.msra.mxu0 0.0
    %2224 = vmatprep.subr.mxu0 0.0
    %2225 = vmatpush1.msra.mxu0 0.0
    %2226 = vmatprep.subr.mxu0 0.0
    %2227 = vmatpush1.msra.mxu0 0.0
    %2228 = vmatprep.subr.mxu0 0.0
    %2229 = vmatpush1.msra.mxu0 0.0
    %2230 = vmatprep.subr.mxu0 0.0
    %2231 = vmatpush1.msra.mxu0 0.0
    %2232 = vmatprep.subr.mxu0 0.0
    %2233 = vmatpush1.msra.mxu0 0.0
    %2234 = vmatprep.subr.mxu0 0.0
    %2235 = vmatpush1.msra.mxu0 0.0
    %2236 = vmatprep.subr.mxu0 0.0
    %2237 = vmatpush1.msra.mxu0 0.0
    %2238 = vmatprep.subr.mxu0 0.0
    %2239 = vmatpush1.msra.mxu0 0.0
    %2240 = vmatprep.subr.mxu0 0.0
    %2241 = vmatpush1.msra.mxu0 0.0
    %2242 = vmatprep.subr.mxu0 0.0
    %2243 = vmatpush1.msra.mxu0 0.0
    %2244 = vmatprep.subr.mxu0 0.0
    %2245 = vmatpush1.msra.mxu0 0.0
    %2246 = vmatprep.subr.mxu0 0.0
    %2247 = vmatpush1.msra.mxu0 0.0
    %2248 = vmatprep.subr.mxu0 0.0
    %2249 = vmatpush1.msra.mxu0 0.0
    %2250 = vmatprep.subr.mxu0 0.0
    %2251 = vmatpush1.msra.mxu0 0.0
    %2252 = vmatprep.subr.mxu0 0.0
    %2253 = vmatpush1.msra.mxu0 0.0
    %2254 = vmatprep.mubr.f32.mxu0 0.0
    %2255 = vmatmul.mubr.f32.gmra.mrb[0].mxu0 %v1372
    %v2256 = vpop.f32.mrb[0].mxu0
    %v2257 = vadd.f32 0.0, %v2256
    %v2258 = vpop.f32.mrb[0].mxu0
    %2259 = vdwg.mxu0
    %v2261 = vsel %vm177, %v2043, 0
    %v2264 = vsel %vm177, %v2189, 0
    %2266 = vmatprep.subr.mxu0 0.0
    %2267 = vmatpush1.xpose.msra.mxu0 %v2264
    %2268 = vmatprep.subr.mxu0 0.0
    %2269 = vmatpush1.xpose.msra.mxu0 0.0
    %2270 = vmatprep.subr.mxu0 0.0
    %2271 = vmatpush1.xpose.msra.mxu0 0.0
    %2272 = vmatprep.subr.mxu0 0.0
    %2273 = vmatpush1.xpose.msra.mxu0 0.0
    %2274 = vmatprep.subr.mxu0 0.0
    %2275 = vmatpush1.xpose.msra.mxu0 0.0
    %2276 = vmatprep.subr.mxu0 0.0
    %2277 = vmatpush1.xpose.msra.mxu0 0.0
    %2278 = vmatprep.subr.mxu0 0.0
    %2279 = vmatpush1.xpose.msra.mxu0 0.0
    %2280 = vmatprep.subr.mxu0 0.0
    %2281 = vmatpush1.xpose.msra.mxu0 0.0
    %2282 = vmatprep.subr.mxu0 0.0
    %2283 = vmatpush1.xpose.msra.mxu0 0.0
    %2284 = vmatprep.subr.mxu0 0.0
    %2285 = vmatpush1.xpose.msra.mxu0 0.0
    %2286 = vmatprep.subr.mxu0 0.0
    %2287 = vmatpush1.xpose.msra.mxu0 0.0
    %2288 = vmatprep.subr.mxu0 0.0
    %2289 = vmatpush1.xpose.msra.mxu0 0.0
    %2290 = vmatprep.subr.mxu0 0.0
    %2291 = vmatpush1.xpose.msra.mxu0 0.0
    %2292 = vmatprep.subr.mxu0 0.0
    %2293 = vmatpush1.xpose.msra.mxu0 0.0
    %2294 = vmatprep.subr.mxu0 0.0
    %2295 = vmatpush1.xpose.msra.mxu0 0.0
    %2296 = vmatprep.subr.mxu0 0.0
    %2297 = vmatpush1.xpose.msra.mxu0 0.0
    %2298 = vmatprep.subr.mxu0 0.0
    %2299 = vmatpush1.xpose.msra.mxu0 0.0
    %2300 = vmatprep.subr.mxu0 0.0
    %2301 = vmatpush1.xpose.msra.mxu0 0.0
    %2302 = vmatprep.subr.mxu0 0.0
    %2303 = vmatpush1.xpose.msra.mxu0 0.0
    %2304 = vmatprep.subr.mxu0 0.0
    %2305 = vmatpush1.xpose.msra.mxu0 0.0
    %2306 = vmatprep.subr.mxu0 0.0
    %2307 = vmatpush1.xpose.msra.mxu0 0.0
    %2308 = vmatprep.subr.mxu0 0.0
    %2309 = vmatpush1.xpose.msra.mxu0 0.0
    %2310 = vmatprep.subr.mxu0 0.0
    %2311 = vmatpush1.xpose.msra.mxu0 0.0
    %2312 = vmatprep.subr.mxu0 0.0
    %2313 = vmatpush1.xpose.msra.mxu0 0.0
    %2314 = vmatprep.subr.mxu0 0.0
    %2315 = vmatpush1.xpose.msra.mxu0 0.0
    %2316 = vmatprep.subr.mxu0 0.0
    %2317 = vmatpush1.xpose.msra.mxu0 0.0
    %2318 = vmatprep.subr.mxu0 0.0
    %2319 = vmatpush1.xpose.msra.mxu0 0.0
    %2320 = vmatprep.subr.mxu0 0.0
    %2321 = vmatpush1.xpose.msra.mxu0 0.0
    %2322 = vmatprep.subr.mxu0 0.0
    %2323 = vmatpush1.xpose.msra.mxu0 0.0
    %2324 = vmatprep.subr.mxu0 0.0
    %2325 = vmatpush1.xpose.msra.mxu0 0.0
    %2326 = vmatprep.subr.mxu0 0.0
    %2327 = vmatpush1.xpose.msra.mxu0 0.0
    %2328 = vmatprep.subr.mxu0 0.0
    %2329 = vmatpush1.xpose.msra.mxu0 0.0
    %2330 = vmatprep.mubr.f32.mxu0 0.0
    %2331 = vmatmul.mubr.f32.gmra.mrb[0].mxu0 %v2261
    %v2332 = vpop.f32.mrb[0].mxu0
    %v2333 = vadd.f32 0.0, %v2332
    %v2334 = vpop.f32.mrb[0].mxu0
    %2335 = vdwg.mxu0
    %v2336 = vmul.f32 %v2333, 0.17677669
    %v2337 = vadd.f32 %v2336, %v76
    %v2338 = vsel %vm563, %v2337, -inf
    %2339 = vmax.xlane.f32.xlu0 %v2338
    %v2340 = vpop.xlane.xlu0 %2339
    %v2341 = vsub.f32 %v2337, %v2340
    %v2342 = vmul.f32 %v2341, 1.442695
    %v2343 = vpow.pop %v2342
    %v2344 = vsel %vm563, %v2343, 0.0
    %2345 = vadd.xlane.f32.xlu0 %v2344
    %v2346 = vpop.xlane.xlu0 %2345
    %v2347 = vrcp.pop %v2346
    %v2348 = vmul.f32 %v2343, %v2347
    %v2350 = vsel %vm563, %v2348, 0
    %2352 = vmatprep.subr.mxu0 0.0
    %2353 = vmatpush1.msra.mxu0 %v2257
    %2354 = vmatprep.subr.mxu0 0.0
    %2355 = vmatpush1.msra.mxu0 0.0
    %2356 = vmatprep.subr.mxu0 0.0
    %2357 = vmatpush1.msra.mxu0 0.0
    %2358 = vmatprep.subr.mxu0 0.0
    %2359 = vmatpush1.msra.mxu0 0.0
    %2360 = vmatprep.subr.mxu0 0.0
    %2361 = vmatpush1.msra.mxu0 0.0
    %2362 = vmatprep.subr.mxu0 0.0
    %2363 = vmatpush1.msra.mxu0 0.0
    %2364 = vmatprep.subr.mxu0 0.0
    %2365 = vmatpush1.msra.mxu0 0.0
    %2366 = vmatprep.subr.mxu0 0.0
    %2367 = vmatpush1.msra.mxu0 0.0
    %2368 = vmatprep.subr.mxu0 0.0
    %2369 = vmatpush1.msra.mxu0 0.0
    %2370 = vmatprep.subr.mxu0 0.0
    %2371 = vmatpush1.msra.mxu0 0.0
    %2372 = vmatprep.subr.mxu0 0.0
    %2373 = vmatpush1.msra.mxu0 0.0
    %2374 = vmatprep.subr.mxu0 0.0
    %2375 = vmatpush1.msra.mxu0 0.0
    %2376 = vmatprep.subr.mxu0 0.0
    %2377 = vmatpush1.msra.mxu0 0.0
    %2378 = vmatprep.subr.mxu0 0.0
    %2379 = vmatpush1.msra.mxu0 0.0
    %2380 = vmatprep.subr.mxu0 0.0
    %2381 = vmatpush1.msra.mxu0 0.0
    %2382 = vmatprep.subr.mxu0 0.0
    %2383 = vmatpush1.msra.mxu0 0.0
    %2384 = vmatprep.subr.mxu0 0.0
    %2385 = vmatpush1.msra.mxu0 0.0
    %2386 = vmatprep.subr.mxu0 0.0
    %2387 = vmatpush1.msra.mxu0 0.0
    %2388 = vmatprep.subr.mxu0 0.0
    %2389 = vmatpush1.msra.mxu0 0.0
    %2390 = vmatprep.subr.mxu0 0.0
    %2391 = vmatpush1.msra.mxu0 0.0
    %2392 = vmatprep.subr.mxu0 0.0
    %2393 = vmatpush1.msra.mxu0 0.0
    %2394 = vmatprep.subr.mxu0 0.0
    %2395 = vmatpush1.msra.mxu0 0.0
    %2396 = vmatprep.subr.mxu0 0.0
    %2397 = vmatpush1.msra.mxu0 0.0
    %2398 = vmatprep.subr.mxu0 0.0
    %2399 = vmatpush1.msra.mxu0 0.0
    %2400 = vmatprep.subr.mxu0 0.0
    %2401 = vmatpush1.msra.mxu0 0.0
    %2402 = vmatprep.subr.mxu0 0.0
    %2403 = vmatpush1.msra.mxu0 0.0
    %2404 = vmatprep.subr.mxu0 0.0
    %2405 = vmatpush1.msra.mxu0 0.0
    %2406 = vmatprep.subr.mxu0 0.0
    %2407 = vmatpush1.msra.mxu0 0.0
    %2408 = vmatprep.subr.mxu0 0.0
    %2409 = vmatpush1.msra.mxu0 0.0
    %2410 = vmatprep.subr.mxu0 0.0
    %2411 = vmatpush1.msra.mxu0 0.0
    %2412 = vmatprep.subr.mxu0 0.0
    %2413 = vmatpush1.msra.mxu0 0.0
    %2414 = vmatprep.subr.mxu0 0.0
    %2415 = vmatpush1.msra.mxu0 0.0
    %2416 = vmatprep.mubr.f32.mxu0 0.0
    %2417 = vmatmul.mubr.f32.gmra.mrb[0].mxu0 %v2350
    %v2418 = vpop.f32.mrb[0].mxu0
    %v2419 = vadd.f32 0.0, %v2418
    %v2420 = vpop.f32.mrb[0].mxu0
    %2421 = vdwg.mxu0
    %v2423 = vsel %vm177, %v2419, 0
    %2425 = vmatprep.subr.mxu0 0.0
    %2426 = vmatpush1.msra.mxu0 %v1204
    %2427 = vmatprep.subr.mxu0 0.0
    %2428 = vmatpush1.msra.mxu0 %v1205
    %2429 = vmatprep.subr.mxu0 0.0
    %2430 = vmatpush1.msra.mxu0 %v1206
    %2431 = vmatprep.subr.mxu0 0.0
    %2432 = vmatpush1.msra.mxu0 %v1207
    %2433 = vmatprep.subr.mxu0 0.0
    %2434 = vmatpush1.msra.mxu0 0.0
    %2435 = vmatprep.subr.mxu0 0.0
    %2436 = vmatpush1.msra.mxu0 0.0
    %2437 = vmatprep.subr.mxu0 0.0
    %2438 = vmatpush1.msra.mxu0 0.0
    %2439 = vmatprep.subr.mxu0 0.0
    %2440 = vmatpush1.msra.mxu0 0.0
    %2441 = vmatprep.subr.mxu0 0.0
    %2442 = vmatpush1.msra.mxu0 0.0
    %2443 = vmatprep.subr.mxu0 0.0
    %2444 = vmatpush1.msra.mxu0 0.0
    %2445 = vmatprep.subr.mxu0 0.0
    %2446 = vmatpush1.msra.mxu0 0.0
    %2447 = vmatprep.subr.mxu0 0.0
    %2448 = vmatpush1.msra.mxu0 0.0
    %2449 = vmatprep.subr.mxu0 0.0
    %2450 = vmatpush1.msra.mxu0 0.0
    %2451 = vmatprep.subr.mxu0 0.0
    %2452 = vmatpush1.msra.mxu0 0.0
    %2453 = vmatprep.subr.mxu0 0.0
    %2454 = vmatpush1.msra.mxu0 0.0
    %2455 = vmatprep.subr.mxu0 0.0
    %2456 = vmatpush1.msra.mxu0 0.0
    %2457 = vmatprep.subr.mxu0 0.0
    %2458 = vmatpush1.msra.mxu0 0.0
    %2459 = vmatprep.subr.mxu0 0.0
    %2460 = vmatpush1.msra.mxu0 0.0
    %2461 = vmatprep.subr.mxu0 0.0
    %2462 = vmatpush1.msra.mxu0 0.0
    %2463 = vmatprep.subr.mxu0 0.0
    %2464 = vmatpush1.msra.mxu0 0.0
    %2465 = vmatprep.subr.mxu0 0.0
    %2466 = vmatpush1.msra.mxu0 0.0
    %2467 = vmatprep.subr.mxu0 0.0
    %2468 = vmatpush1.msra.mxu0 0.0
    %2469 = vmatprep.subr.mxu0 0.0
    %2470 = vmatpush1.msra.mxu0 0.0
    %2471 = vmatprep.subr.mxu0 0.0
    %2472 = vmatpush1.msra.mxu0 0.0
    %2473 = vmatprep.subr.mxu0 0.0
    %2474 = vmatpush1.msra.mxu0 0.0
    %2475 = vmatprep.subr.mxu0 0.0
    %2476 = vmatpush1.msra.mxu0 0.0
    %2477 = vmatprep.subr.mxu0 0.0
    %2478 = vmatpush1.msra.mxu0 0.0
    %2479 = vmatprep.subr.mxu0 0.0
    %2480 = vmatpush1.msra.mxu0 0.0
    %2481 = vmatprep.subr.mxu0 0.0
    %2482 = vmatpush1.msra.mxu0 0.0
    %2483 = vmatprep.subr.mxu0 0.0
    %2484 = vmatpush1.msra.mxu0 0.0
    %2485 = vmatprep.subr.mxu0 0.0
    %2486 = vmatpush1.msra.mxu0 0.0
    %2487 = vmatprep.subr.mxu0 0.0
    %2488 = vmatpush1.msra.mxu0 0.0
    %2489 = vmatprep.mubr.f32.mxu0 0.0
    %2490 = vmatmul.mubr.f32.gmra.mrb[0].mxu0 %v2423
    %v2491 = vpop.f32.mrb[0].mxu0
    %v2492 = vadd.f32 0.0, %v2491
    %v2493 = vpop.f32.mrb[0].mxu0
    %2494 = vdwg.mxu0
    %v2496 = vsel %vm177, %v1895, 0
    %2498 = vmatprep.subr.mxu0 0.0
    %2499 = vmatpush1.msra.mxu0 %v648
    %2500 = vmatprep.subr.mxu0 0.0
    %2501 = vmatpush1.msra.mxu0 %v649
    %2502 = vmatprep.subr.mxu0 0.0
    %2503 = vmatpush1.msra.mxu0 %v650
    %2504 = vmatprep.subr.mxu0 0.0
    %2505 = vmatpush1.msra.mxu0 %v651
    %2506 = vmatprep.subr.mxu0 0.0
    %2507 = vmatpush1.msra.mxu0 0.0
    %2508 = vmatprep.subr.mxu0 0.0
    %2509 = vmatpush1.msra.mxu0 0.0
    %2510 = vmatprep.subr.mxu0 0.0
    %2511 = vmatpush1.msra.mxu0 0.0
    %2512 = vmatprep.subr.mxu0 0.0
    %2513 = vmatpush1.msra.mxu0 0.0
    %2514 = vmatprep.subr.mxu0 0.0
    %2515 = vmatpush1.msra.mxu0 0.0
    %2516 = vmatprep.subr.mxu0 0.0
    %2517 = vmatpush1.msra.mxu0 0.0
    %2518 = vmatprep.subr.mxu0 0.0
    %2519 = vmatpush1.msra.mxu0 0.0
    %2520 = vmatprep.subr.mxu0 0.0
    %2521 = vmatpush1.msra.mxu0 0.0
    %2522 = vmatprep.subr.mxu0 0.0
    %2523 = vmatpush1.msra.mxu0 0.0
    %2524 = vmatprep.subr.mxu0 0.0
    %2525 = vmatpush1.msra.mxu0 0.0
    %2526 = vmatprep.subr.mxu0 0.0
    %2527 = vmatpush1.msra.mxu0 0.0
    %2528 = vmatprep.subr.mxu0 0.0
    %2529 = vmatpush1.msra.mxu0 0.0
    %2530 = vmatprep.subr.mxu0 0.0
    %2531 = vmatpush1.msra.mxu0 0.0
    %2532 = vmatprep.subr.mxu0 0.0
    %2533 = vmatpush1.msra.mxu0 0.0
    %2534 = vmatprep.subr.mxu0 0.0
    %2535 = vmatpush1.msra.mxu0 0.0
    %2536 = vmatprep.subr.mxu0 0.0
    %2537 = vmatpush1.msra.mxu0 0.0
    %2538 = vmatprep.subr.mxu0 0.0
    %2539 = vmatpush1.msra.mxu0 0.0
    %2540 = vmatprep.subr.mxu0 0.0
    %2541 = vmatpush1.msra.mxu0 0.0
    %2542 = vmatprep.subr.mxu0 0.0
    %2543 = vmatpush1.msra.mxu0 0.0
    %2544 = vmatprep.subr.mxu0 0.0
    %2545 = vmatpush1.msra.mxu0 0.0
    %2546 = vmatprep.subr.mxu0 0.0
    %2547 = vmatpush1.msra.mxu0 0.0
    %2548 = vmatprep.subr.mxu0 0.0
    %2549 = vmatpush1.msra.mxu0 0.0
    %2550 = vmatprep.subr.mxu0 0.0
    %2551 = vmatpush1.msra.mxu0 0.0
    %2552 = vmatprep.subr.mxu0 0.0
    %2553 = vmatpush1.msra.mxu0 0.0
    %2554 = vmatprep.subr.mxu0 0.0
    %2555 = vmatpush1.msra.mxu0 0.0
    %2556 = vmatprep.subr.mxu0 0.0
    %2557 = vmatpush1.msra.mxu0 0.0
    %2558 = vmatprep.subr.mxu0 0.0
    %2559 = vmatpush1.msra.mxu0 0.0
    %2560 = vmatprep.subr.mxu0 0.0
    %2561 = vmatpush1.msra.mxu0 0.0
    %2562 = vmatprep.mubr.f32.mxu0 0.0
    %2563 = vmatmul.mubr.f32.gmra.mrb[0].mxu0 %v2496
    %v2564 = vpop.f32.mrb[0].mxu0
    %v2565 = vadd.f32 %v2492, %v2564
    %v2566 = vpop.f32.mrb[0].mxu0
    %2567 = vdwg.mxu0
    %v2568 = vadd.f32 %v1354, %v2565
    %v2569 = vld [vmem:[%s4] sm:$0x1]
    %v2570 = vmul.f32 %v2568, %v2568
    %v2571 = vsel %vm79, %v2570, 0.0
    %2572 = vadd.xlane.f32.xlu0 %v2571
    %v2573 = vpop.xlane.xlu0 %2572
    %v2574 = vmul.f32 %v2573, %v83
    %v2575 = vadd.f32 %v2574, 1e-06
    %v2576 = vrsqrt.pop %v2575
    %v2577 = vmul.f32 %v2568, %v2576
    %v2579 = vlaneseq
    %v2580 = vshrl.u32 %v2579, 7
    %v2581 = vsub.s32 0, %v2580
    %v2582 = vrot.slane %v2569, %v2581
    %v2584 = vmul.f32 %v2577, %v2582
    %v2585 = vld [vmem:[%s9] sm:$0xff]
    %v2586 = vld [vmem:[%s9 + $0x8] sm:$0xff]
    %v2587 = vld [vmem:[%s9 + $0x10] sm:$0xff]
    %v2588 = vld [vmem:[%s9 + $0x18] sm:$0xff]
    %v2589 = vld [vmem:[%s9 + $0x20] sm:$0xff]
    %v2590 = vld [vmem:[%s9 + $0x28] sm:$0xff]
    %v2591 = vld [vmem:[%s9 + $0x30] sm:$0xff]
    %v2592 = vld [vmem:[%s9 + $0x38] sm:$0xff]
    %v2594 = vsel %vm79, %v2584, 0
    %2596 = vmatprep.subr.mxu0 0.0
    %2597 = vmatpush1.msra.mxu0 %v2585
    %2598 = vmatprep.subr.mxu0 0.0
    %2599 = vmatpush1.msra.mxu0 %v2586
    %2600 = vmatprep.subr.mxu0 0.0
    %2601 = vmatpush1.msra.mxu0 %v2587
    %2602 = vmatprep.subr.mxu0 0.0
    %2603 = vmatpush1.msra.mxu0 %v2588
    %2604 = vmatprep.subr.mxu0 0.0
    %2605 = vmatpush1.msra.mxu0 %v2589
    %2606 = vmatprep.subr.mxu0 0.0
    %2607 = vmatpush1.msra.mxu0 %v2590
    %2608 = vmatprep.subr.mxu0 0.0
    %2609 = vmatpush1.msra.mxu0 %v2591
    %2610 = vmatprep.subr.mxu0 0.0
    %2611 = vmatpush1.msra.mxu0 %v2592
    %2612 = vmatprep.subr.mxu0 0.0
    %2613 = vmatpush1.msra.mxu0 0.0
    %2614 = vmatprep.subr.mxu0 0.0
    %2615 = vmatpush1.msra.mxu0 0.0
    %2616 = vmatprep.subr.mxu0 0.0
    %2617 = vmatpush1.msra.mxu0 0.0
    %2618 = vmatprep.subr.mxu0 0.0
    %2619 = vmatpush1.msra.mxu0 0.0
    %2620 = vmatprep.subr.mxu0 0.0
    %2621 = vmatpush1.msra.mxu0 0.0
    %2622 = vmatprep.subr.mxu0 0.0
    %2623 = vmatpush1.msra.mxu0 0.0
    %2624 = vmatprep.subr.mxu0 0.0
    %2625 = vmatpush1.msra.mxu0 0.0
    %2626 = vmatprep.subr.mxu0 0.0
    %2627 = vmatpush1.msra.mxu0 0.0
    %2628 = vmatprep.subr.mxu0 0.0
    %2629 = vmatpush1.msra.mxu0 0.0
    %2630 = vmatprep.subr.mxu0 0.0
    %2631 = vmatpush1.msra.mxu0 0.0
    %2632 = vmatprep.subr.mxu0 0.0
    %2633 = vmatpush1.msra.mxu0 0.0
    %2634 = vmatprep.subr.mxu0 0.0
    %2635 = vmatpush1.msra.mxu0 0.0
    %2636 = vmatprep.subr.mxu0 0.0
    %2637 = vmatpush1.msra.mxu0 0.0
    %2638 = vmatprep.subr.mxu0 0.0
    %2639 = vmatpush1.msra.mxu0 0.0
    %2640 = vmatprep.subr.mxu0 0.0
    %2641 = vmatpush1.msra.mxu0 0.0
    %2642 = vmatprep.subr.mxu0 0.0
    %2643 = vmatpush1.msra.mxu0 0.0
    %2644 = vmatprep.subr.mxu0 0.0
    %2645 = vmatpush1.msra.mxu0 0.0
    %2646 = vmatprep.subr.mxu0 0.0
    %2647 = vmatpush1.msra.mxu0 0.0
    %2648 = vmatprep.subr.mxu0 0.0
    %2649 = vmatpush1.msra.mxu0 0.0
    %2650 = vmatprep.subr.mxu0 0.0
    %2651 = vmatpush1.msra.mxu0 0.0
    %2652 = vmatprep.subr.mxu0 0.0
    %2653 = vmatpush1.msra.mxu0 0.0
    %2654 = vmatprep.subr.mxu0 0.0
    %2655 = vmatpush1.msra.mxu0 0.0
    %2656 = vmatprep.subr.mxu0 0.0
    %2657 = vmatpush1.msra.mxu0 0.0
    %2658 = vmatprep.subr.mxu0 0.0
    %2659 = vmatpush1.msra.mxu0 0.0
    %2660 = vmatprep.mubr.f32.mxu0 0.0
    %2661 = vmatmul.mubr.f32.gmra.mrb[0].mxu0 %v2594
    %v2662 = vpop.f32.mrb[0].mxu0
    %v2663 = vadd.f32 0.0, %v2662
    %v2664 = vpop.f32.mrb[0].mxu0
    %2665 = vdwg.mxu0
    %v2666 = vld [vmem:[%s10] sm:$0xff]
    %v2667 = vld [vmem:[%s10 + $0x8] sm:$0xff]
    %v2668 = vld [vmem:[%s10 + $0x10] sm:$0xff]
    %v2669 = vld [vmem:[%s10 + $0x18] sm:$0xff]
    %v2670 = vld [vmem:[%s10 + $0x20] sm:$0xff]
    %v2671 = vld [vmem:[%s10 + $0x28] sm:$0xff]
    %v2672 = vld [vmem:[%s10 + $0x30] sm:$0xff]
    %v2673 = vld [vmem:[%s10 + $0x38] sm:$0xff]
    %2674 = vmatprep.subr.mxu0 0.0
    %2675 = vmatpush1.msra.mxu0 %v2666
    %2676 = vmatprep.subr.mxu0 0.0
    %2677 = vmatpush1.msra.mxu0 %v2667
    %2678 = vmatprep.subr.mxu0 0.0
    %2679 = vmatpush1.msra.mxu0 %v2668
    %2680 = vmatprep.subr.mxu0 0.0
    %2681 = vmatpush1.msra.mxu0 %v2669
    %2682 = vmatprep.subr.mxu0 0.0
    %2683 = vmatpush1.msra.mxu0 %v2670
    %2684 = vmatprep.subr.mxu0 0.0
    %2685 = vmatpush1.msra.mxu0 %v2671
    %2686 = vmatprep.subr.mxu0 0.0
    %2687 = vmatpush1.msra.mxu0 %v2672
    %2688 = vmatprep.subr.mxu0 0.0
    %2689 = vmatpush1.msra.mxu0 %v2673
    %2690 = vmatprep.subr.mxu0 0.0
    %2691 = vmatpush1.msra.mxu0 0.0
    %2692 = vmatprep.subr.mxu0 0.0
    %2693 = vmatpush1.msra.mxu0 0.0
    %2694 = vmatprep.subr.mxu0 0.0
    %2695 = vmatpush1.msra.mxu0 0.0
    %2696 = vmatprep.subr.mxu0 0.0
    %2697 = vmatpush1.msra.mxu0 0.0
    %2698 = vmatprep.subr.mxu0 0.0
    %2699 = vmatpush1.msra.mxu0 0.0
    %2700 = vmatprep.subr.mxu0 0.0
    %2701 = vmatpush1.msra.mxu0 0.0
    %2702 = vmatprep.subr.mxu0 0.0
    %2703 = vmatpush1.msra.mxu0 0.0
    %2704 = vmatprep.subr.mxu0 0.0
    %2705 = vmatpush1.msra.mxu0 0.0
    %2706 = vmatprep.subr.mxu0 0.0
    %2707 = vmatpush1.msra.mxu0 0.0
    %2708 = vmatprep.subr.mxu0 0.0
    %2709 = vmatpush1.msra.mxu0 0.0
    %2710 = vmatprep.subr.mxu0 0.0
    %2711 = vmatpush1.msra.mxu0 0.0
    %2712 = vmatprep.subr.mxu0 0.0
    %2713 = vmatpush1.msra.mxu0 0.0
    %2714 = vmatprep.subr.mxu0 0.0
    %2715 = vmatpush1.msra.mxu0 0.0
    %2716 = vmatprep.subr.mxu0 0.0
    %2717 = vmatpush1.msra.mxu0 0.0
    %2718 = vmatprep.subr.mxu0 0.0
    %2719 = vmatpush1.msra.mxu0 0.0
    %2720 = vmatprep.subr.mxu0 0.0
    %2721 = vmatpush1.msra.mxu0 0.0
    %2722 = vmatprep.subr.mxu0 0.0
    %2723 = vmatpush1.msra.mxu0 0.0
    %2724 = vmatprep.subr.mxu0 0.0
    %2725 = vmatpush1.msra.mxu0 0.0
    %2726 = vmatprep.subr.mxu0 0.0
    %2727 = vmatpush1.msra.mxu0 0.0
    %2728 = vmatprep.subr.mxu0 0.0
    %2729 = vmatpush1.msra.mxu0 0.0
    %2730 = vmatprep.subr.mxu0 0.0
    %2731 = vmatpush1.msra.mxu0 0.0
    %2732 = vmatprep.subr.mxu0 0.0
    %2733 = vmatpush1.msra.mxu0 0.0
    %2734 = vmatprep.subr.mxu0 0.0
    %2735 = vmatpush1.msra.mxu0 0.0
    %2736 = vmatprep.subr.mxu0 0.0
    %2737 = vmatpush1.msra.mxu0 0.0
    %2738 = vmatprep.mubr.f32.mxu0 0.0
    %2739 = vmatmul.mubr.f32.gmra.mrb[0].mxu0 %v2594
    %v2740 = vpop.f32.mrb[0].mxu0
    %v2741 = vadd.f32 0.0, %v2740
    %v2742 = vpop.f32.mrb[0].mxu0
    %2743 = vdwg.mxu0
    %v2744 = vxor.u32 %v2663, 2147483648
    %v2745 = vmul.f32 %v2744, 1.442695
    %v2746 = vpow.pop %v2745
    %v2747 = vadd.f32 %v2746, 1.0
    %v2748 = vrcp.pop %v2747
    %v2749 = vmul.f32 1.0, %v2748
    %v2750 = vmul.f32 %v2663, %v2749
    %v2751 = vmul.f32 %v2750, %v2741
    %v2752 = vld [vmem:[%s11] sm:$0xff]
    %v2753 = vld [vmem:[%s11 + $0x8] sm:$0xff]
    %v2754 = vld [vmem:[%s11 + $0x10] sm:$0xff]
    %v2755 = vld [vmem:[%s11 + $0x18] sm:$0xff]
    %v2756 = vld [vmem:[%s11 + $0x20] sm:$0xff]
    %v2757 = vld [vmem:[%s11 + $0x28] sm:$0xff]
    %v2758 = vld [vmem:[%s11 + $0x30] sm:$0xff]
    %v2759 = vld [vmem:[%s11 + $0x38] sm:$0xff]
    %v2760 = vld [vmem:[%s11 + $0x40] sm:$0xff]
    %v2761 = vld [vmem:[%s11 + $0x48] sm:$0xff]
    %v2762 = vld [vmem:[%s11 + $0x50] sm:$0xff]
    %v2763 = vld [vmem:[%s11 + $0x58] sm:$0xff]
    %v2764 = vld [vmem:[%s11 + $0x60] sm:$0xff]
    %v2765 = vld [vmem:[%s11 + $0x68] sm:$0xff]
    %v2766 = vld [vmem:[%s11 + $0x70] sm:$0xff]
    %v2767 = vld [vmem:[%s11 + $0x78] sm:$0xff]
    %2768 = vmatprep.subr.mxu0 0.0
    %2769 = vmatpush1.msra.mxu0 %v2752
    %2770 = vmatprep.subr.mxu0 0.0
    %2771 = vmatpush1.msra.mxu0 %v2753
    %2772 = vmatprep.subr.mxu0 0.0
    %2773 = vmatpush1.msra.mxu0 %v2754
    %2774 = vmatprep.subr.mxu0 0.0
    %2775 = vmatpush1.msra.mxu0 %v2755
    %2776 = vmatprep.subr.mxu0 0.0
    %2777 = vmatpush1.msra.mxu0 %v2756
    %2778 = vmatprep.subr.mxu0 0.0
    %2779 = vmatpush1.msra.mxu0 %v2757
    %2780 = vmatprep.subr.mxu0 0.0
    %2781 = vmatpush1.msra.mxu0 %v2758
    %2782 = vmatprep.subr.mxu0 0.0
    %2783 = vmatpush1.msra.mxu0 %v2759
    %2784 = vmatprep.subr.mxu0 0.0
    %2785 = vmatpush1.msra.mxu0 %v2760
    %2786 = vmatprep.subr.mxu0 0.0
    %2787 = vmatpush1.msra.mxu0 %v2761
    %2788 = vmatprep.subr.mxu0 0.0
    %2789 = vmatpush1.msra.mxu0 %v2762
    %2790 = vmatprep.subr.mxu0 0.0
    %2791 = vmatpush1.msra.mxu0 %v2763
    %2792 = vmatprep.subr.mxu0 0.0
    %2793 = vmatpush1.msra.mxu0 %v2764
    %2794 = vmatprep.subr.mxu0 0.0
    %2795 = vmatpush1.msra.mxu0 %v2765
    %2796 = vmatprep.subr.mxu0 0.0
    %2797 = vmatpush1.msra.mxu0 %v2766
    %2798 = vmatprep.subr.mxu0 0.0
    %2799 = vmatpush1.msra.mxu0 %v2767
    %2800 = vmatprep.subr.mxu0 0.0
    %2801 = vmatpush1.msra.mxu0 0.0
    %2802 = vmatprep.subr.mxu0 0.0
    %2803 = vmatpush1.msra.mxu0 0.0
    %2804 = vmatprep.subr.mxu0 0.0
    %2805 = vmatpush1.msra.mxu0 0.0
    %2806 = vmatprep.subr.mxu0 0.0
    %2807 = vmatpush1.msra.mxu0 0.0
    %2808 = vmatprep.subr.mxu0 0.0
    %2809 = vmatpush1.msra.mxu0 0.0
    %2810 = vmatprep.subr.mxu0 0.0
    %2811 = vmatpush1.msra.mxu0 0.0
    %2812 = vmatprep.subr.mxu0 0.0
    %2813 = vmatpush1.msra.mxu0 0.0
    %2814 = vmatprep.subr.mxu0 0.0
    %2815 = vmatpush1.msra.mxu0 0.0
    %2816 = vmatprep.subr.mxu0 0.0
    %2817 = vmatpush1.msra.mxu0 0.0
    %2818 = vmatprep.subr.mxu0 0.0
    %2819 = vmatpush1.msra.mxu0 0.0
    %2820 = vmatprep.subr.mxu0 0.0
    %2821 = vmatpush1.msra.mxu0 0.0
    %2822 = vmatprep.subr.mxu0 0.0
    %2823 = vmatpush1.msra.mxu0 0.0
    %2824 = vmatprep.subr.mxu0 0.0
    %2825 = vmatpush1.msra.mxu0 0.0
    %2826 = vmatprep.subr.mxu0 0.0
    %2827 = vmatpush1.msra.mxu0 0.0
    %2828 = vmatprep.subr.mxu0 0.0
    %2829 = vmatpush1.msra.mxu0 0.0
    %2830 = vmatprep.subr.mxu0 0.0
    %2831 = vmatpush1.msra.mxu0 0.0
    %2832 = vmatprep.mubr.f32.mxu0 0.0
    %2833 = vmatmul.mubr.f32.gmra.mrb[0].mxu0 %v2751
    %v2834 = vpop.f32.mrb[0].mxu0
    %v2835 = vadd.f32 0.0, %v2834
    %v2836 = vpop.f32.mrb[0].mxu0
    %2837 = vdwg.mxu0
    %v2838 = vadd.f32 %v2568, %v2835
    %2839 = vst.msk [vmem:[#allocation5] sm:$0xff] %vm79, %v2838
    // Predicated region
    $region66: #{tpu_custom_call.1} parent=1 // pred_check
      _
    $region67: #{tpu_custom_call.1} parent=1 // pred_check_branch
      %2841 = sbr.rel (0) target = $region69
    $region68: #{tpu_custom_call.1} parent=1 // pred_region
      %s2843 = ssub.s32 128, 128
      %2844 = vsyncadd [#allocation4], %s2843
      %s2846 = sshll.u32 [#allocation5], 4
      %s2847 = int_to_ptr.vmem [resolvable:$true] %s2846
      %2849 = dma.vmem_to_hbm [thread:$0]  %s2847, 128, %s15, [#allocation4]
    $region69: #{tpu_custom_call.1} parent=1 // pred_fallthru
      _
    // Predicated region
    $region70: #{tpu_custom_call.1} parent=1 // pred_check
      _
    $region71: #{tpu_custom_call.1} parent=1 // pred_check_branch
      %2851 = sbr.rel (0) target = $region73
    $region72: #{tpu_custom_call.1} parent=1 // pred_region
      %2852 = dma.done [#allocation4], 128
    $region73: #{tpu_custom_call.1} parent=1 // pred_fallthru
      _
    %2853 = vsyncpa [#allocation3], 1
    %2854 = vsyncpa [#allocation4], 1

</llo_original>
